<compile_context>
chip_gen: v6e
topology: v6e:2x2x1
jax: 0.10.0
libtpu: 0.0.40
codegen_flags: <defaults>
</compile_context>

<pallas_src>
import math
from functools import partial

import jax
import jax.numpy as jnp
from jax.experimental import pallas as pl
from jax.experimental.pallas import tpu as pltpu

PIX = 28 * 28        # 784
PIX_PAD = 7 * 128    # 896: lane-dense padding of the 784 feature dim


def autoencoder_kernel(
    x_ref,                                    # (TB, 896) bf16
    ew1, eb1, ew2, eb2, ew3, eb3, ew4, eb4,   # encoder params, weights bf16 (in,out), biases f32 (1,out)
    wf, bf_, dw2, db2, dw3, db3, dw4, db4,    # decoder params (first layer fused with encoder layer 4)
    enc_ref, dec_ref,                         # (TB, 3) f32, (TB, 896) f32
):
    x = x_ref[...]                                                            # bf16

    # ---- encoder ----
    h1 = jnp.tanh(jnp.dot(x, ew1[...], preferred_element_type=jnp.float32) + eb1[...])
    h1 = h1.astype(jnp.bfloat16)
    h2 = jnp.tanh(jnp.dot(h1, ew2[...], preferred_element_type=jnp.float32) + eb2[...])
    h2 = h2.astype(jnp.bfloat16)
    h3 = jnp.tanh(jnp.dot(h2, ew3[...], preferred_element_type=jnp.float32) + eb3[...])
    h3 = h3.astype(jnp.bfloat16)

    # enc output (no activation) — only needed for the first output tensor.
    enc = jnp.dot(h3, ew4[...], preferred_element_type=jnp.float32) + eb4[...]
    enc_ref[...] = enc.astype(enc_ref.dtype)

    # ---- decoder (main path uses the fused 64->12 bottleneck, skipping the K=3 matmul) ----
    g1 = jnp.tanh(jnp.dot(h3, wf[...], preferred_element_type=jnp.float32) + bf_[...])
    g1 = g1.astype(jnp.bfloat16)
    g2 = jnp.tanh(jnp.dot(g1, dw2[...], preferred_element_type=jnp.float32) + db2[...])
    g2 = g2.astype(jnp.bfloat16)
    g3 = jnp.tanh(jnp.dot(g2, dw3[...], preferred_element_type=jnp.float32) + db3[...])
    g3 = g3.astype(jnp.bfloat16)
    logits = jnp.dot(g3, dw4[...], preferred_element_type=jnp.float32) + db4[...]

    # sigmoid(x) = 1 / (1 + exp(-x)) on the EUP (exp + approximate reciprocal).
    dec = pl.reciprocal(1.0 + jnp.exp(-logits), approx=True)
    dec_ref[...] = dec.astype(dec_ref.dtype)


def _full_spec(p):
    # Whole parameter resident in VMEM: constant block index -> DMA'd once, reused every step.
    return pl.BlockSpec(p.shape, lambda i: (0,) * p.ndim)


@partial(jax.jit, static_argnames=("tb",))
def autoencoder_forward(x, params, *, tb=256):
    """x: (B, 784) float32.  params: flat list of 16 f32 arrays (w (in,out), b (1,out)) x 8 layers.

    Returns (enc (B, 3) f32, dec (B, 784) f32), matching the PyTorch module's forward().
    """
    (ew1, eb1, ew2, eb2, ew3, eb3, ew4, eb4,
     dw1, db1, dw2, db2, dw3, db3, dw4, db4) = params

    B = x.shape[0]
    grid_b = pl.cdiv(B, tb)
    b_pad = grid_b * tb

    # ---- wrapper-side prep: pad batch & 784->896 feature dim, fuse bottleneck, cast to bf16 ----
    x_p = jnp.zeros((b_pad, PIX_PAD), jnp.bfloat16).at[:B, :PIX].set(x.astype(jnp.bfloat16))
    ew1_p = jnp.zeros((PIX_PAD, 128), jnp.float32).at[:PIX, :].set(ew1).astype(jnp.bfloat16)
    dw4_p = jnp.zeros((128, PIX_PAD), jnp.float32).at[:, :PIX].set(dw4).astype(jnp.bfloat16)
    db4_p = jnp.zeros((1, PIX_PAD), jnp.float32).at[:, :PIX].set(db4)

    # tanh((h3 @ ew4 + eb4) @ dw1 + db1) == tanh(h3 @ (ew4 @ dw1) + (eb4 @ dw1 + db1))
    wf = (ew4 @ dw1).astype(jnp.bfloat16)     # (12, 12)
    bf_ = eb4 @ dw1 + db1                     # (1, 12) f32

    b16 = lambda w: w.astype(jnp.bfloat16)
    kernel_params = [
        ew1_p, eb1, b16(ew2), eb2, b16(ew3), eb3, b16(ew4), eb4,
        wf, bf_, b16(dw2), db2, b16(dw3), db3, dw4_p, db4_p,
    ]

    in_specs = [pl.BlockSpec((tb, PIX_PAD), lambda i: (i, 0))] + [
        _full_spec(p) for p in kernel_params
    ]
    out_shapes = (
        jax.ShapeDtypeStruct((b_pad, 3), jnp.float32),
        jax.ShapeDtypeStruct((b_pad, PIX_PAD), jnp.float32),
    )
    out_specs = (
        pl.BlockSpec((tb, 3), lambda i: (i, 0)),
        pl.BlockSpec((tb, PIX_PAD), lambda i: (i, 0)),
    )

    # Advisory cost estimate for XLA's scheduler.
    layer_dims = [(PIX_PAD, 128), (128, 64), (64, 12), (12, 3),
                  (12, 12), (12, 64), (64, 128), (128, PIX_PAD)]
    flops = 2 * b_pad * sum(fi * fo for fi, fo in layer_dims)
    transcendentals = b_pad * (128 + 64 + 12 + 12 + 64 + 128 + 2 * PIX_PAD)
    bytes_accessed = (
        int(x_p.size) * 2                     # bf16 x stream in
        + b_pad * 3 * 4 + b_pad * PIX_PAD * 4  # enc + dec stream out (f32)
        + sum(int(p.size) * p.dtype.itemsize for p in kernel_params)
    )

    fn = pl.pallas_call(
        autoencoder_kernel,
        out_shape=out_shapes,
        grid_spec=pltpu.PrefetchScalarGridSpec(
            num_scalar_prefetch=0,
            grid=(grid_b,),
            in_specs=in_specs,
            out_specs=out_specs,
        ),
        compiler_params=pltpu.CompilerParams(
            dimension_semantics=("parallel",),   # batch tiles are independent -> megacore on v7x
        ),
        cost_estimate=pl.CostEstimate(
            flops=flops,
            transcendentals=transcendentals,
            bytes_accessed=bytes_accessed,
        ),
    )
    enc_pad, dec_pad = fn(x_p, *kernel_params)
    return enc_pad[:B], dec_pad[:B, :PIX]


def init_linear(key, fan_in, fan_out):
    """Deterministic init mimicking PyTorch nn.Linear default: U(-1/sqrt(fan_in), 1/sqrt(fan_in)).
    Returns W as (fan_in, fan_out) (already transposed) and b as (1, fan_out)."""
    kw, kb = jax.random.split(key)
    bound = 1.0 / math.sqrt(fan_in)
    w = jax.random.uniform(kw, (fan_in, fan_out), jnp.float32, -bound, bound)
    b = jax.random.uniform(kb, (1, fan_out), jnp.float32, -bound, bound)
    return w, b


def make_params(key):
    enc_dims = [(PIX, 128), (128, 64), (64, 12), (12, 3)]
    dec_dims = [(3, 12), (12, 64), (64, 128), (128, PIX)]
    params = []
    keys = jax.random.split(key, len(enc_dims) + len(dec_dims))
    for k, (fi, fo) in zip(keys, enc_dims + dec_dims):
        w, b = init_linear(k, fi, fo)
        params.extend([w, b])
    return params


def reference_forward(x, params):
    """Pure-JAX f32 reference (exact PyTorch forward semantics) for sanity checking."""
    (ew1, eb1, ew2, eb2, ew3, eb3, ew4, eb4,
     dw1, db1, dw2, db2, dw3, db3, dw4, db4) = params
    h = jnp.tanh(x @ ew1 + eb1)
    h = jnp.tanh(h @ ew2 + eb2)
    h = jnp.tanh(h @ ew3 + eb3)
    enc = h @ ew4 + eb4
    g = jnp.tanh(enc @ dw1 + db1)
    g = jnp.tanh(g @ dw2 + db2)
    g = jnp.tanh(g @ dw3 + db3)
    dec = jax.nn.sigmoid(g @ dw4 + db4)
    return enc, dec


if __name__ == "__main__":
    key = jax.random.PRNGKey(0)
    kx, kp = jax.random.split(key)

    B, TB = 1024, 256   # 4 batch tiles of MXU height -> pipelined grid, full MXU M dimension
    x = jax.random.uniform(kx, (B, PIX), jnp.float32)   # MNIST-flat style input in [0, 1)
    params = make_params(kp)

    enc, dec = autoencoder_forward(x, params, tb=TB)
    enc = jax.block_until_ready(enc)
    dec = jax.block_until_ready(dec)

    enc_ref, dec_ref = reference_forward(x, params)
    assert enc.shape == (B, 3) and dec.shape == (B, PIX)
    # Kernel runs with bf16 weights/activations (f32 accumulation) + approx-reciprocal sigmoid,
    # so tolerances vs the f32 reference are loosened accordingly.
    assert jnp.allclose(enc, enc_ref, atol=3e-2, rtol=3e-2)
    assert jnp.allclose(dec, dec_ref, atol=3e-2, rtol=3e-2)

    print("KERNEL_OK")
</pallas_src>

<mosaic_0001>
module attributes {stable_mosaic.version = 11 : i64} {
  func.func @autoencoder_kernel(%arg0: i32, %arg1: memref<256x896xbf16, #tpu.memory_space<vmem>>, %arg2: memref<896x128xbf16, #tpu.memory_space<vmem>>, %arg3: memref<1x128xf32, #tpu.memory_space<vmem>>, %arg4: memref<128x64xbf16, #tpu.memory_space<vmem>>, %arg5: memref<1x64xf32, #tpu.memory_space<vmem>>, %arg6: memref<64x12xbf16, #tpu.memory_space<vmem>>, %arg7: memref<1x12xf32, #tpu.memory_space<vmem>>, %arg8: memref<12x3xbf16, #tpu.memory_space<vmem>>, %arg9: memref<1x3xf32, #tpu.memory_space<vmem>>, %arg10: memref<12x12xbf16, #tpu.memory_space<vmem>>, %arg11: memref<1x12xf32, #tpu.memory_space<vmem>>, %arg12: memref<12x64xbf16, #tpu.memory_space<vmem>>, %arg13: memref<1x64xf32, #tpu.memory_space<vmem>>, %arg14: memref<64x128xbf16, #tpu.memory_space<vmem>>, %arg15: memref<1x128xf32, #tpu.memory_space<vmem>>, %arg16: memref<128x896xbf16, #tpu.memory_space<vmem>>, %arg17: memref<1x896xf32, #tpu.memory_space<vmem>>, %arg18: memref<256x3xf32, #tpu.memory_space<vmem>>, %arg19: memref<256x896xf32, #tpu.memory_space<vmem>>) attributes {dimension_semantics = [#tpu.dimension_semantics<parallel>], iteration_bounds = array<i64: 4>, scalar_prefetch = 0 : i64, scratch_operands = 0 : i64, tpu.core_type = #tpu.core_type<tc>, window_params = [{transform_indices = @transform_0, window_bounds = array<i64: 256, 896>}, {pipeline_mode = #tpu.pipeline_mode<synchronous>, transform_indices = @transform_1, window_bounds = array<i64: 896, 128>}, {pipeline_mode = #tpu.pipeline_mode<synchronous>, transform_indices = @transform_2, window_bounds = array<i64: 1, 128>}, {pipeline_mode = #tpu.pipeline_mode<synchronous>, transform_indices = @transform_3, window_bounds = array<i64: 128, 64>}, {pipeline_mode = #tpu.pipeline_mode<synchronous>, transform_indices = @transform_4, window_bounds = array<i64: 1, 64>}, {pipeline_mode = #tpu.pipeline_mode<synchronous>, transform_indices = @transform_5, window_bounds = array<i64: 64, 12>}, {pipeline_mode = #tpu.pipeline_mode<synchronous>, transform_indices = @transform_6, window_bounds = array<i64: 1, 12>}, {pipeline_mode = #tpu.pipeline_mode<synchronous>, transform_indices = @transform_7, window_bounds = array<i64: 12, 3>}, {pipeline_mode = #tpu.pipeline_mode<synchronous>, transform_indices = @transform_8, window_bounds = array<i64: 1, 3>}, {pipeline_mode = #tpu.pipeline_mode<synchronous>, transform_indices = @transform_9, window_bounds = array<i64: 12, 12>}, {pipeline_mode = #tpu.pipeline_mode<synchronous>, transform_indices = @transform_10, window_bounds = array<i64: 1, 12>}, {pipeline_mode = #tpu.pipeline_mode<synchronous>, transform_indices = @transform_11, window_bounds = array<i64: 12, 64>}, {pipeline_mode = #tpu.pipeline_mode<synchronous>, transform_indices = @transform_12, window_bounds = array<i64: 1, 64>}, {pipeline_mode = #tpu.pipeline_mode<synchronous>, transform_indices = @transform_13, window_bounds = array<i64: 64, 128>}, {pipeline_mode = #tpu.pipeline_mode<synchronous>, transform_indices = @transform_14, window_bounds = array<i64: 1, 128>}, {pipeline_mode = #tpu.pipeline_mode<synchronous>, transform_indices = @transform_15, window_bounds = array<i64: 128, 896>}, {pipeline_mode = #tpu.pipeline_mode<synchronous>, transform_indices = @transform_16, window_bounds = array<i64: 1, 896>}, {transform_indices = @transform_17, window_bounds = array<i64: 256, 3>}, {transform_indices = @transform_18, window_bounds = array<i64: 256, 896>}]} {
    %c0 = arith.constant 0 : index
    %c0_0 = arith.constant 0 : index
    %0 = vector.load %arg1[%c0, %c0_0] : memref<256x896xbf16, #tpu.memory_space<vmem>>, vector<256x896xbf16>
    %c0_1 = arith.constant 0 : index
    %c0_2 = arith.constant 0 : index
    %1 = vector.load %arg2[%c0_1, %c0_2] : memref<896x128xbf16, #tpu.memory_space<vmem>>, vector<896x128xbf16>
    %cst = arith.constant dense<0.000000e+00> : vector<256x128xf32>
    %2 = tpu.matmul %0, %1, %cst {dimension_numbers = #tpu.dot_dimension_numbers<[1], [0], [0], [1], [0, 0, 1, 1], [], []>} : vector<256x896xbf16>, vector<896x128xbf16>, vector<256x128xf32> -> vector<256x128xf32>
    %c0_3 = arith.constant 0 : index
    %c0_4 = arith.constant 0 : index
    %3 = vector.load %arg3[%c0_3, %c0_4] : memref<1x128xf32, #tpu.memory_space<vmem>>, vector<1x128xf32>
    %4 = vector.broadcast %3 : vector<1x128xf32> to vector<256x128xf32>
    %5 = arith.addf %2, %4 : vector<256x128xf32>
    %6 = math.tanh %5 : vector<256x128xf32>
    %7 = arith.truncf %6 : vector<256x128xf32> to vector<256x128xbf16>
    %c0_5 = arith.constant 0 : index
    %c0_6 = arith.constant 0 : index
    %8 = vector.load %arg4[%c0_5, %c0_6] : memref<128x64xbf16, #tpu.memory_space<vmem>>, vector<128x64xbf16>
    %cst_7 = arith.constant dense<0.000000e+00> : vector<256x64xf32>
    %9 = tpu.matmul %7, %8, %cst_7 {dimension_numbers = #tpu.dot_dimension_numbers<[1], [0], [0], [1], [0, 0, 1, 1], [], []>} : vector<256x128xbf16>, vector<128x64xbf16>, vector<256x64xf32> -> vector<256x64xf32>
    %c0_8 = arith.constant 0 : index
    %c0_9 = arith.constant 0 : index
    %10 = vector.load %arg5[%c0_8, %c0_9] : memref<1x64xf32, #tpu.memory_space<vmem>>, vector<1x64xf32>
    %11 = vector.broadcast %10 : vector<1x64xf32> to vector<256x64xf32>
    %12 = arith.addf %9, %11 : vector<256x64xf32>
    %13 = math.tanh %12 : vector<256x64xf32>
    %14 = arith.truncf %13 : vector<256x64xf32> to vector<256x64xbf16>
    %c0_10 = arith.constant 0 : index
    %c0_11 = arith.constant 0 : index
    %15 = vector.load %arg6[%c0_10, %c0_11] : memref<64x12xbf16, #tpu.memory_space<vmem>>, vector<64x12xbf16>
    %cst_12 = arith.constant dense<0.000000e+00> : vector<256x12xf32>
    %16 = tpu.matmul %14, %15, %cst_12 {dimension_numbers = #tpu.dot_dimension_numbers<[1], [0], [0], [1], [0, 0, 1, 1], [], []>} : vector<256x64xbf16>, vector<64x12xbf16>, vector<256x12xf32> -> vector<256x12xf32>
    %c0_13 = arith.constant 0 : index
    %c0_14 = arith.constant 0 : index
    %17 = vector.load %arg7[%c0_13, %c0_14] : memref<1x12xf32, #tpu.memory_space<vmem>>, vector<1x12xf32>
    %18 = vector.broadcast %17 : vector<1x12xf32> to vector<256x12xf32>
    %19 = arith.addf %16, %18 : vector<256x12xf32>
    %20 = math.tanh %19 : vector<256x12xf32>
    %21 = arith.truncf %20 : vector<256x12xf32> to vector<256x12xbf16>
    %c0_15 = arith.constant 0 : index
    %c0_16 = arith.constant 0 : index
    %22 = vector.load %arg8[%c0_15, %c0_16] : memref<12x3xbf16, #tpu.memory_space<vmem>>, vector<12x3xbf16>
    %cst_17 = arith.constant dense<0.000000e+00> : vector<256x3xf32>
    %23 = tpu.matmul %21, %22, %cst_17 {dimension_numbers = #tpu.dot_dimension_numbers<[1], [0], [0], [1], [0, 0, 1, 1], [], []>} : vector<256x12xbf16>, vector<12x3xbf16>, vector<256x3xf32> -> vector<256x3xf32>
    %c0_18 = arith.constant 0 : index
    %c0_19 = arith.constant 0 : index
    %24 = vector.load %arg9[%c0_18, %c0_19] : memref<1x3xf32, #tpu.memory_space<vmem>>, vector<1x3xf32>
    %25 = vector.broadcast %24 : vector<1x3xf32> to vector<256x3xf32>
    %26 = arith.addf %23, %25 : vector<256x3xf32>
    %c0_20 = arith.constant 0 : index
    %c0_21 = arith.constant 0 : index
    %27 = vector.load %arg18[%c0_20, %c0_21] : memref<256x3xf32, #tpu.memory_space<vmem>>, vector<256x3xf32>
    tpu.vector_store %arg18[%c0_20, %c0_21], %26 {strides = array<i32>} : memref<256x3xf32, #tpu.memory_space<vmem>>, vector<256x3xf32>,
    %c0_22 = arith.constant 0 : index
    %c0_23 = arith.constant 0 : index
    %28 = vector.load %arg10[%c0_22, %c0_23] : memref<12x12xbf16, #tpu.memory_space<vmem>>, vector<12x12xbf16>
    %cst_24 = arith.constant dense<0.000000e+00> : vector<256x12xf32>
    %29 = tpu.matmul %21, %28, %cst_24 {dimension_numbers = #tpu.dot_dimension_numbers<[1], [0], [0], [1], [0, 0, 1, 1], [], []>} : vector<256x12xbf16>, vector<12x12xbf16>, vector<256x12xf32> -> vector<256x12xf32>
    %c0_25 = arith.constant 0 : index
    %c0_26 = arith.constant 0 : index
    %30 = vector.load %arg11[%c0_25, %c0_26] : memref<1x12xf32, #tpu.memory_space<vmem>>, vector<1x12xf32>
    %31 = vector.broadcast %30 : vector<1x12xf32> to vector<256x12xf32>
    %32 = arith.addf %29, %31 : vector<256x12xf32>
    %33 = math.tanh %32 : vector<256x12xf32>
    %34 = arith.truncf %33 : vector<256x12xf32> to vector<256x12xbf16>
    %c0_27 = arith.constant 0 : index
    %c0_28 = arith.constant 0 : index
    %35 = vector.load %arg12[%c0_27, %c0_28] : memref<12x64xbf16, #tpu.memory_space<vmem>>, vector<12x64xbf16>
    %cst_29 = arith.constant dense<0.000000e+00> : vector<256x64xf32>
    %36 = tpu.matmul %34, %35, %cst_29 {dimension_numbers = #tpu.dot_dimension_numbers<[1], [0], [0], [1], [0, 0, 1, 1], [], []>} : vector<256x12xbf16>, vector<12x64xbf16>, vector<256x64xf32> -> vector<256x64xf32>
    %c0_30 = arith.constant 0 : index
    %c0_31 = arith.constant 0 : index
    %37 = vector.load %arg13[%c0_30, %c0_31] : memref<1x64xf32, #tpu.memory_space<vmem>>, vector<1x64xf32>
    %38 = vector.broadcast %37 : vector<1x64xf32> to vector<256x64xf32>
    %39 = arith.addf %36, %38 : vector<256x64xf32>
    %40 = math.tanh %39 : vector<256x64xf32>
    %41 = arith.truncf %40 : vector<256x64xf32> to vector<256x64xbf16>
    %c0_32 = arith.constant 0 : index
    %c0_33 = arith.constant 0 : index
    %42 = vector.load %arg14[%c0_32, %c0_33] : memref<64x128xbf16, #tpu.memory_space<vmem>>, vector<64x128xbf16>
    %cst_34 = arith.constant dense<0.000000e+00> : vector<256x128xf32>
    %43 = tpu.matmul %41, %42, %cst_34 {dimension_numbers = #tpu.dot_dimension_numbers<[1], [0], [0], [1], [0, 0, 1, 1], [], []>} : vector<256x64xbf16>, vector<64x128xbf16>, vector<256x128xf32> -> vector<256x128xf32>
    %c0_35 = arith.constant 0 : index
    %c0_36 = arith.constant 0 : index
    %44 = vector.load %arg15[%c0_35, %c0_36] : memref<1x128xf32, #tpu.memory_space<vmem>>, vector<1x128xf32>
    %45 = vector.broadcast %44 : vector<1x128xf32> to vector<256x128xf32>
    %46 = arith.addf %43, %45 : vector<256x128xf32>
    %47 = math.tanh %46 : vector<256x128xf32>
    %48 = arith.truncf %47 : vector<256x128xf32> to vector<256x128xbf16>
    %c0_37 = arith.constant 0 : index
    %c0_38 = arith.constant 0 : index
    %49 = vector.load %arg16[%c0_37, %c0_38] : memref<128x896xbf16, #tpu.memory_space<vmem>>, vector<128x896xbf16>
    %cst_39 = arith.constant dense<0.000000e+00> : vector<256x896xf32>
    %50 = tpu.matmul %48, %49, %cst_39 {dimension_numbers = #tpu.dot_dimension_numbers<[1], [0], [0], [1], [0, 0, 1, 1], [], []>} : vector<256x128xbf16>, vector<128x896xbf16>, vector<256x896xf32> -> vector<256x896xf32>
    %c0_40 = arith.constant 0 : index
    %c0_41 = arith.constant 0 : index
    %51 = vector.load %arg17[%c0_40, %c0_41] : memref<1x896xf32, #tpu.memory_space<vmem>>, vector<1x896xf32>
    %52 = vector.broadcast %51 : vector<1x896xf32> to vector<256x896xf32>
    %53 = arith.addf %50, %52 : vector<256x896xf32>
    %cst_42 = arith.constant 0.000000e+00 : f32
    %54 = vector.broadcast %cst_42 : f32 to vector<256x896xf32>
    %55 = arith.subf %54, %53 : vector<256x896xf32>
    %56 = math.exp %55 : vector<256x896xf32>
    %cst_43 = arith.constant 1.000000e+00 : f32
    %57 = vector.broadcast %cst_43 : f32 to vector<256x896xf32>
    %58 = arith.addf %57, %56 : vector<256x896xf32>
    %59 = tpu.reciprocal %58 {approx = true} : vector<256x896xf32> -> vector<256x896xf32>
    %c0_44 = arith.constant 0 : index
    %c0_45 = arith.constant 0 : index
    %60 = vector.load %arg19[%c0_44, %c0_45] : memref<256x896xf32, #tpu.memory_space<vmem>>, vector<256x896xf32>
    tpu.vector_store %arg19[%c0_44, %c0_45], %59 {strides = array<i32>} : memref<256x896xf32, #tpu.memory_space<vmem>>, vector<256x896xf32>,
    return
  }
  func.func @transform_0(%arg0: i32) -> (i32, i32) {
    %c0_i32 = arith.constant 0 : i32
    %c0_i32_0 = arith.constant 0 : i32
    return %arg0, %c0_i32 : i32, i32
  }
  func.func @transform_1(%arg0: i32) -> (i32, i32) {
    %c0_i32 = arith.constant 0 : i32
    %c0_i32_0 = arith.constant 0 : i32
    %c0_i32_1 = arith.constant 0 : i32
    return %c0_i32, %c0_i32_0 : i32, i32
  }
  func.func @transform_2(%arg0: i32) -> (i32, i32) {
    %c0_i32 = arith.constant 0 : i32
    %c0_i32_0 = arith.constant 0 : i32
    %c0_i32_1 = arith.constant 0 : i32
    return %c0_i32, %c0_i32_0 : i32, i32
  }
  func.func @transform_3(%arg0: i32) -> (i32, i32) {
    %c0_i32 = arith.constant 0 : i32
    %c0_i32_0 = arith.constant 0 : i32
    %c0_i32_1 = arith.constant 0 : i32
    return %c0_i32, %c0_i32_0 : i32, i32
  }
  func.func @transform_4(%arg0: i32) -> (i32, i32) {
    %c0_i32 = arith.constant 0 : i32
    %c0_i32_0 = arith.constant 0 : i32
    %c0_i32_1 = arith.constant 0 : i32
    return %c0_i32, %c0_i32_0 : i32, i32
  }
  func.func @transform_5(%arg0: i32) -> (i32, i32) {
    %c0_i32 = arith.constant 0 : i32
    %c0_i32_0 = arith.constant 0 : i32
    %c0_i32_1 = arith.constant 0 : i32
    return %c0_i32, %c0_i32_0 : i32, i32
  }
  func.func @transform_6(%arg0: i32) -> (i32, i32) {
    %c0_i32 = arith.constant 0 : i32
    %c0_i32_0 = arith.constant 0 : i32
    %c0_i32_1 = arith.constant 0 : i32
    return %c0_i32, %c0_i32_0 : i32, i32
  }
  func.func @transform_7(%arg0: i32) -> (i32, i32) {
    %c0_i32 = arith.constant 0 : i32
    %c0_i32_0 = arith.constant 0 : i32
    %c0_i32_1 = arith.constant 0 : i32
    return %c0_i32, %c0_i32_0 : i32, i32
  }
  func.func @transform_8(%arg0: i32) -> (i32, i32) {
    %c0_i32 = arith.constant 0 : i32
    %c0_i32_0 = arith.constant 0 : i32
    %c0_i32_1 = arith.constant 0 : i32
    return %c0_i32, %c0_i32_0 : i32, i32
  }
  func.func @transform_9(%arg0: i32) -> (i32, i32) {
    %c0_i32 = arith.constant 0 : i32
    %c0_i32_0 = arith.constant 0 : i32
    %c0_i32_1 = arith.constant 0 : i32
    return %c0_i32, %c0_i32_0 : i32, i32
  }
  func.func @transform_10(%arg0: i32) -> (i32, i32) {
    %c0_i32 = arith.constant 0 : i32
    %c0_i32_0 = arith.constant 0 : i32
    %c0_i32_1 = arith.constant 0 : i32
    return %c0_i32, %c0_i32_0 : i32, i32
  }
  func.func @transform_11(%arg0: i32) -> (i32, i32) {
    %c0_i32 = arith.constant 0 : i32
    %c0_i32_0 = arith.constant 0 : i32
    %c0_i32_1 = arith.constant 0 : i32
    return %c0_i32, %c0_i32_0 : i32, i32
  }
  func.func @transform_12(%arg0: i32) -> (i32, i32) {
    %c0_i32 = arith.constant 0 : i32
    %c0_i32_0 = arith.constant 0 : i32
    %c0_i32_1 = arith.constant 0 : i32
    return %c0_i32, %c0_i32_0 : i32, i32
  }
  func.func @transform_13(%arg0: i32) -> (i32, i32) {
    %c0_i32 = arith.constant 0 : i32
    %c0_i32_0 = arith.constant 0 : i32
    %c0_i32_1 = arith.constant 0 : i32
    return %c0_i32, %c0_i32_0 : i32, i32
  }
  func.func @transform_14(%arg0: i32) -> (i32, i32) {
    %c0_i32 = arith.constant 0 : i32
    %c0_i32_0 = arith.constant 0 : i32
    %c0_i32_1 = arith.constant 0 : i32
    return %c0_i32, %c0_i32_0 : i32, i32
  }
  func.func @transform_15(%arg0: i32) -> (i32, i32) {
    %c0_i32 = arith.constant 0 : i32
    %c0_i32_0 = arith.constant 0 : i32
    %c0_i32_1 = arith.constant 0 : i32
    return %c0_i32, %c0_i32_0 : i32, i32
  }
  func.func @transform_16(%arg0: i32) -> (i32, i32) {
    %c0_i32 = arith.constant 0 : i32
    %c0_i32_0 = arith.constant 0 : i32
    %c0_i32_1 = arith.constant 0 : i32
    return %c0_i32, %c0_i32_0 : i32, i32
  }
  func.func @transform_17(%arg0: i32) -> (i32, i32) {
    %c0_i32 = arith.constant 0 : i32
    %c0_i32_0 = arith.constant 0 : i32
    return %arg0, %c0_i32 : i32, i32
  }
  func.func @transform_18(%arg0: i32) -> (i32, i32) {
    %c0_i32 = arith.constant 0 : i32
    %c0_i32_0 = arith.constant 0 : i32
    return %arg0, %c0_i32 : i32, i32
  }
}

</mosaic_0001>

<llo_original>
// kernel: autoencoder_forward.1
$region0: #{autoencoder_forward.1}
  #allocation0 [shape = 'u32[]', space=smem, size = 0x4, offset = 0x4, fixed_abs, tag = 'smem constant byte address 0x4 - core index']
  #allocation1 [shape = 'u32[144,128]{1,0:T(1,128)}', space=vmem, size = 0x12000, scoped, tag = 'internal scratch']
  %s0 = inlined_call_operand.vmem [shape: bf16[1024,896], index: 0, kind: input, shape index: {}]
  %s1 = inlined_call_operand.vmem [shape: bf16[896,128], index: 1, kind: input, shape index: {}]
  %s2 = inlined_call_operand.vmem [shape: f32[1,128], index: 2, kind: input, shape index: {}]
  %s3 = inlined_call_operand.vmem [shape: bf16[128,64], index: 3, kind: input, shape index: {}]
  %s4 = inlined_call_operand.vmem [shape: f32[1,64], index: 4, kind: input, shape index: {}]
  %s5 = inlined_call_operand.vmem [shape: bf16[64,12], index: 5, kind: input, shape index: {}]
  %s6 = inlined_call_operand.vmem [shape: f32[1,12], index: 6, kind: input, shape index: {}]
  %s7 = inlined_call_operand.vmem [shape: bf16[12,3], index: 7, kind: input, shape index: {}]
  %s8 = inlined_call_operand.vmem [shape: f32[1,3], index: 8, kind: input, shape index: {}]
  %s9 = inlined_call_operand.vmem [shape: bf16[12,12], index: 9, kind: input, shape index: {}]
  %s10 = inlined_call_operand.vmem [shape: f32[1,12], index: 10, kind: input, shape index: {}]
  %s11 = inlined_call_operand.vmem [shape: bf16[12,64], index: 11, kind: input, shape index: {}]
  %s12 = inlined_call_operand.vmem [shape: f32[1,64], index: 12, kind: input, shape index: {}]
  %s13 = inlined_call_operand.vmem [shape: bf16[64,128], index: 13, kind: input, shape index: {}]
  %s14 = inlined_call_operand.vmem [shape: f32[1,128], index: 14, kind: input, shape index: {}]
  %s15 = inlined_call_operand.vmem [shape: bf16[128,896], index: 15, kind: input, shape index: {}]
  %s16 = inlined_call_operand.vmem [shape: f32[1,896], index: 16, kind: input, shape index: {}]
  %s17 = inlined_call_operand.vmem [shape: f32[1024,3], index: 17, kind: output, shape index: {0}]
  %s18 = inlined_call_operand.vmem [shape: f32[1024,896], index: 18, kind: output, shape index: {1}]
  %19 = xla_tuple %s17, %s18
  %s20 = sld [smem:[#allocation0]]
  $region109: #{autoencoder_forward.1} parent=0
    _
  %s22 = ssub.s32 1, %s20
  %s23 = scalar_select 0, %s22, %s20
  loop: start=0, step=1, limit=6
  $region2: #{autoencoder_forward.1} parent=0 // loop_pre_header
    _
  $region3: #{autoencoder_forward.1} parent=0 // loop_header
    %s25 = sphi 0, %s29
    %p26 = scmp.ge.s32.totalorder %s25, 6
    %s35 = sphi 0, %s37
    %s38 = sphi 0, %s35
    %s39 = sphi 0, %s38
    %s55 = sphi 0, %s39
    %s59 = sphi 0, %s59
    %s61 = sphi 0, %s59
    %s62 = sphi 0, %s61
    %s76 = sphi 0, %s62
    %s80 = sphi 0, %s80
    %s82 = sphi 0, %s80
    %s83 = sphi 0, %s82
    %s97 = sphi 0, %s83
    %s101 = sphi 0, %s101
    %s103 = sphi 0, %s101
    %s104 = sphi 0, %s103
    %s118 = sphi 0, %s104
    %s122 = sphi 0, %s122
    %s124 = sphi 0, %s122
    %s125 = sphi 0, %s124
    %s139 = sphi 0, %s125
    %s143 = sphi 0, %s143
    %s145 = sphi 0, %s143
    %s146 = sphi 0, %s145
    %s160 = sphi 0, %s146
    %s164 = sphi 0, %s164
    %s166 = sphi 0, %s164
    %s167 = sphi 0, %s166
    %s181 = sphi 0, %s167
    %s185 = sphi 0, %s185
    %s187 = sphi 0, %s185
    %s188 = sphi 0, %s187
    %s202 = sphi 0, %s188
    %s206 = sphi 0, %s206
    %s208 = sphi 0, %s206
    %s209 = sphi 0, %s208
    %s223 = sphi 0, %s209
    %s227 = sphi 0, %s227
    %s229 = sphi 0, %s227
    %s230 = sphi 0, %s229
    %s244 = sphi 0, %s230
    %s248 = sphi 0, %s248
    %s250 = sphi 0, %s248
    %s251 = sphi 0, %s250
    %s265 = sphi 0, %s251
    %s269 = sphi 0, %s269
    %s271 = sphi 0, %s269
    %s272 = sphi 0, %s271
    %s286 = sphi 0, %s272
    %s290 = sphi 0, %s290
    %s292 = sphi 0, %s290
    %s293 = sphi 0, %s292
    %s307 = sphi 0, %s293
    %s311 = sphi 0, %s311
    %s313 = sphi 0, %s311
    %s314 = sphi 0, %s313
    %s328 = sphi 0, %s314
    %s332 = sphi 0, %s332
    %s334 = sphi 0, %s332
    %s335 = sphi 0, %s334
    %s349 = sphi 0, %s335
    %s353 = sphi 0, %s353
    %s355 = sphi 0, %s353
    %s356 = sphi 0, %s355
    %s370 = sphi 0, %s356
    %s374 = sphi 0, %s374
    %s376 = sphi 0, %s374
    %s377 = sphi 0, %s376
    %s391 = sphi 0, %s377
    %s397 = sphi 0, %s399
    %s400 = sphi 0, %s397
    %s401 = sphi 0, %s400
    %s417 = sphi 0, %s401
    %s423 = sphi 0, %s425
    %s426 = sphi 0, %s423
    %s427 = sphi 0, %s426
    %s443 = sphi 0, %s427
  $region4: #{autoencoder_forward.1} parent=0 // loop_header_branch
    %28 = sbr.rel (%p26) target = $region8
  $region5: #{autoencoder_forward.1} parent=0 // loop_body
    %s30 = ssub.s32 %s25, 1
    %s31 = ssub.s32 %s25, 2
    %s32 = sadd.s32 %s25, 1
    %s33 = ssub.s32 %s25, %s32
    %p34 = scmp.eq.s32.totalorder %s33, 0
    %s36 = sadd.s32 %s35, 1
    %s37 = scalar_select %p34, %s35, %s36
    %p40 = pneg %p34
    %p41 = scmp.eq.s32.totalorder %s25, 3
    %p42 = por %p40, %p41
    %p43 = scmp.ne.s32.totalorder %s35, %s38
    %p44 = scmp.eq.s32.totalorder %s25, 0
    %p45 = por %p43, %p44
    %p46 = scmp.ne.s32.totalorder %s35, %s38
    %p47 = scmp.eq.s32.totalorder %s30, 3
    %p48 = por %p46, %p47
    %p49 = scmp.ne.s32.totalorder %s38, %s39
    %p50 = scmp.eq.s32.totalorder %s30, 0
    %p51 = por %p49, %p50
    %p52 = scmp.ne.s32.totalorder %s38, %s39
    %p53 = scmp.eq.s32.totalorder %s31, 3
    %p54 = por %p52, %p53
    %p56 = scmp.ne.s32.totalorder %s39, %s55
    %p57 = scmp.eq.s32.totalorder %s31, 0
    %p58 = por %p56, %p57
    %s60 = sadd.s32 %s59, 1
    %p63 = scmp.eq.s32.totalorder %s25, 3
    %p64 = scmp.ne.s32.totalorder %s59, %s61
    %p65 = scmp.eq.s32.totalorder %s25, 0
    %p66 = por %p64, %p65
    %p67 = scmp.ne.s32.totalorder %s59, %s61
    %p68 = scmp.eq.s32.totalorder %s30, 3
    %p69 = por %p67, %p68
    %p70 = scmp.ne.s32.totalorder %s61, %s62
    %p71 = scmp.eq.s32.totalorder %s30, 0
    %p72 = por %p70, %p71
    %p73 = scmp.ne.s32.totalorder %s61, %s62
    %p74 = scmp.eq.s32.totalorder %s31, 3
    %p75 = por %p73, %p74
    %p77 = scmp.ne.s32.totalorder %s62, %s76
    %p78 = scmp.eq.s32.totalorder %s31, 0
    %p79 = por %p77, %p78
    %s81 = sadd.s32 %s80, 1
    %p84 = scmp.eq.s32.totalorder %s25, 3
    %p85 = scmp.ne.s32.totalorder %s80, %s82
    %p86 = scmp.eq.s32.totalorder %s25, 0
    %p87 = por %p85, %p86
    %p88 = scmp.ne.s32.totalorder %s80, %s82
    %p89 = scmp.eq.s32.totalorder %s30, 3
    %p90 = por %p88, %p89
    %p91 = scmp.ne.s32.totalorder %s82, %s83
    %p92 = scmp.eq.s32.totalorder %s30, 0
    %p93 = por %p91, %p92
    %p94 = scmp.ne.s32.totalorder %s82, %s83
    %p95 = scmp.eq.s32.totalorder %s31, 3
    %p96 = por %p94, %p95
    %p98 = scmp.ne.s32.totalorder %s83, %s97
    %p99 = scmp.eq.s32.totalorder %s31, 0
    %p100 = por %p98, %p99
    %s102 = sadd.s32 %s101, 1
    %p105 = scmp.eq.s32.totalorder %s25, 3
    %p106 = scmp.ne.s32.totalorder %s101, %s103
    %p107 = scmp.eq.s32.totalorder %s25, 0
    %p108 = por %p106, %p107
    %p109 = scmp.ne.s32.totalorder %s101, %s103
    %p110 = scmp.eq.s32.totalorder %s30, 3
    %p111 = por %p109, %p110
    %p112 = scmp.ne.s32.totalorder %s103, %s104
    %p113 = scmp.eq.s32.totalorder %s30, 0
    %p114 = por %p112, %p113
    %p115 = scmp.ne.s32.totalorder %s103, %s104
    %p116 = scmp.eq.s32.totalorder %s31, 3
    %p117 = por %p115, %p116
    %p119 = scmp.ne.s32.totalorder %s104, %s118
    %p120 = scmp.eq.s32.totalorder %s31, 0
    %p121 = por %p119, %p120
    %s123 = sadd.s32 %s122, 1
    %p126 = scmp.eq.s32.totalorder %s25, 3
    %p127 = scmp.ne.s32.totalorder %s122, %s124
    %p128 = scmp.eq.s32.totalorder %s25, 0
    %p129 = por %p127, %p128
    %p130 = scmp.ne.s32.totalorder %s122, %s124
    %p131 = scmp.eq.s32.totalorder %s30, 3
    %p132 = por %p130, %p131
    %p133 = scmp.ne.s32.totalorder %s124, %s125
    %p134 = scmp.eq.s32.totalorder %s30, 0
    %p135 = por %p133, %p134
    %p136 = scmp.ne.s32.totalorder %s124, %s125
    %p137 = scmp.eq.s32.totalorder %s31, 3
    %p138 = por %p136, %p137
    %p140 = scmp.ne.s32.totalorder %s125, %s139
    %p141 = scmp.eq.s32.totalorder %s31, 0
    %p142 = por %p140, %p141
    %s144 = sadd.s32 %s143, 1
    %p147 = scmp.eq.s32.totalorder %s25, 3
    %p148 = scmp.ne.s32.totalorder %s143, %s145
    %p149 = scmp.eq.s32.totalorder %s25, 0
    %p150 = por %p148, %p149
    %p151 = scmp.ne.s32.totalorder %s143, %s145
    %p152 = scmp.eq.s32.totalorder %s30, 3
    %p153 = por %p151, %p152
    %p154 = scmp.ne.s32.totalorder %s145, %s146
    %p155 = scmp.eq.s32.totalorder %s30, 0
    %p156 = por %p154, %p155
    %p157 = scmp.ne.s32.totalorder %s145, %s146
    %p158 = scmp.eq.s32.totalorder %s31, 3
    %p159 = por %p157, %p158
    %p161 = scmp.ne.s32.totalorder %s146, %s160
    %p162 = scmp.eq.s32.totalorder %s31, 0
    %p163 = por %p161, %p162
    %s165 = sadd.s32 %s164, 1
    %p168 = scmp.eq.s32.totalorder %s25, 3
    %p169 = scmp.ne.s32.totalorder %s164, %s166
    %p170 = scmp.eq.s32.totalorder %s25, 0
    %p171 = por %p169, %p170
    %p172 = scmp.ne.s32.totalorder %s164, %s166
    %p173 = scmp.eq.s32.totalorder %s30, 3
    %p174 = por %p172, %p173
    %p175 = scmp.ne.s32.totalorder %s166, %s167
    %p176 = scmp.eq.s32.totalorder %s30, 0
    %p177 = por %p175, %p176
    %p178 = scmp.ne.s32.totalorder %s166, %s167
    %p179 = scmp.eq.s32.totalorder %s31, 3
    %p180 = por %p178, %p179
    %p182 = scmp.ne.s32.totalorder %s167, %s181
    %p183 = scmp.eq.s32.totalorder %s31, 0
    %p184 = por %p182, %p183
    %s186 = sadd.s32 %s185, 1
    %p189 = scmp.eq.s32.totalorder %s25, 3
    %p190 = scmp.ne.s32.totalorder %s185, %s187
    %p191 = scmp.eq.s32.totalorder %s25, 0
    %p192 = por %p190, %p191
    %p193 = scmp.ne.s32.totalorder %s185, %s187
    %p194 = scmp.eq.s32.totalorder %s30, 3
    %p195 = por %p193, %p194
    %p196 = scmp.ne.s32.totalorder %s187, %s188
    %p197 = scmp.eq.s32.totalorder %s30, 0
    %p198 = por %p196, %p197
    %p199 = scmp.ne.s32.totalorder %s187, %s188
    %p200 = scmp.eq.s32.totalorder %s31, 3
    %p201 = por %p199, %p200
    %p203 = scmp.ne.s32.totalorder %s188, %s202
    %p204 = scmp.eq.s32.totalorder %s31, 0
    %p205 = por %p203, %p204
    %s207 = sadd.s32 %s206, 1
    %p210 = scmp.eq.s32.totalorder %s25, 3
    %p211 = scmp.ne.s32.totalorder %s206, %s208
    %p212 = scmp.eq.s32.totalorder %s25, 0
    %p213 = por %p211, %p212
    %p214 = scmp.ne.s32.totalorder %s206, %s208
    %p215 = scmp.eq.s32.totalorder %s30, 3
    %p216 = por %p214, %p215
    %p217 = scmp.ne.s32.totalorder %s208, %s209
    %p218 = scmp.eq.s32.totalorder %s30, 0
    %p219 = por %p217, %p218
    %p220 = scmp.ne.s32.totalorder %s208, %s209
    %p221 = scmp.eq.s32.totalorder %s31, 3
    %p222 = por %p220, %p221
    %p224 = scmp.ne.s32.totalorder %s209, %s223
    %p225 = scmp.eq.s32.totalorder %s31, 0
    %p226 = por %p224, %p225
    %s228 = sadd.s32 %s227, 1
    %p231 = scmp.eq.s32.totalorder %s25, 3
    %p232 = scmp.ne.s32.totalorder %s227, %s229
    %p233 = scmp.eq.s32.totalorder %s25, 0
    %p234 = por %p232, %p233
    %p235 = scmp.ne.s32.totalorder %s227, %s229
    %p236 = scmp.eq.s32.totalorder %s30, 3
    %p237 = por %p235, %p236
    %p238 = scmp.ne.s32.totalorder %s229, %s230
    %p239 = scmp.eq.s32.totalorder %s30, 0
    %p240 = por %p238, %p239
    %p241 = scmp.ne.s32.totalorder %s229, %s230
    %p242 = scmp.eq.s32.totalorder %s31, 3
    %p243 = por %p241, %p242
    %p245 = scmp.ne.s32.totalorder %s230, %s244
    %p246 = scmp.eq.s32.totalorder %s31, 0
    %p247 = por %p245, %p246
    %s249 = sadd.s32 %s248, 1
    %p252 = scmp.eq.s32.totalorder %s25, 3
    %p253 = scmp.ne.s32.totalorder %s248, %s250
    %p254 = scmp.eq.s32.totalorder %s25, 0
    %p255 = por %p253, %p254
    %p256 = scmp.ne.s32.totalorder %s248, %s250
    %p257 = scmp.eq.s32.totalorder %s30, 3
    %p258 = por %p256, %p257
    %p259 = scmp.ne.s32.totalorder %s250, %s251
    %p260 = scmp.eq.s32.totalorder %s30, 0
    %p261 = por %p259, %p260
    %p262 = scmp.ne.s32.totalorder %s250, %s251
    %p263 = scmp.eq.s32.totalorder %s31, 3
    %p264 = por %p262, %p263
    %p266 = scmp.ne.s32.totalorder %s251, %s265
    %p267 = scmp.eq.s32.totalorder %s31, 0
    %p268 = por %p266, %p267
    %s270 = sadd.s32 %s269, 1
    %p273 = scmp.eq.s32.totalorder %s25, 3
    %p274 = scmp.ne.s32.totalorder %s269, %s271
    %p275 = scmp.eq.s32.totalorder %s25, 0
    %p276 = por %p274, %p275
    %p277 = scmp.ne.s32.totalorder %s269, %s271
    %p278 = scmp.eq.s32.totalorder %s30, 3
    %p279 = por %p277, %p278
    %p280 = scmp.ne.s32.totalorder %s271, %s272
    %p281 = scmp.eq.s32.totalorder %s30, 0
    %p282 = por %p280, %p281
    %p283 = scmp.ne.s32.totalorder %s271, %s272
    %p284 = scmp.eq.s32.totalorder %s31, 3
    %p285 = por %p283, %p284
    %p287 = scmp.ne.s32.totalorder %s272, %s286
    %p288 = scmp.eq.s32.totalorder %s31, 0
    %p289 = por %p287, %p288
    %s291 = sadd.s32 %s290, 1
    %p294 = scmp.eq.s32.totalorder %s25, 3
    %p295 = scmp.ne.s32.totalorder %s290, %s292
    %p296 = scmp.eq.s32.totalorder %s25, 0
    %p297 = por %p295, %p296
    %p298 = scmp.ne.s32.totalorder %s290, %s292
    %p299 = scmp.eq.s32.totalorder %s30, 3
    %p300 = por %p298, %p299
    %p301 = scmp.ne.s32.totalorder %s292, %s293
    %p302 = scmp.eq.s32.totalorder %s30, 0
    %p303 = por %p301, %p302
    %p304 = scmp.ne.s32.totalorder %s292, %s293
    %p305 = scmp.eq.s32.totalorder %s31, 3
    %p306 = por %p304, %p305
    %p308 = scmp.ne.s32.totalorder %s293, %s307
    %p309 = scmp.eq.s32.totalorder %s31, 0
    %p310 = por %p308, %p309
    %s312 = sadd.s32 %s311, 1
    %p315 = scmp.eq.s32.totalorder %s25, 3
    %p316 = scmp.ne.s32.totalorder %s311, %s313
    %p317 = scmp.eq.s32.totalorder %s25, 0
    %p318 = por %p316, %p317
    %p319 = scmp.ne.s32.totalorder %s311, %s313
    %p320 = scmp.eq.s32.totalorder %s30, 3
    %p321 = por %p319, %p320
    %p322 = scmp.ne.s32.totalorder %s313, %s314
    %p323 = scmp.eq.s32.totalorder %s30, 0
    %p324 = por %p322, %p323
    %p325 = scmp.ne.s32.totalorder %s313, %s314
    %p326 = scmp.eq.s32.totalorder %s31, 3
    %p327 = por %p325, %p326
    %p329 = scmp.ne.s32.totalorder %s314, %s328
    %p330 = scmp.eq.s32.totalorder %s31, 0
    %p331 = por %p329, %p330
    %s333 = sadd.s32 %s332, 1
    %p336 = scmp.eq.s32.totalorder %s25, 3
    %p337 = scmp.ne.s32.totalorder %s332, %s334
    %p338 = scmp.eq.s32.totalorder %s25, 0
    %p339 = por %p337, %p338
    %p340 = scmp.ne.s32.totalorder %s332, %s334
    %p341 = scmp.eq.s32.totalorder %s30, 3
    %p342 = por %p340, %p341
    %p343 = scmp.ne.s32.totalorder %s334, %s335
    %p344 = scmp.eq.s32.totalorder %s30, 0
    %p345 = por %p343, %p344
    %p346 = scmp.ne.s32.totalorder %s334, %s335
    %p347 = scmp.eq.s32.totalorder %s31, 3
    %p348 = por %p346, %p347
    %p350 = scmp.ne.s32.totalorder %s335, %s349
    %p351 = scmp.eq.s32.totalorder %s31, 0
    %p352 = por %p350, %p351
    %s354 = sadd.s32 %s353, 1
    %p357 = scmp.eq.s32.totalorder %s25, 3
    %p358 = scmp.ne.s32.totalorder %s353, %s355
    %p359 = scmp.eq.s32.totalorder %s25, 0
    %p360 = por %p358, %p359
    %p361 = scmp.ne.s32.totalorder %s353, %s355
    %p362 = scmp.eq.s32.totalorder %s30, 3
    %p363 = por %p361, %p362
    %p364 = scmp.ne.s32.totalorder %s355, %s356
    %p365 = scmp.eq.s32.totalorder %s30, 0
    %p366 = por %p364, %p365
    %p367 = scmp.ne.s32.totalorder %s355, %s356
    %p368 = scmp.eq.s32.totalorder %s31, 3
    %p369 = por %p367, %p368
    %p371 = scmp.ne.s32.totalorder %s356, %s370
    %p372 = scmp.eq.s32.totalorder %s31, 0
    %p373 = por %p371, %p372
    %s375 = sadd.s32 %s374, 1
    %p378 = scmp.eq.s32.totalorder %s25, 3
    %p379 = scmp.ne.s32.totalorder %s374, %s376
    %p380 = scmp.eq.s32.totalorder %s25, 0
    %p381 = por %p379, %p380
    %p382 = scmp.ne.s32.totalorder %s374, %s376
    %p383 = scmp.eq.s32.totalorder %s30, 3
    %p384 = por %p382, %p383
    %p385 = scmp.ne.s32.totalorder %s376, %s377
    %p386 = scmp.eq.s32.totalorder %s30, 0
    %p387 = por %p385, %p386
    %p388 = scmp.ne.s32.totalorder %s376, %s377
    %p389 = scmp.eq.s32.totalorder %s31, 3
    %p390 = por %p388, %p389
    %p392 = scmp.ne.s32.totalorder %s377, %s391
    %p393 = scmp.eq.s32.totalorder %s31, 0
    %p394 = por %p392, %p393
    %s395 = ssub.s32 %s25, %s32
    %p396 = scmp.eq.s32.totalorder %s395, 0
    %s398 = sadd.s32 %s397, 1
    %s399 = scalar_select %p396, %s397, %s398
    %p402 = pneg %p396
    %p403 = scmp.eq.s32.totalorder %s25, 3
    %p404 = por %p402, %p403
    %p405 = scmp.ne.s32.totalorder %s397, %s400
    %p406 = scmp.eq.s32.totalorder %s25, 0
    %p407 = por %p405, %p406
    %p408 = scmp.ne.s32.totalorder %s397, %s400
    %p409 = scmp.eq.s32.totalorder %s30, 3
    %p410 = por %p408, %p409
    %p411 = scmp.ne.s32.totalorder %s400, %s401
    %p412 = scmp.eq.s32.totalorder %s30, 0
    %p413 = por %p411, %p412
    %p414 = scmp.ne.s32.totalorder %s400, %s401
    %p415 = scmp.eq.s32.totalorder %s31, 3
    %p416 = por %p414, %p415
    %p418 = scmp.ne.s32.totalorder %s401, %s417
    %p419 = scmp.eq.s32.totalorder %s31, 0
    %p420 = por %p418, %p419
    %s421 = ssub.s32 %s25, %s32
    %p422 = scmp.eq.s32.totalorder %s421, 0
    %s424 = sadd.s32 %s423, 1
    %s425 = scalar_select %p422, %s423, %s424
    %p428 = pneg %p422
    %p429 = scmp.eq.s32.totalorder %s25, 3
    %p430 = por %p428, %p429
    %p431 = scmp.ne.s32.totalorder %s423, %s426
    %p432 = scmp.eq.s32.totalorder %s25, 0
    %p433 = por %p431, %p432
    %p434 = scmp.ne.s32.totalorder %s423, %s426
    %p435 = scmp.eq.s32.totalorder %s30, 3
    %p436 = por %p434, %p435
    %p437 = scmp.ne.s32.totalorder %s426, %s427
    %p438 = scmp.eq.s32.totalorder %s30, 0
    %p439 = por %p437, %p438
    %p440 = scmp.ne.s32.totalorder %s426, %s427
    %p441 = scmp.eq.s32.totalorder %s31, 3
    %p442 = por %p440, %p441
    %p444 = scmp.ne.s32.totalorder %s427, %s443
    %p445 = scmp.eq.s32.totalorder %s31, 0
    %p446 = por %p444, %p445
    %p447 = scmp.le.s32.totalorder 1, %s25
    %p448 = scmp.lt.s32.totalorder %s25, 5
    %p449 = pnand %p447, %p448
    %p450 = pneg %p449
    // Predicated region
    $region9: #{autoencoder_forward.1} parent=5 // pred_check
      _
    $region10: #{autoencoder_forward.1} parent=5 // pred_check_branch
      %452 = sbr.rel (%p449) target = $region12
    $region11: #{autoencoder_forward.1} parent=5 // pred_region
      %s453 = ssub.s32 %s25, 1
      // Predicated region
      $region13: #{autoencoder_forward.1} parent=11 // pred_check
        %p454 = pneg %p72
      $region14: #{autoencoder_forward.1} parent=11 // pred_check_branch
        %456 = sbr.rel (%p454) target = $region16
      $region15: #{autoencoder_forward.1} parent=11 // pred_region
        _
      $region16: #{autoencoder_forward.1} parent=11 // pred_fallthru
        _
      // Predicated region
      $region17: #{autoencoder_forward.1} parent=11 // pred_check
        %p457 = pneg %p93
      $region18: #{autoencoder_forward.1} parent=11 // pred_check_branch
        %459 = sbr.rel (%p457) target = $region20
      $region19: #{autoencoder_forward.1} parent=11 // pred_region
        _
      $region20: #{autoencoder_forward.1} parent=11 // pred_fallthru
        _
      // Predicated region
      $region21: #{autoencoder_forward.1} parent=11 // pred_check
        %p460 = pneg %p114
      $region22: #{autoencoder_forward.1} parent=11 // pred_check_branch
        %462 = sbr.rel (%p460) target = $region24
      $region23: #{autoencoder_forward.1} parent=11 // pred_region
        _
      $region24: #{autoencoder_forward.1} parent=11 // pred_fallthru
        _
      // Predicated region
      $region25: #{autoencoder_forward.1} parent=11 // pred_check
        %p463 = pneg %p135
      $region26: #{autoencoder_forward.1} parent=11 // pred_check_branch
        %465 = sbr.rel (%p463) target = $region28
      $region27: #{autoencoder_forward.1} parent=11 // pred_region
        _
      $region28: #{autoencoder_forward.1} parent=11 // pred_fallthru
        _
      // Predicated region
      $region29: #{autoencoder_forward.1} parent=11 // pred_check
        %p466 = pneg %p156
      $region30: #{autoencoder_forward.1} parent=11 // pred_check_branch
        %468 = sbr.rel (%p466) target = $region32
      $region31: #{autoencoder_forward.1} parent=11 // pred_region
        _
      $region32: #{autoencoder_forward.1} parent=11 // pred_fallthru
        _
      // Predicated region
      $region33: #{autoencoder_forward.1} parent=11 // pred_check
        %p469 = pneg %p177
      $region34: #{autoencoder_forward.1} parent=11 // pred_check_branch
        %471 = sbr.rel (%p469) target = $region36
      $region35: #{autoencoder_forward.1} parent=11 // pred_region
        _
      $region36: #{autoencoder_forward.1} parent=11 // pred_fallthru
        _
      // Predicated region
      $region37: #{autoencoder_forward.1} parent=11 // pred_check
        %p472 = pneg %p198
      $region38: #{autoencoder_forward.1} parent=11 // pred_check_branch
        %474 = sbr.rel (%p472) target = $region40
      $region39: #{autoencoder_forward.1} parent=11 // pred_region
        _
      $region40: #{autoencoder_forward.1} parent=11 // pred_fallthru
        _
      // Predicated region
      $region41: #{autoencoder_forward.1} parent=11 // pred_check
        %p475 = pneg %p219
      $region42: #{autoencoder_forward.1} parent=11 // pred_check_branch
        %477 = sbr.rel (%p475) target = $region44
      $region43: #{autoencoder_forward.1} parent=11 // pred_region
        _
      $region44: #{autoencoder_forward.1} parent=11 // pred_fallthru
        _
      // Predicated region
      $region45: #{autoencoder_forward.1} parent=11 // pred_check
        %p478 = pneg %p240
      $region46: #{autoencoder_forward.1} parent=11 // pred_check_branch
        %480 = sbr.rel (%p478) target = $region48
      $region47: #{autoencoder_forward.1} parent=11 // pred_region
        _
      $region48: #{autoencoder_forward.1} parent=11 // pred_fallthru
        _
      // Predicated region
      $region49: #{autoencoder_forward.1} parent=11 // pred_check
        %p481 = pneg %p261
      $region50: #{autoencoder_forward.1} parent=11 // pred_check_branch
        %483 = sbr.rel (%p481) target = $region52
      $region51: #{autoencoder_forward.1} parent=11 // pred_region
        _
      $region52: #{autoencoder_forward.1} parent=11 // pred_fallthru
        _
      // Predicated region
      $region53: #{autoencoder_forward.1} parent=11 // pred_check
        %p484 = pneg %p282
      $region54: #{autoencoder_forward.1} parent=11 // pred_check_branch
        %486 = sbr.rel (%p484) target = $region56
      $region55: #{autoencoder_forward.1} parent=11 // pred_region
        _
      $region56: #{autoencoder_forward.1} parent=11 // pred_fallthru
        _
      // Predicated region
      $region57: #{autoencoder_forward.1} parent=11 // pred_check
        %p487 = pneg %p303
      $region58: #{autoencoder_forward.1} parent=11 // pred_check_branch
        %489 = sbr.rel (%p487) target = $region60
      $region59: #{autoencoder_forward.1} parent=11 // pred_region
        _
      $region60: #{autoencoder_forward.1} parent=11 // pred_fallthru
        _
      // Predicated region
      $region61: #{autoencoder_forward.1} parent=11 // pred_check
        %p490 = pneg %p324
      $region62: #{autoencoder_forward.1} parent=11 // pred_check_branch
        %492 = sbr.rel (%p490) target = $region64
      $region63: #{autoencoder_forward.1} parent=11 // pred_region
        _
      $region64: #{autoencoder_forward.1} parent=11 // pred_fallthru
        _
      // Predicated region
      $region65: #{autoencoder_forward.1} parent=11 // pred_check
        %p493 = pneg %p345
      $region66: #{autoencoder_forward.1} parent=11 // pred_check_branch
        %495 = sbr.rel (%p493) target = $region68
      $region67: #{autoencoder_forward.1} parent=11 // pred_region
        _
      $region68: #{autoencoder_forward.1} parent=11 // pred_fallthru
        _
      // Predicated region
      $region69: #{autoencoder_forward.1} parent=11 // pred_check
        %p496 = pneg %p366
      $region70: #{autoencoder_forward.1} parent=11 // pred_check_branch
        %498 = sbr.rel (%p496) target = $region72
      $region71: #{autoencoder_forward.1} parent=11 // pred_region
        _
      $region72: #{autoencoder_forward.1} parent=11 // pred_fallthru
        _
      // Predicated region
      $region73: #{autoencoder_forward.1} parent=11 // pred_check
        %p499 = pneg %p387
      $region74: #{autoencoder_forward.1} parent=11 // pred_check_branch
        %501 = sbr.rel (%p499) target = $region76
      $region75: #{autoencoder_forward.1} parent=11 // pred_region
        _
      $region76: #{autoencoder_forward.1} parent=11 // pred_fallthru
        _
    $region12: #{autoencoder_forward.1} parent=5 // pred_fallthru
      _
    %p502 = scmp.lt.s32.totalorder %s25, 4
    // Predicated region
    $region77: #{autoencoder_forward.1} parent=5 // pred_check
      %p503 = pneg %p502
    $region78: #{autoencoder_forward.1} parent=5 // pred_check_branch
      %505 = sbr.rel (%p503) target = $region80
    $region79: #{autoencoder_forward.1} parent=5 // pred_region
      // Predicated region
      $region81: #{autoencoder_forward.1} parent=79 // pred_check
        %p506 = pneg %p45
      $region82: #{autoencoder_forward.1} parent=79 // pred_check_branch
        %508 = sbr.rel (%p506) target = $region84
      $region83: #{autoencoder_forward.1} parent=79 // pred_region
        %s509 = smul.u32 32, %s25
        %p510 = scmp.lt.s32.totalorder %s509, 127
        %s511 = scalar_select %p510, %s509, 127
        %s512 = smul.addr %s511, 7
        %s513 = smul.addr %s512, 4
        %s514 = scalar_lea.vmem %s0, %s513
        %s515 = smul.u32 32, %s25
      $region84: #{autoencoder_forward.1} parent=79 // pred_fallthru
        _
    $region80: #{autoencoder_forward.1} parent=5 // pred_fallthru
      _
    %p516 = scmp.le.s32.totalorder 1, %s25
    %p517 = scmp.lt.s32.totalorder %s25, 5
    %p518 = pnand %p516, %p517
    %p519 = pneg %p518
    // Predicated region
    $region85: #{autoencoder_forward.1} parent=5 // pred_check
      _
    $region86: #{autoencoder_forward.1} parent=5 // pred_check_branch
      %521 = sbr.rel (%p518) target = $region88
    $region87: #{autoencoder_forward.1} parent=5 // pred_region
      %s522 = ssub.s32 %s25, 1
      %s523 = smul.u32 32, %s30
      %p524 = scmp.lt.s32.totalorder %s523, 127
      %s525 = scalar_select %p524, %s523, 127
      %s526 = smul.addr %s525, 7
      %s527 = smul.addr %s526, 4
      %s528 = scalar_lea.vmem %s0, %s527
      %p529 = pneg %p51
      %p530 = pneg %p48
      %p531 = pneg %p72
      %p532 = pneg %p69
      %p533 = pneg %p93
      %p534 = pneg %p90
      %p535 = pneg %p114
      %p536 = pneg %p111
      %p537 = pneg %p135
      %p538 = pneg %p132
      %p539 = pneg %p156
      %p540 = pneg %p153
      %p541 = pneg %p177
      %p542 = pneg %p174
      %p543 = pneg %p198
      %p544 = pneg %p195
      %p545 = pneg %p219
      %p546 = pneg %p216
      %p547 = pneg %p240
      %p548 = pneg %p237
      %p549 = pneg %p261
      %p550 = pneg %p258
      %p551 = pneg %p282
      %p552 = pneg %p279
      %p553 = pneg %p303
      %p554 = pneg %p300
      %p555 = pneg %p324
      %p556 = pneg %p321
      %p557 = pneg %p345
      %p558 = pneg %p342
      %p559 = pneg %p366
      %p560 = pneg %p363
      %p561 = pneg %p387
      %p562 = pneg %p384
      %p563 = pneg %p413
      %p564 = pneg %p410
      %s565 = smul.u32 32, %s30
      %p566 = scmp.lt.s32.totalorder %s565, 127
      %s567 = scalar_select %p566, %s565, 127
      %s568 = smul.addr %s567, 8
      %s569 = scalar_lea.vmem %s17, %s568
      %p570 = pneg %p439
      %p571 = pneg %p436
      %s572 = smul.u32 32, %s30
      %p573 = scmp.lt.s32.totalorder %s572, 127
      %s574 = scalar_select %p573, %s572, 127
      %s575 = smul.addr %s574, 7
      %s576 = smul.addr %s575, 8
      %s577 = scalar_lea.vmem %s18, %s576
      %s578 = smul.u32 32, %s30
      %p579 = scmp.lt.s32.totalorder %s578, 127
      %s580 = scalar_select %p579, %s578, 127
      %s581 = smul.addr %s580, 7
      %s582 = smul.addr %s581, 4
      %s583 = scalar_lea.vmem %s0, %s582
      %s584 = smul.u32 32, %s30
      %s585 = smul.u32 32, %s30
      %p586 = scmp.lt.s32.totalorder %s585, 127
      %s587 = scalar_select %p586, %s585, 127
      %s588 = smul.addr %s587, 8
      %s589 = scalar_lea.vmem %s17, %s588
      %s590 = smul.u32 32, %s30
      %s591 = smul.u32 32, %s30
      %p592 = scmp.lt.s32.totalorder %s591, 127
      %s593 = scalar_select %p592, %s591, 127
      %s594 = smul.addr %s593, 7
      %s595 = smul.addr %s594, 8
      %s596 = scalar_lea.vmem %s18, %s595
      %s597 = smul.u32 32, %s30
      %v599 = vld [vmem:[%s583] sm:$0xff]
      %v600 = vld [vmem:[%s583 + $0x8] sm:$0xff]
      %v601 = vld [vmem:[%s583 + $0x10] sm:$0xff]
      %v602 = vld [vmem:[%s583 + $0x18] sm:$0xf]
      %v603 = vld [vmem:[%s583 + $0x1c] sm:$0xff]
      %v604 = vld [vmem:[%s583 + $0x24] sm:$0xff]
      %v605 = vld [vmem:[%s583 + $0x2c] sm:$0xff]
      %v606 = vld [vmem:[%s583 + $0x34] sm:$0xf]
      %v607 = vld [vmem:[%s583 + $0x38] sm:$0xff]
      %v608 = vld [vmem:[%s583 + $0x40] sm:$0xff]
      %v609 = vld [vmem:[%s583 + $0x48] sm:$0xff]
      %v610 = vld [vmem:[%s583 + $0x50] sm:$0xf]
      %v611 = vld [vmem:[%s583 + $0x54] sm:$0xff]
      %v612 = vld [vmem:[%s583 + $0x5c] sm:$0xff]
      %v613 = vld [vmem:[%s583 + $0x64] sm:$0xff]
      %v614 = vld [vmem:[%s583 + $0x6c] sm:$0xf]
      %v615 = vld [vmem:[%s583 + $0x70] sm:$0xff]
      %v616 = vld [vmem:[%s583 + $0x78] sm:$0xff]
      %v617 = vld [vmem:[%s583 + $0x80] sm:$0xff]
      %v618 = vld [vmem:[%s583 + $0x88] sm:$0xf]
      %v619 = vld [vmem:[%s583 + $0x8c] sm:$0xff]
      %v620 = vld [vmem:[%s583 + $0x94] sm:$0xff]
      %v621 = vld [vmem:[%s583 + $0x9c] sm:$0xff]
      %v622 = vld [vmem:[%s583 + $0xa4] sm:$0xf]
      %v623 = vld [vmem:[%s583 + $0xa8] sm:$0xff]
      %v624 = vld [vmem:[%s583 + $0xb0] sm:$0xff]
      %v625 = vld [vmem:[%s583 + $0xb8] sm:$0xff]
      %v626 = vld [vmem:[%s583 + $0xc0] sm:$0xf]
      %v627 = vld [vmem:[%s583 + $0xc4] sm:$0xff]
      %v628 = vld [vmem:[%s583 + $0xcc] sm:$0xff]
      %v629 = vld [vmem:[%s583 + $0xd4] sm:$0xff]
      %v630 = vld [vmem:[%s583 + $0xdc] sm:$0xf]
      %v631 = vld [vmem:[%s583 + $0xe0] sm:$0xff]
      %v632 = vld [vmem:[%s583 + $0xe8] sm:$0xff]
      %v633 = vld [vmem:[%s583 + $0xf0] sm:$0xff]
      %v634 = vld [vmem:[%s583 + $0xf8] sm:$0xf]
      %v635 = vld [vmem:[%s583 + $0xfc] sm:$0xff]
      %v636 = vld [vmem:[%s583 + $0x104] sm:$0xff]
      %v637 = vld [vmem:[%s583 + $0x10c] sm:$0xff]
      %v638 = vld [vmem:[%s583 + $0x114] sm:$0xf]
      %v639 = vld [vmem:[%s583 + $0x118] sm:$0xff]
      %v640 = vld [vmem:[%s583 + $0x120] sm:$0xff]
      %v641 = vld [vmem:[%s583 + $0x128] sm:$0xff]
      %v642 = vld [vmem:[%s583 + $0x130] sm:$0xf]
      %v643 = vld [vmem:[%s583 + $0x134] sm:$0xff]
      %v644 = vld [vmem:[%s583 + $0x13c] sm:$0xff]
      %v645 = vld [vmem:[%s583 + $0x144] sm:$0xff]
      %v646 = vld [vmem:[%s583 + $0x14c] sm:$0xf]
      %v647 = vld [vmem:[%s583 + $0x150] sm:$0xff]
      %v648 = vld [vmem:[%s583 + $0x158] sm:$0xff]
      %v649 = vld [vmem:[%s583 + $0x160] sm:$0xff]
      %v650 = vld [vmem:[%s583 + $0x168] sm:$0xf]
      %v651 = vld [vmem:[%s583 + $0x16c] sm:$0xff]
      %v652 = vld [vmem:[%s583 + $0x174] sm:$0xff]
      %v653 = vld [vmem:[%s583 + $0x17c] sm:$0xff]
      %v654 = vld [vmem:[%s583 + $0x184] sm:$0xf]
      %v655 = vld [vmem:[%s583 + $0x188] sm:$0xff]
      %v656 = vld [vmem:[%s583 + $0x190] sm:$0xff]
      %v657 = vld [vmem:[%s583 + $0x198] sm:$0xff]
      %v658 = vld [vmem:[%s583 + $0x1a0] sm:$0xf]
      %v659 = vld [vmem:[%s583 + $0x1a4] sm:$0xff]
      %v660 = vld [vmem:[%s583 + $0x1ac] sm:$0xff]
      %v661 = vld [vmem:[%s583 + $0x1b4] sm:$0xff]
      %v662 = vld [vmem:[%s583 + $0x1bc] sm:$0xf]
      %v663 = vld [vmem:[%s583 + $0x1c0] sm:$0xff]
      %v664 = vld [vmem:[%s583 + $0x1c8] sm:$0xff]
      %v665 = vld [vmem:[%s583 + $0x1d0] sm:$0xff]
      %v666 = vld [vmem:[%s583 + $0x1d8] sm:$0xf]
      %v667 = vld [vmem:[%s583 + $0x1dc] sm:$0xff]
      %v668 = vld [vmem:[%s583 + $0x1e4] sm:$0xff]
      %v669 = vld [vmem:[%s583 + $0x1ec] sm:$0xff]
      %v670 = vld [vmem:[%s583 + $0x1f4] sm:$0xf]
      %v671 = vld [vmem:[%s583 + $0x1f8] sm:$0xff]
      %v672 = vld [vmem:[%s583 + $0x200] sm:$0xff]
      %v673 = vld [vmem:[%s583 + $0x208] sm:$0xff]
      %v674 = vld [vmem:[%s583 + $0x210] sm:$0xf]
      %v675 = vld [vmem:[%s583 + $0x214] sm:$0xff]
      %v676 = vld [vmem:[%s583 + $0x21c] sm:$0xff]
      %v677 = vld [vmem:[%s583 + $0x224] sm:$0xff]
      %v678 = vld [vmem:[%s583 + $0x22c] sm:$0xf]
      %v679 = vld [vmem:[%s583 + $0x230] sm:$0xff]
      %v680 = vld [vmem:[%s583 + $0x238] sm:$0xff]
      %v681 = vld [vmem:[%s583 + $0x240] sm:$0xff]
      %v682 = vld [vmem:[%s583 + $0x248] sm:$0xf]
      %v683 = vld [vmem:[%s583 + $0x24c] sm:$0xff]
      %v684 = vld [vmem:[%s583 + $0x254] sm:$0xff]
      %v685 = vld [vmem:[%s583 + $0x25c] sm:$0xff]
      %v686 = vld [vmem:[%s583 + $0x264] sm:$0xf]
      %v687 = vld [vmem:[%s583 + $0x268] sm:$0xff]
      %v688 = vld [vmem:[%s583 + $0x270] sm:$0xff]
      %v689 = vld [vmem:[%s583 + $0x278] sm:$0xff]
      %v690 = vld [vmem:[%s583 + $0x280] sm:$0xf]
      %v691 = vld [vmem:[%s583 + $0x284] sm:$0xff]
      %v692 = vld [vmem:[%s583 + $0x28c] sm:$0xff]
      %v693 = vld [vmem:[%s583 + $0x294] sm:$0xff]
      %v694 = vld [vmem:[%s583 + $0x29c] sm:$0xf]
      %v695 = vld [vmem:[%s583 + $0x2a0] sm:$0xff]
      %v696 = vld [vmem:[%s583 + $0x2a8] sm:$0xff]
      %v697 = vld [vmem:[%s583 + $0x2b0] sm:$0xff]
      %v698 = vld [vmem:[%s583 + $0x2b8] sm:$0xf]
      %v699 = vld [vmem:[%s583 + $0x2bc] sm:$0xff]
      %v700 = vld [vmem:[%s583 + $0x2c4] sm:$0xff]
      %v701 = vld [vmem:[%s583 + $0x2cc] sm:$0xff]
      %v702 = vld [vmem:[%s583 + $0x2d4] sm:$0xf]
      %v703 = vld [vmem:[%s583 + $0x2d8] sm:$0xff]
      %v704 = vld [vmem:[%s583 + $0x2e0] sm:$0xff]
      %v705 = vld [vmem:[%s583 + $0x2e8] sm:$0xff]
      %v706 = vld [vmem:[%s583 + $0x2f0] sm:$0xf]
      %v707 = vld [vmem:[%s583 + $0x2f4] sm:$0xff]
      %v708 = vld [vmem:[%s583 + $0x2fc] sm:$0xff]
      %v709 = vld [vmem:[%s583 + $0x304] sm:$0xff]
      %v710 = vld [vmem:[%s583 + $0x30c] sm:$0xf]
      %v711 = vld [vmem:[%s583 + $0x310] sm:$0xff]
      %v712 = vld [vmem:[%s583 + $0x318] sm:$0xff]
      %v713 = vld [vmem:[%s583 + $0x320] sm:$0xff]
      %v714 = vld [vmem:[%s583 + $0x328] sm:$0xf]
      %v715 = vld [vmem:[%s583 + $0x32c] sm:$0xff]
      %v716 = vld [vmem:[%s583 + $0x334] sm:$0xff]
      %v717 = vld [vmem:[%s583 + $0x33c] sm:$0xff]
      %v718 = vld [vmem:[%s583 + $0x344] sm:$0xf]
      %v719 = vld [vmem:[%s583 + $0x348] sm:$0xff]
      %v720 = vld [vmem:[%s583 + $0x350] sm:$0xff]
      %v721 = vld [vmem:[%s583 + $0x358] sm:$0xff]
      %v722 = vld [vmem:[%s583 + $0x360] sm:$0xf]
      %v723 = vld [vmem:[%s583 + $0x364] sm:$0xff]
      %v724 = vld [vmem:[%s583 + $0x36c] sm:$0xff]
      %v725 = vld [vmem:[%s583 + $0x374] sm:$0xff]
      %v726 = vld [vmem:[%s583 + $0x37c] sm:$0xf]
      %v727 = vld [vmem:[%s1] sm:$0xf]
      %v728 = vld [vmem:[%s1 + $0x4] sm:$0xf]
      %v729 = vld [vmem:[%s1 + $0x8] sm:$0xf]
      %v730 = vld [vmem:[%s1 + $0xc] sm:$0xf]
      %v731 = vld [vmem:[%s1 + $0x10] sm:$0xf]
      %v732 = vld [vmem:[%s1 + $0x14] sm:$0xf]
      %v733 = vld [vmem:[%s1 + $0x18] sm:$0xf]
      %v734 = vld [vmem:[%s1 + $0x1c] sm:$0xf]
      %v735 = vld [vmem:[%s1 + $0x20] sm:$0xf]
      %v736 = vld [vmem:[%s1 + $0x24] sm:$0xf]
      %v737 = vld [vmem:[%s1 + $0x28] sm:$0xf]
      %v738 = vld [vmem:[%s1 + $0x2c] sm:$0xf]
      %v739 = vld [vmem:[%s1 + $0x30] sm:$0xf]
      %v740 = vld [vmem:[%s1 + $0x34] sm:$0xf]
      %v741 = vld [vmem:[%s1 + $0x38] sm:$0xf]
      %v742 = vld [vmem:[%s1 + $0x3c] sm:$0xf]
      %v743 = vld [vmem:[%s1 + $0x40] sm:$0xf]
      %v744 = vld [vmem:[%s1 + $0x44] sm:$0xf]
      %v745 = vld [vmem:[%s1 + $0x48] sm:$0xf]
      %v746 = vld [vmem:[%s1 + $0x4c] sm:$0xf]
      %v747 = vld [vmem:[%s1 + $0x50] sm:$0xf]
      %v748 = vld [vmem:[%s1 + $0x54] sm:$0xf]
      %v749 = vld [vmem:[%s1 + $0x58] sm:$0xf]
      %v750 = vld [vmem:[%s1 + $0x5c] sm:$0xf]
      %v751 = vld [vmem:[%s1 + $0x60] sm:$0xf]
      %v752 = vld [vmem:[%s1 + $0x64] sm:$0xf]
      %v753 = vld [vmem:[%s1 + $0x68] sm:$0xf]
      %v754 = vld [vmem:[%s1 + $0x6c] sm:$0xf]
      %v755 = vld [vmem:[%s1 + $0x70] sm:$0xf]
      %v756 = vld [vmem:[%s1 + $0x74] sm:$0xf]
      %v757 = vld [vmem:[%s1 + $0x78] sm:$0xf]
      %v758 = vld [vmem:[%s1 + $0x7c] sm:$0xf]
      %v759 = vld [vmem:[%s1 + $0x80] sm:$0xf]
      %v760 = vld [vmem:[%s1 + $0x84] sm:$0xf]
      %v761 = vld [vmem:[%s1 + $0x88] sm:$0xf]
      %v762 = vld [vmem:[%s1 + $0x8c] sm:$0xf]
      %v763 = vld [vmem:[%s1 + $0x90] sm:$0xf]
      %v764 = vld [vmem:[%s1 + $0x94] sm:$0xf]
      %v765 = vld [vmem:[%s1 + $0x98] sm:$0xf]
      %v766 = vld [vmem:[%s1 + $0x9c] sm:$0xf]
      %v767 = vld [vmem:[%s1 + $0xa0] sm:$0xf]
      %v768 = vld [vmem:[%s1 + $0xa4] sm:$0xf]
      %v769 = vld [vmem:[%s1 + $0xa8] sm:$0xf]
      %v770 = vld [vmem:[%s1 + $0xac] sm:$0xf]
      %v771 = vld [vmem:[%s1 + $0xb0] sm:$0xf]
      %v772 = vld [vmem:[%s1 + $0xb4] sm:$0xf]
      %v773 = vld [vmem:[%s1 + $0xb8] sm:$0xf]
      %v774 = vld [vmem:[%s1 + $0xbc] sm:$0xf]
      %v775 = vld [vmem:[%s1 + $0xc0] sm:$0xf]
      %v776 = vld [vmem:[%s1 + $0xc4] sm:$0xf]
      %v777 = vld [vmem:[%s1 + $0xc8] sm:$0xf]
      %v778 = vld [vmem:[%s1 + $0xcc] sm:$0xf]
      %v779 = vld [vmem:[%s1 + $0xd0] sm:$0xf]
      %v780 = vld [vmem:[%s1 + $0xd4] sm:$0xf]
      %v781 = vld [vmem:[%s1 + $0xd8] sm:$0xf]
      %v782 = vld [vmem:[%s1 + $0xdc] sm:$0xf]
      %v783 = vld [vmem:[%s1 + $0xe0] sm:$0xf]
      %v784 = vld [vmem:[%s1 + $0xe4] sm:$0xf]
      %v785 = vld [vmem:[%s1 + $0xe8] sm:$0xf]
      %v786 = vld [vmem:[%s1 + $0xec] sm:$0xf]
      %v787 = vld [vmem:[%s1 + $0xf0] sm:$0xf]
      %v788 = vld [vmem:[%s1 + $0xf4] sm:$0xf]
      %v789 = vld [vmem:[%s1 + $0xf8] sm:$0xf]
      %v790 = vld [vmem:[%s1 + $0xfc] sm:$0xf]
      %v791 = vld [vmem:[%s1 + $0x100] sm:$0xf]
      %v792 = vld [vmem:[%s1 + $0x104] sm:$0xf]
      %v793 = vld [vmem:[%s1 + $0x108] sm:$0xf]
      %v794 = vld [vmem:[%s1 + $0x10c] sm:$0xf]
      %v795 = vld [vmem:[%s1 + $0x110] sm:$0xf]
      %v796 = vld [vmem:[%s1 + $0x114] sm:$0xf]
      %v797 = vld [vmem:[%s1 + $0x118] sm:$0xf]
      %v798 = vld [vmem:[%s1 + $0x11c] sm:$0xf]
      %v799 = vld [vmem:[%s1 + $0x120] sm:$0xf]
      %v800 = vld [vmem:[%s1 + $0x124] sm:$0xf]
      %v801 = vld [vmem:[%s1 + $0x128] sm:$0xf]
      %v802 = vld [vmem:[%s1 + $0x12c] sm:$0xf]
      %v803 = vld [vmem:[%s1 + $0x130] sm:$0xf]
      %v804 = vld [vmem:[%s1 + $0x134] sm:$0xf]
      %v805 = vld [vmem:[%s1 + $0x138] sm:$0xf]
      %v806 = vld [vmem:[%s1 + $0x13c] sm:$0xf]
      %v807 = vld [vmem:[%s1 + $0x140] sm:$0xf]
      %v808 = vld [vmem:[%s1 + $0x144] sm:$0xf]
      %v809 = vld [vmem:[%s1 + $0x148] sm:$0xf]
      %v810 = vld [vmem:[%s1 + $0x14c] sm:$0xf]
      %v811 = vld [vmem:[%s1 + $0x150] sm:$0xf]
      %v812 = vld [vmem:[%s1 + $0x154] sm:$0xf]
      %v813 = vld [vmem:[%s1 + $0x158] sm:$0xf]
      %v814 = vld [vmem:[%s1 + $0x15c] sm:$0xf]
      %v815 = vld [vmem:[%s1 + $0x160] sm:$0xf]
      %v816 = vld [vmem:[%s1 + $0x164] sm:$0xf]
      %v817 = vld [vmem:[%s1 + $0x168] sm:$0xf]
      %v818 = vld [vmem:[%s1 + $0x16c] sm:$0xf]
      %v819 = vld [vmem:[%s1 + $0x170] sm:$0xf]
      %v820 = vld [vmem:[%s1 + $0x174] sm:$0xf]
      %v821 = vld [vmem:[%s1 + $0x178] sm:$0xf]
      %v822 = vld [vmem:[%s1 + $0x17c] sm:$0xf]
      %v823 = vld [vmem:[%s1 + $0x180] sm:$0xf]
      %v824 = vld [vmem:[%s1 + $0x184] sm:$0xf]
      %v825 = vld [vmem:[%s1 + $0x188] sm:$0xf]
      %v826 = vld [vmem:[%s1 + $0x18c] sm:$0xf]
      %v827 = vld [vmem:[%s1 + $0x190] sm:$0xf]
      %v828 = vld [vmem:[%s1 + $0x194] sm:$0xf]
      %v829 = vld [vmem:[%s1 + $0x198] sm:$0xf]
      %v830 = vld [vmem:[%s1 + $0x19c] sm:$0xf]
      %v831 = vld [vmem:[%s1 + $0x1a0] sm:$0xf]
      %v832 = vld [vmem:[%s1 + $0x1a4] sm:$0xf]
      %v833 = vld [vmem:[%s1 + $0x1a8] sm:$0xf]
      %v834 = vld [vmem:[%s1 + $0x1ac] sm:$0xf]
      %v835 = vld [vmem:[%s1 + $0x1b0] sm:$0xf]
      %v836 = vld [vmem:[%s1 + $0x1b4] sm:$0xf]
      %v837 = vld [vmem:[%s1 + $0x1b8] sm:$0xf]
      %v838 = vld [vmem:[%s1 + $0x1bc] sm:$0xf]
      %v839 = vld [vmem:[%s2] sm:$0x1]
      %v841 = vlaneseq
      %v842 = vshrl.u32 %v841, 7
      %v843 = vsub.s32 0, %v842
      %v844 = vrot.slane %v839, %v843
      %v974 = vunpack.c.l.b16 %v599
      %v975 = vunpack.c.h.b16 %v599
      %v976 = vunpack.c.l.b16 %v600
      %v977 = vunpack.c.h.b16 %v600
      %v978 = vunpack.c.l.b16 %v601
      %v979 = vunpack.c.h.b16 %v601
      %v980 = vunpack.c.l.b16 %v602
      %v981 = vunpack.c.l.b16 %v603
      %v982 = vunpack.c.h.b16 %v603
      %v983 = vunpack.c.l.b16 %v604
      %v984 = vunpack.c.h.b16 %v604
      %v985 = vunpack.c.l.b16 %v605
      %v986 = vunpack.c.h.b16 %v605
      %v987 = vunpack.c.l.b16 %v606
      %v988 = vunpack.c.l.b16 %v607
      %v989 = vunpack.c.h.b16 %v607
      %v990 = vunpack.c.l.b16 %v608
      %v991 = vunpack.c.h.b16 %v608
      %v992 = vunpack.c.l.b16 %v609
      %v993 = vunpack.c.h.b16 %v609
      %v994 = vunpack.c.l.b16 %v610
      %v995 = vunpack.c.l.b16 %v611
      %v996 = vunpack.c.h.b16 %v611
      %v997 = vunpack.c.l.b16 %v612
      %v998 = vunpack.c.h.b16 %v612
      %v999 = vunpack.c.l.b16 %v613
      %v1000 = vunpack.c.h.b16 %v613
      %v1001 = vunpack.c.l.b16 %v614
      %v1002 = vunpack.c.l.b16 %v615
      %v1003 = vunpack.c.h.b16 %v615
      %v1004 = vunpack.c.l.b16 %v616
      %v1005 = vunpack.c.h.b16 %v616
      %v1006 = vunpack.c.l.b16 %v617
      %v1007 = vunpack.c.h.b16 %v617
      %v1008 = vunpack.c.l.b16 %v618
      %v1009 = vunpack.c.l.b16 %v619
      %v1010 = vunpack.c.h.b16 %v619
      %v1011 = vunpack.c.l.b16 %v620
      %v1012 = vunpack.c.h.b16 %v620
      %v1013 = vunpack.c.l.b16 %v621
      %v1014 = vunpack.c.h.b16 %v621
      %v1015 = vunpack.c.l.b16 %v622
      %v1016 = vunpack.c.l.b16 %v623
      %v1017 = vunpack.c.h.b16 %v623
      %v1018 = vunpack.c.l.b16 %v624
      %v1019 = vunpack.c.h.b16 %v624
      %v1020 = vunpack.c.l.b16 %v625
      %v1021 = vunpack.c.h.b16 %v625
      %v1022 = vunpack.c.l.b16 %v626
      %v1023 = vunpack.c.l.b16 %v627
      %v1024 = vunpack.c.h.b16 %v627
      %v1025 = vunpack.c.l.b16 %v628
      %v1026 = vunpack.c.h.b16 %v628
      %v1027 = vunpack.c.l.b16 %v629
      %v1028 = vunpack.c.h.b16 %v629
      %v1029 = vunpack.c.l.b16 %v630
      %v1030 = vunpack.c.l.b16 %v631
      %v1031 = vunpack.c.h.b16 %v631
      %v1032 = vunpack.c.l.b16 %v632
      %v1033 = vunpack.c.h.b16 %v632
      %v1034 = vunpack.c.l.b16 %v633
      %v1035 = vunpack.c.h.b16 %v633
      %v1036 = vunpack.c.l.b16 %v634
      %v1037 = vunpack.c.l.b16 %v635
      %v1038 = vunpack.c.h.b16 %v635
      %v1039 = vunpack.c.l.b16 %v636
      %v1040 = vunpack.c.h.b16 %v636
      %v1041 = vunpack.c.l.b16 %v637
      %v1042 = vunpack.c.h.b16 %v637
      %v1043 = vunpack.c.l.b16 %v638
      %v1044 = vunpack.c.l.b16 %v639
      %v1045 = vunpack.c.h.b16 %v639
      %v1046 = vunpack.c.l.b16 %v640
      %v1047 = vunpack.c.h.b16 %v640
      %v1048 = vunpack.c.l.b16 %v641
      %v1049 = vunpack.c.h.b16 %v641
      %v1050 = vunpack.c.l.b16 %v642
      %v1051 = vunpack.c.l.b16 %v643
      %v1052 = vunpack.c.h.b16 %v643
      %v1053 = vunpack.c.l.b16 %v644
      %v1054 = vunpack.c.h.b16 %v644
      %v1055 = vunpack.c.l.b16 %v645
      %v1056 = vunpack.c.h.b16 %v645
      %v1057 = vunpack.c.l.b16 %v646
      %v1058 = vunpack.c.l.b16 %v647
      %v1059 = vunpack.c.h.b16 %v647
      %v1060 = vunpack.c.l.b16 %v648
      %v1061 = vunpack.c.h.b16 %v648
      %v1062 = vunpack.c.l.b16 %v649
      %v1063 = vunpack.c.h.b16 %v649
      %v1064 = vunpack.c.l.b16 %v650
      %v1065 = vunpack.c.l.b16 %v651
      %v1066 = vunpack.c.h.b16 %v651
      %v1067 = vunpack.c.l.b16 %v652
      %v1068 = vunpack.c.h.b16 %v652
      %v1069 = vunpack.c.l.b16 %v653
      %v1070 = vunpack.c.h.b16 %v653
      %v1071 = vunpack.c.l.b16 %v654
      %v1072 = vunpack.c.l.b16 %v655
      %v1073 = vunpack.c.h.b16 %v655
      %v1074 = vunpack.c.l.b16 %v656
      %v1075 = vunpack.c.h.b16 %v656
      %v1076 = vunpack.c.l.b16 %v657
      %v1077 = vunpack.c.h.b16 %v657
      %v1078 = vunpack.c.l.b16 %v658
      %v1079 = vunpack.c.l.b16 %v659
      %v1080 = vunpack.c.h.b16 %v659
      %v1081 = vunpack.c.l.b16 %v660
      %v1082 = vunpack.c.h.b16 %v660
      %v1083 = vunpack.c.l.b16 %v661
      %v1084 = vunpack.c.h.b16 %v661
      %v1085 = vunpack.c.l.b16 %v662
      %v1086 = vunpack.c.l.b16 %v663
      %v1087 = vunpack.c.h.b16 %v663
      %v1088 = vunpack.c.l.b16 %v664
      %v1089 = vunpack.c.h.b16 %v664
      %v1090 = vunpack.c.l.b16 %v665
      %v1091 = vunpack.c.h.b16 %v665
      %v1092 = vunpack.c.l.b16 %v666
      %v1093 = vunpack.c.l.b16 %v667
      %v1094 = vunpack.c.h.b16 %v667
      %v1095 = vunpack.c.l.b16 %v668
      %v1096 = vunpack.c.h.b16 %v668
      %v1097 = vunpack.c.l.b16 %v669
      %v1098 = vunpack.c.h.b16 %v669
      %v1099 = vunpack.c.l.b16 %v670
      %v1100 = vunpack.c.l.b16 %v671
      %v1101 = vunpack.c.h.b16 %v671
      %v1102 = vunpack.c.l.b16 %v672
      %v1103 = vunpack.c.h.b16 %v672
      %v1104 = vunpack.c.l.b16 %v673
      %v1105 = vunpack.c.h.b16 %v673
      %v1106 = vunpack.c.l.b16 %v674
      %v1107 = vunpack.c.l.b16 %v675
      %v1108 = vunpack.c.h.b16 %v675
      %v1109 = vunpack.c.l.b16 %v676
      %v1110 = vunpack.c.h.b16 %v676
      %v1111 = vunpack.c.l.b16 %v677
      %v1112 = vunpack.c.h.b16 %v677
      %v1113 = vunpack.c.l.b16 %v678
      %v1114 = vunpack.c.l.b16 %v679
      %v1115 = vunpack.c.h.b16 %v679
      %v1116 = vunpack.c.l.b16 %v680
      %v1117 = vunpack.c.h.b16 %v680
      %v1118 = vunpack.c.l.b16 %v681
      %v1119 = vunpack.c.h.b16 %v681
      %v1120 = vunpack.c.l.b16 %v682
      %v1121 = vunpack.c.l.b16 %v683
      %v1122 = vunpack.c.h.b16 %v683
      %v1123 = vunpack.c.l.b16 %v684
      %v1124 = vunpack.c.h.b16 %v684
      %v1125 = vunpack.c.l.b16 %v685
      %v1126 = vunpack.c.h.b16 %v685
      %v1127 = vunpack.c.l.b16 %v686
      %v1128 = vunpack.c.l.b16 %v687
      %v1129 = vunpack.c.h.b16 %v687
      %v1130 = vunpack.c.l.b16 %v688
      %v1131 = vunpack.c.h.b16 %v688
      %v1132 = vunpack.c.l.b16 %v689
      %v1133 = vunpack.c.h.b16 %v689
      %v1134 = vunpack.c.l.b16 %v690
      %v1135 = vunpack.c.l.b16 %v691
      %v1136 = vunpack.c.h.b16 %v691
      %v1137 = vunpack.c.l.b16 %v692
      %v1138 = vunpack.c.h.b16 %v692
      %v1139 = vunpack.c.l.b16 %v693
      %v1140 = vunpack.c.h.b16 %v693
      %v1141 = vunpack.c.l.b16 %v694
      %v1142 = vunpack.c.l.b16 %v695
      %v1143 = vunpack.c.h.b16 %v695
      %v1144 = vunpack.c.l.b16 %v696
      %v1145 = vunpack.c.h.b16 %v696
      %v1146 = vunpack.c.l.b16 %v697
      %v1147 = vunpack.c.h.b16 %v697
      %v1148 = vunpack.c.l.b16 %v698
      %v1149 = vunpack.c.l.b16 %v699
      %v1150 = vunpack.c.h.b16 %v699
      %v1151 = vunpack.c.l.b16 %v700
      %v1152 = vunpack.c.h.b16 %v700
      %v1153 = vunpack.c.l.b16 %v701
      %v1154 = vunpack.c.h.b16 %v701
      %v1155 = vunpack.c.l.b16 %v702
      %v1156 = vunpack.c.l.b16 %v703
      %v1157 = vunpack.c.h.b16 %v703
      %v1158 = vunpack.c.l.b16 %v704
      %v1159 = vunpack.c.h.b16 %v704
      %v1160 = vunpack.c.l.b16 %v705
      %v1161 = vunpack.c.h.b16 %v705
      %v1162 = vunpack.c.l.b16 %v706
      %v1163 = vunpack.c.l.b16 %v707
      %v1164 = vunpack.c.h.b16 %v707
      %v1165 = vunpack.c.l.b16 %v708
      %v1166 = vunpack.c.h.b16 %v708
      %v1167 = vunpack.c.l.b16 %v709
      %v1168 = vunpack.c.h.b16 %v709
      %v1169 = vunpack.c.l.b16 %v710
      %v1170 = vunpack.c.l.b16 %v711
      %v1171 = vunpack.c.h.b16 %v711
      %v1172 = vunpack.c.l.b16 %v712
      %v1173 = vunpack.c.h.b16 %v712
      %v1174 = vunpack.c.l.b16 %v713
      %v1175 = vunpack.c.h.b16 %v713
      %v1176 = vunpack.c.l.b16 %v714
      %v1177 = vunpack.c.l.b16 %v715
      %v1178 = vunpack.c.h.b16 %v715
      %v1179 = vunpack.c.l.b16 %v716
      %v1180 = vunpack.c.h.b16 %v716
      %v1181 = vunpack.c.l.b16 %v717
      %v1182 = vunpack.c.h.b16 %v717
      %v1183 = vunpack.c.l.b16 %v718
      %v1184 = vunpack.c.l.b16 %v719
      %v1185 = vunpack.c.h.b16 %v719
      %v1186 = vunpack.c.l.b16 %v720
      %v1187 = vunpack.c.h.b16 %v720
      %v1188 = vunpack.c.l.b16 %v721
      %v1189 = vunpack.c.h.b16 %v721
      %v1190 = vunpack.c.l.b16 %v722
      %v1191 = vunpack.c.l.b16 %v723
      %v1192 = vunpack.c.h.b16 %v723
      %v1193 = vunpack.c.l.b16 %v724
      %v1194 = vunpack.c.h.b16 %v724
      %v1195 = vunpack.c.l.b16 %v725
      %v1196 = vunpack.c.h.b16 %v725
      %v1197 = vunpack.c.l.b16 %v726
      %v1198 = vpack.c.b16 %v981, %v974
      %v1199 = vpack.c.b16 %v982, %v975
      %v1200 = vpack.c.b16 %v983, %v976
      %v1201 = vpack.c.b16 %v984, %v977
      %v1202 = vpack.c.b16 %v985, %v978
      %v1203 = vpack.c.b16 %v986, %v979
      %v1204 = vpack.c.b16 %v987, %v980
      %v1205 = vpack.c.b16 %v995, %v988
      %v1206 = vpack.c.b16 %v996, %v989
      %v1207 = vpack.c.b16 %v997, %v990
      %v1208 = vpack.c.b16 %v998, %v991
      %v1209 = vpack.c.b16 %v999, %v992
      %v1210 = vpack.c.b16 %v1000, %v993
      %v1211 = vpack.c.b16 %v1001, %v994
      %v1212 = vpack.c.b16 %v1009, %v1002
      %v1213 = vpack.c.b16 %v1010, %v1003
      %v1214 = vpack.c.b16 %v1011, %v1004
      %v1215 = vpack.c.b16 %v1012, %v1005
      %v1216 = vpack.c.b16 %v1013, %v1006
      %v1217 = vpack.c.b16 %v1014, %v1007
      %v1218 = vpack.c.b16 %v1015, %v1008
      %v1219 = vpack.c.b16 %v1023, %v1016
      %v1220 = vpack.c.b16 %v1024, %v1017
      %v1221 = vpack.c.b16 %v1025, %v1018
      %v1222 = vpack.c.b16 %v1026, %v1019
      %v1223 = vpack.c.b16 %v1027, %v1020
      %v1224 = vpack.c.b16 %v1028, %v1021
      %v1225 = vpack.c.b16 %v1029, %v1022
      %v1226 = vpack.c.b16 %v1037, %v1030
      %v1227 = vpack.c.b16 %v1038, %v1031
      %v1228 = vpack.c.b16 %v1039, %v1032
      %v1229 = vpack.c.b16 %v1040, %v1033
      %v1230 = vpack.c.b16 %v1041, %v1034
      %v1231 = vpack.c.b16 %v1042, %v1035
      %v1232 = vpack.c.b16 %v1043, %v1036
      %v1233 = vpack.c.b16 %v1051, %v1044
      %v1234 = vpack.c.b16 %v1052, %v1045
      %v1235 = vpack.c.b16 %v1053, %v1046
      %v1236 = vpack.c.b16 %v1054, %v1047
      %v1237 = vpack.c.b16 %v1055, %v1048
      %v1238 = vpack.c.b16 %v1056, %v1049
      %v1239 = vpack.c.b16 %v1057, %v1050
      %v1240 = vpack.c.b16 %v1065, %v1058
      %v1241 = vpack.c.b16 %v1066, %v1059
      %v1242 = vpack.c.b16 %v1067, %v1060
      %v1243 = vpack.c.b16 %v1068, %v1061
      %v1244 = vpack.c.b16 %v1069, %v1062
      %v1245 = vpack.c.b16 %v1070, %v1063
      %v1246 = vpack.c.b16 %v1071, %v1064
      %v1247 = vpack.c.b16 %v1079, %v1072
      %v1248 = vpack.c.b16 %v1080, %v1073
      %v1249 = vpack.c.b16 %v1081, %v1074
      %v1250 = vpack.c.b16 %v1082, %v1075
      %v1251 = vpack.c.b16 %v1083, %v1076
      %v1252 = vpack.c.b16 %v1084, %v1077
      %v1253 = vpack.c.b16 %v1085, %v1078
      %v1254 = vpack.c.b16 %v1093, %v1086
      %v1255 = vpack.c.b16 %v1094, %v1087
      %v1256 = vpack.c.b16 %v1095, %v1088
      %v1257 = vpack.c.b16 %v1096, %v1089
      %v1258 = vpack.c.b16 %v1097, %v1090
      %v1259 = vpack.c.b16 %v1098, %v1091
      %v1260 = vpack.c.b16 %v1099, %v1092
      %v1261 = vpack.c.b16 %v1107, %v1100
      %v1262 = vpack.c.b16 %v1108, %v1101
      %v1263 = vpack.c.b16 %v1109, %v1102
      %v1264 = vpack.c.b16 %v1110, %v1103
      %v1265 = vpack.c.b16 %v1111, %v1104
      %v1266 = vpack.c.b16 %v1112, %v1105
      %v1267 = vpack.c.b16 %v1113, %v1106
      %v1268 = vpack.c.b16 %v1121, %v1114
      %v1269 = vpack.c.b16 %v1122, %v1115
      %v1270 = vpack.c.b16 %v1123, %v1116
      %v1271 = vpack.c.b16 %v1124, %v1117
      %v1272 = vpack.c.b16 %v1125, %v1118
      %v1273 = vpack.c.b16 %v1126, %v1119
      %v1274 = vpack.c.b16 %v1127, %v1120
      %v1275 = vpack.c.b16 %v1135, %v1128
      %v1276 = vpack.c.b16 %v1136, %v1129
      %v1277 = vpack.c.b16 %v1137, %v1130
      %v1278 = vpack.c.b16 %v1138, %v1131
      %v1279 = vpack.c.b16 %v1139, %v1132
      %v1280 = vpack.c.b16 %v1140, %v1133
      %v1281 = vpack.c.b16 %v1141, %v1134
      %v1282 = vpack.c.b16 %v1149, %v1142
      %v1283 = vpack.c.b16 %v1150, %v1143
      %v1284 = vpack.c.b16 %v1151, %v1144
      %v1285 = vpack.c.b16 %v1152, %v1145
      %v1286 = vpack.c.b16 %v1153, %v1146
      %v1287 = vpack.c.b16 %v1154, %v1147
      %v1288 = vpack.c.b16 %v1155, %v1148
      %v1289 = vpack.c.b16 %v1163, %v1156
      %v1290 = vpack.c.b16 %v1164, %v1157
      %v1291 = vpack.c.b16 %v1165, %v1158
      %v1292 = vpack.c.b16 %v1166, %v1159
      %v1293 = vpack.c.b16 %v1167, %v1160
      %v1294 = vpack.c.b16 %v1168, %v1161
      %v1295 = vpack.c.b16 %v1169, %v1162
      %v1296 = vpack.c.b16 %v1177, %v1170
      %v1297 = vpack.c.b16 %v1178, %v1171
      %v1298 = vpack.c.b16 %v1179, %v1172
      %v1299 = vpack.c.b16 %v1180, %v1173
      %v1300 = vpack.c.b16 %v1181, %v1174
      %v1301 = vpack.c.b16 %v1182, %v1175
      %v1302 = vpack.c.b16 %v1183, %v1176
      %v1303 = vpack.c.b16 %v1191, %v1184
      %v1304 = vpack.c.b16 %v1192, %v1185
      %v1305 = vpack.c.b16 %v1193, %v1186
      %v1306 = vpack.c.b16 %v1194, %v1187
      %v1307 = vpack.c.b16 %v1195, %v1188
      %v1308 = vpack.c.b16 %v1196, %v1189
      %v1309 = vpack.c.b16 %v1197, %v1190
      %v1534 = vunpack.c.l.b16 %v727
      %v1535 = vunpack.c.l.b16 %v728
      %v1536 = vunpack.c.l.b16 %v729
      %v1537 = vunpack.c.l.b16 %v730
      %v1538 = vunpack.c.l.b16 %v731
      %v1539 = vunpack.c.l.b16 %v732
      %v1540 = vunpack.c.l.b16 %v733
      %v1541 = vunpack.c.l.b16 %v734
      %v1542 = vunpack.c.l.b16 %v735
      %v1543 = vunpack.c.l.b16 %v736
      %v1544 = vunpack.c.l.b16 %v737
      %v1545 = vunpack.c.l.b16 %v738
      %v1546 = vunpack.c.l.b16 %v739
      %v1547 = vunpack.c.l.b16 %v740
      %v1548 = vunpack.c.l.b16 %v741
      %v1549 = vunpack.c.l.b16 %v742
      %v1550 = vunpack.c.l.b16 %v743
      %v1551 = vunpack.c.l.b16 %v744
      %v1552 = vunpack.c.l.b16 %v745
      %v1553 = vunpack.c.l.b16 %v746
      %v1554 = vunpack.c.l.b16 %v747
      %v1555 = vunpack.c.l.b16 %v748
      %v1556 = vunpack.c.l.b16 %v749
      %v1557 = vunpack.c.l.b16 %v750
      %v1558 = vunpack.c.l.b16 %v751
      %v1559 = vunpack.c.l.b16 %v752
      %v1560 = vunpack.c.l.b16 %v753
      %v1561 = vunpack.c.l.b16 %v754
      %v1562 = vunpack.c.l.b16 %v755
      %v1563 = vunpack.c.l.b16 %v756
      %v1564 = vunpack.c.l.b16 %v757
      %v1565 = vunpack.c.l.b16 %v758
      %v1566 = vunpack.c.l.b16 %v759
      %v1567 = vunpack.c.l.b16 %v760
      %v1568 = vunpack.c.l.b16 %v761
      %v1569 = vunpack.c.l.b16 %v762
      %v1570 = vunpack.c.l.b16 %v763
      %v1571 = vunpack.c.l.b16 %v764
      %v1572 = vunpack.c.l.b16 %v765
      %v1573 = vunpack.c.l.b16 %v766
      %v1574 = vunpack.c.l.b16 %v767
      %v1575 = vunpack.c.l.b16 %v768
      %v1576 = vunpack.c.l.b16 %v769
      %v1577 = vunpack.c.l.b16 %v770
      %v1578 = vunpack.c.l.b16 %v771
      %v1579 = vunpack.c.l.b16 %v772
      %v1580 = vunpack.c.l.b16 %v773
      %v1581 = vunpack.c.l.b16 %v774
      %v1582 = vunpack.c.l.b16 %v775
      %v1583 = vunpack.c.l.b16 %v776
      %v1584 = vunpack.c.l.b16 %v777
      %v1585 = vunpack.c.l.b16 %v778
      %v1586 = vunpack.c.l.b16 %v779
      %v1587 = vunpack.c.l.b16 %v780
      %v1588 = vunpack.c.l.b16 %v781
      %v1589 = vunpack.c.l.b16 %v782
      %v1590 = vunpack.c.l.b16 %v783
      %v1591 = vunpack.c.l.b16 %v784
      %v1592 = vunpack.c.l.b16 %v785
      %v1593 = vunpack.c.l.b16 %v786
      %v1594 = vunpack.c.l.b16 %v787
      %v1595 = vunpack.c.l.b16 %v788
      %v1596 = vunpack.c.l.b16 %v789
      %v1597 = vunpack.c.l.b16 %v790
      %v1598 = vunpack.c.l.b16 %v791
      %v1599 = vunpack.c.l.b16 %v792
      %v1600 = vunpack.c.l.b16 %v793
      %v1601 = vunpack.c.l.b16 %v794
      %v1602 = vunpack.c.l.b16 %v795
      %v1603 = vunpack.c.l.b16 %v796
      %v1604 = vunpack.c.l.b16 %v797
      %v1605 = vunpack.c.l.b16 %v798
      %v1606 = vunpack.c.l.b16 %v799
      %v1607 = vunpack.c.l.b16 %v800
      %v1608 = vunpack.c.l.b16 %v801
      %v1609 = vunpack.c.l.b16 %v802
      %v1610 = vunpack.c.l.b16 %v803
      %v1611 = vunpack.c.l.b16 %v804
      %v1612 = vunpack.c.l.b16 %v805
      %v1613 = vunpack.c.l.b16 %v806
      %v1614 = vunpack.c.l.b16 %v807
      %v1615 = vunpack.c.l.b16 %v808
      %v1616 = vunpack.c.l.b16 %v809
      %v1617 = vunpack.c.l.b16 %v810
      %v1618 = vunpack.c.l.b16 %v811
      %v1619 = vunpack.c.l.b16 %v812
      %v1620 = vunpack.c.l.b16 %v813
      %v1621 = vunpack.c.l.b16 %v814
      %v1622 = vunpack.c.l.b16 %v815
      %v1623 = vunpack.c.l.b16 %v816
      %v1624 = vunpack.c.l.b16 %v817
      %v1625 = vunpack.c.l.b16 %v818
      %v1626 = vunpack.c.l.b16 %v819
      %v1627 = vunpack.c.l.b16 %v820
      %v1628 = vunpack.c.l.b16 %v821
      %v1629 = vunpack.c.l.b16 %v822
      %v1630 = vunpack.c.l.b16 %v823
      %v1631 = vunpack.c.l.b16 %v824
      %v1632 = vunpack.c.l.b16 %v825
      %v1633 = vunpack.c.l.b16 %v826
      %v1634 = vunpack.c.l.b16 %v827
      %v1635 = vunpack.c.l.b16 %v828
      %v1636 = vunpack.c.l.b16 %v829
      %v1637 = vunpack.c.l.b16 %v830
      %v1638 = vunpack.c.l.b16 %v831
      %v1639 = vunpack.c.l.b16 %v832
      %v1640 = vunpack.c.l.b16 %v833
      %v1641 = vunpack.c.l.b16 %v834
      %v1642 = vunpack.c.l.b16 %v835
      %v1643 = vunpack.c.l.b16 %v836
      %v1644 = vunpack.c.l.b16 %v837
      %v1645 = vunpack.c.l.b16 %v838
      %v1646 = vpack.c.b16 %v1535, %v1534
      %v1647 = vpack.c.b16 %v1537, %v1536
      %v1648 = vpack.c.b16 %v1539, %v1538
      %v1649 = vpack.c.b16 %v1541, %v1540
      %v1650 = vpack.c.b16 %v1543, %v1542
      %v1651 = vpack.c.b16 %v1545, %v1544
      %v1652 = vpack.c.b16 %v1547, %v1546
      %v1653 = vpack.c.b16 %v1549, %v1548
      %v1654 = vpack.c.b16 %v1551, %v1550
      %v1655 = vpack.c.b16 %v1553, %v1552
      %v1656 = vpack.c.b16 %v1555, %v1554
      %v1657 = vpack.c.b16 %v1557, %v1556
      %v1658 = vpack.c.b16 %v1559, %v1558
      %v1659 = vpack.c.b16 %v1561, %v1560
      %v1660 = vpack.c.b16 %v1563, %v1562
      %v1661 = vpack.c.b16 %v1565, %v1564
      %v1662 = vpack.c.b16 %v1567, %v1566
      %v1663 = vpack.c.b16 %v1569, %v1568
      %v1664 = vpack.c.b16 %v1571, %v1570
      %v1665 = vpack.c.b16 %v1573, %v1572
      %v1666 = vpack.c.b16 %v1575, %v1574
      %v1667 = vpack.c.b16 %v1577, %v1576
      %v1668 = vpack.c.b16 %v1579, %v1578
      %v1669 = vpack.c.b16 %v1581, %v1580
      %v1670 = vpack.c.b16 %v1583, %v1582
      %v1671 = vpack.c.b16 %v1585, %v1584
      %v1672 = vpack.c.b16 %v1587, %v1586
      %v1673 = vpack.c.b16 %v1589, %v1588
      %v1674 = vpack.c.b16 %v1591, %v1590
      %v1675 = vpack.c.b16 %v1593, %v1592
      %v1676 = vpack.c.b16 %v1595, %v1594
      %v1677 = vpack.c.b16 %v1597, %v1596
      %v1678 = vpack.c.b16 %v1599, %v1598
      %v1679 = vpack.c.b16 %v1601, %v1600
      %v1680 = vpack.c.b16 %v1603, %v1602
      %v1681 = vpack.c.b16 %v1605, %v1604
      %v1682 = vpack.c.b16 %v1607, %v1606
      %v1683 = vpack.c.b16 %v1609, %v1608
      %v1684 = vpack.c.b16 %v1611, %v1610
      %v1685 = vpack.c.b16 %v1613, %v1612
      %v1686 = vpack.c.b16 %v1615, %v1614
      %v1687 = vpack.c.b16 %v1617, %v1616
      %v1688 = vpack.c.b16 %v1619, %v1618
      %v1689 = vpack.c.b16 %v1621, %v1620
      %v1690 = vpack.c.b16 %v1623, %v1622
      %v1691 = vpack.c.b16 %v1625, %v1624
      %v1692 = vpack.c.b16 %v1627, %v1626
      %v1693 = vpack.c.b16 %v1629, %v1628
      %v1694 = vpack.c.b16 %v1631, %v1630
      %v1695 = vpack.c.b16 %v1633, %v1632
      %v1696 = vpack.c.b16 %v1635, %v1634
      %v1697 = vpack.c.b16 %v1637, %v1636
      %v1698 = vpack.c.b16 %v1639, %v1638
      %v1699 = vpack.c.b16 %v1641, %v1640
      %v1700 = vpack.c.b16 %v1643, %v1642
      %v1701 = vpack.c.b16 %v1645, %v1644
      %1758 = vmatprep.subr.bf16.mxu0 0
      %1759 = vmatpush1.bf16.msra.mxu0 %v1653
      %1760 = vmatprep.subr.bf16.mxu0 0
      %1761 = vmatpush1.bf16.msra.mxu0 %v1652
      %1762 = vmatprep.subr.bf16.mxu0 0
      %1763 = vmatpush1.bf16.msra.mxu0 %v1651
      %1764 = vmatprep.subr.bf16.mxu0 0
      %1765 = vmatpush1.bf16.msra.mxu0 %v1650
      %1766 = vmatprep.subr.bf16.mxu0 0
      %1767 = vmatpush1.bf16.msra.mxu0 %v1649
      %1768 = vmatprep.subr.bf16.mxu0 0
      %1769 = vmatpush1.bf16.msra.mxu0 %v1648
      %1770 = vmatprep.subr.bf16.mxu0 0
      %1771 = vmatpush1.bf16.msra.mxu0 %v1647
      %1772 = vmatprep.subr.bf16.mxu0 0
      %1773 = vmatpush1.bf16.msra.mxu0 %v1646
      %1774 = vmatprep.subr.bf16.mxu0 0
      %1775 = vmatpush2.bf16.msra.mxu0 %v1661
      %1776 = vmatprep.subr.bf16.mxu0 0
      %1777 = vmatpush2.bf16.msra.mxu0 %v1660
      %1778 = vmatprep.subr.bf16.mxu0 0
      %1779 = vmatpush2.bf16.msra.mxu0 %v1659
      %1780 = vmatprep.subr.bf16.mxu0 0
      %1781 = vmatpush2.bf16.msra.mxu0 %v1658
      %1782 = vmatprep.subr.bf16.mxu0 0
      %1783 = vmatpush2.bf16.msra.mxu0 %v1657
      %1784 = vmatprep.subr.bf16.mxu0 0
      %1785 = vmatpush2.bf16.msra.mxu0 %v1656
      %1786 = vmatprep.subr.bf16.mxu0 0
      %1787 = vmatpush2.bf16.msra.mxu0 %v1655
      %1788 = vmatprep.subr.bf16.mxu0 0
      %1789 = vmatpush2.bf16.msra.mxu0 %v1654
      %1790 = vmatprep.mubr.bf16.mxu0 %v1199
      %1791 = vmatmul.mubr.bf16.gmra.mxu0 %v1198
      %v1792 = vpop.f32.mrf.mxu0
      %v1793 = vadd.f32 %v844, %v1792
      %v1794 = vpop.f32.mrf.mxu0
      %v1795 = vpop.f32.mrf.mxu0
      %v1796 = vadd.f32 %v844, %v1795
      %v1797 = vpop.f32.mrf.mxu0
      %1798 = vmatprep.mubr.bf16.mxu0 %v1206
      %1799 = vmatmul.mubr.bf16.gmra.mxu0 %v1205
      %v1800 = vpop.f32.mrf.mxu0
      %v1801 = vadd.f32 %v844, %v1800
      %v1802 = vpop.f32.mrf.mxu0
      %v1803 = vpop.f32.mrf.mxu0
      %v1804 = vadd.f32 %v844, %v1803
      %v1805 = vpop.f32.mrf.mxu0
      %1806 = vmatprep.mubr.bf16.mxu0 %v1213
      %1807 = vmatmul.mubr.bf16.gmra.mxu0 %v1212
      %v1808 = vpop.f32.mrf.mxu0
      %v1809 = vadd.f32 %v844, %v1808
      %v1810 = vpop.f32.mrf.mxu0
      %v1811 = vpop.f32.mrf.mxu0
      %v1812 = vadd.f32 %v844, %v1811
      %v1813 = vpop.f32.mrf.mxu0
      %1814 = vmatprep.mubr.bf16.mxu0 %v1220
      %1815 = vmatmul.mubr.bf16.gmra.mxu0 %v1219
      %v1816 = vpop.f32.mrf.mxu0
      %v1817 = vadd.f32 %v844, %v1816
      %v1818 = vpop.f32.mrf.mxu0
      %v1819 = vpop.f32.mrf.mxu0
      %v1820 = vadd.f32 %v844, %v1819
      %v1821 = vpop.f32.mrf.mxu0
      %1822 = vmatprep.mubr.bf16.mxu0 %v1227
      %1823 = vmatmul.mubr.bf16.gmra.mxu0 %v1226
      %v1824 = vpop.f32.mrf.mxu0
      %v1825 = vadd.f32 %v844, %v1824
      %v1826 = vpop.f32.mrf.mxu0
      %v1827 = vpop.f32.mrf.mxu0
      %v1828 = vadd.f32 %v844, %v1827
      %v1829 = vpop.f32.mrf.mxu0
      %1830 = vmatprep.mubr.bf16.mxu0 %v1234
      %1831 = vmatmul.mubr.bf16.gmra.mxu0 %v1233
      %v1832 = vpop.f32.mrf.mxu0
      %v1833 = vadd.f32 %v844, %v1832
      %v1834 = vpop.f32.mrf.mxu0
      %v1835 = vpop.f32.mrf.mxu0
      %v1836 = vadd.f32 %v844, %v1835
      %v1837 = vpop.f32.mrf.mxu0
      %1838 = vmatprep.mubr.bf16.mxu0 %v1241
      %1839 = vmatmul.mubr.bf16.gmra.mxu0 %v1240
      %v1840 = vpop.f32.mrf.mxu0
      %v1841 = vadd.f32 %v844, %v1840
      %v1842 = vpop.f32.mrf.mxu0
      %v1843 = vpop.f32.mrf.mxu0
      %v1844 = vadd.f32 %v844, %v1843
      %v1845 = vpop.f32.mrf.mxu0
      %1846 = vmatprep.mubr.bf16.mxu0 %v1248
      %1847 = vmatmul.mubr.bf16.gmra.mxu0 %v1247
      %v1848 = vpop.f32.mrf.mxu0
      %v1849 = vadd.f32 %v844, %v1848
      %v1850 = vpop.f32.mrf.mxu0
      %v1851 = vpop.f32.mrf.mxu0
      %v1852 = vadd.f32 %v844, %v1851
      %v1853 = vpop.f32.mrf.mxu0
      %1854 = vmatprep.mubr.bf16.mxu0 %v1255
      %1855 = vmatmul.mubr.bf16.gmra.mxu0 %v1254
      %v1856 = vpop.f32.mrf.mxu0
      %v1857 = vadd.f32 %v844, %v1856
      %v1858 = vpop.f32.mrf.mxu0
      %v1859 = vpop.f32.mrf.mxu0
      %v1860 = vadd.f32 %v844, %v1859
      %v1861 = vpop.f32.mrf.mxu0
      %1862 = vmatprep.mubr.bf16.mxu0 %v1262
      %1863 = vmatmul.mubr.bf16.gmra.mxu0 %v1261
      %v1864 = vpop.f32.mrf.mxu0
      %v1865 = vadd.f32 %v844, %v1864
      %v1866 = vpop.f32.mrf.mxu0
      %v1867 = vpop.f32.mrf.mxu0
      %v1868 = vadd.f32 %v844, %v1867
      %v1869 = vpop.f32.mrf.mxu0
      %1870 = vmatprep.mubr.bf16.mxu0 %v1269
      %1871 = vmatmul.mubr.bf16.gmra.mxu0 %v1268
      %v1872 = vpop.f32.mrf.mxu0
      %v1873 = vadd.f32 %v844, %v1872
      %v1874 = vpop.f32.mrf.mxu0
      %v1875 = vpop.f32.mrf.mxu0
      %v1876 = vadd.f32 %v844, %v1875
      %v1877 = vpop.f32.mrf.mxu0
      %1878 = vmatprep.mubr.bf16.mxu0 %v1276
      %1879 = vmatmul.mubr.bf16.gmra.mxu0 %v1275
      %v1880 = vpop.f32.mrf.mxu0
      %v1881 = vadd.f32 %v844, %v1880
      %v1882 = vpop.f32.mrf.mxu0
      %v1883 = vpop.f32.mrf.mxu0
      %v1884 = vadd.f32 %v844, %v1883
      %v1885 = vpop.f32.mrf.mxu0
      %1886 = vmatprep.mubr.bf16.mxu0 %v1283
      %1887 = vmatmul.mubr.bf16.gmra.mxu0 %v1282
      %v1888 = vpop.f32.mrf.mxu0
      %v1889 = vadd.f32 %v844, %v1888
      %v1890 = vpop.f32.mrf.mxu0
      %v1891 = vpop.f32.mrf.mxu0
      %v1892 = vadd.f32 %v844, %v1891
      %v1893 = vpop.f32.mrf.mxu0
      %1894 = vmatprep.mubr.bf16.mxu0 %v1290
      %1895 = vmatmul.mubr.bf16.gmra.mxu0 %v1289
      %v1896 = vpop.f32.mrf.mxu0
      %v1897 = vadd.f32 %v844, %v1896
      %v1898 = vpop.f32.mrf.mxu0
      %v1899 = vpop.f32.mrf.mxu0
      %v1900 = vadd.f32 %v844, %v1899
      %v1901 = vpop.f32.mrf.mxu0
      %1902 = vmatprep.mubr.bf16.mxu0 %v1297
      %1903 = vmatmul.mubr.bf16.gmra.mxu0 %v1296
      %v1904 = vpop.f32.mrf.mxu0
      %v1905 = vadd.f32 %v844, %v1904
      %v1906 = vpop.f32.mrf.mxu0
      %v1907 = vpop.f32.mrf.mxu0
      %v1908 = vadd.f32 %v844, %v1907
      %v1909 = vpop.f32.mrf.mxu0
      %1910 = vmatprep.mubr.bf16.mxu0 %v1304
      %1911 = vmatmul.mubr.bf16.gmra.mxu0 %v1303
      %v1912 = vpop.f32.mrf.mxu0
      %v1913 = vadd.f32 %v844, %v1912
      %v1914 = vpop.f32.mrf.mxu0
      %v1915 = vpop.f32.mrf.mxu0
      %v1916 = vadd.f32 %v844, %v1915
      %v1917 = vpop.f32.mrf.mxu0
      %1918 = vdwg.mxu0
      %1919 = vmatprep.subr.bf16.mxu0 0
      %1920 = vmatpush1.bf16.msra.mxu0 %v1669
      %1921 = vmatprep.subr.bf16.mxu0 0
      %1922 = vmatpush1.bf16.msra.mxu0 %v1668
      %1923 = vmatprep.subr.bf16.mxu0 0
      %1924 = vmatpush1.bf16.msra.mxu0 %v1667
      %1925 = vmatprep.subr.bf16.mxu0 0
      %1926 = vmatpush1.bf16.msra.mxu0 %v1666
      %1927 = vmatprep.subr.bf16.mxu0 0
      %1928 = vmatpush1.bf16.msra.mxu0 %v1665
      %1929 = vmatprep.subr.bf16.mxu0 0
      %1930 = vmatpush1.bf16.msra.mxu0 %v1664
      %1931 = vmatprep.subr.bf16.mxu0 0
      %1932 = vmatpush1.bf16.msra.mxu0 %v1663
      %1933 = vmatprep.subr.bf16.mxu0 0
      %1934 = vmatpush1.bf16.msra.mxu0 %v1662
      %1935 = vmatprep.subr.bf16.mxu0 0
      %1936 = vmatpush2.bf16.msra.mxu0 %v1677
      %1937 = vmatprep.subr.bf16.mxu0 0
      %1938 = vmatpush2.bf16.msra.mxu0 %v1676
      %1939 = vmatprep.subr.bf16.mxu0 0
      %1940 = vmatpush2.bf16.msra.mxu0 %v1675
      %1941 = vmatprep.subr.bf16.mxu0 0
      %1942 = vmatpush2.bf16.msra.mxu0 %v1674
      %1943 = vmatprep.subr.bf16.mxu0 0
      %1944 = vmatpush2.bf16.msra.mxu0 %v1673
      %1945 = vmatprep.subr.bf16.mxu0 0
      %1946 = vmatpush2.bf16.msra.mxu0 %v1672
      %1947 = vmatprep.subr.bf16.mxu0 0
      %1948 = vmatpush2.bf16.msra.mxu0 %v1671
      %1949 = vmatprep.subr.bf16.mxu0 0
      %1950 = vmatpush2.bf16.msra.mxu0 %v1670
      %1951 = vmatprep.mubr.bf16.mxu0 %v1201
      %1952 = vmatmul.mubr.bf16.gmra.mxu0 %v1200
      %v1953 = vpop.f32.mrf.mxu0
      %v1954 = vadd.f32 %v1793, %v1953
      %v1955 = vpop.f32.mrf.mxu0
      %v1956 = vpop.f32.mrf.mxu0
      %v1957 = vadd.f32 %v1796, %v1956
      %v1958 = vpop.f32.mrf.mxu0
      %1959 = vmatprep.mubr.bf16.mxu0 %v1208
      %1960 = vmatmul.mubr.bf16.gmra.mxu0 %v1207
      %v1961 = vpop.f32.mrf.mxu0
      %v1962 = vadd.f32 %v1801, %v1961
      %v1963 = vpop.f32.mrf.mxu0
      %v1964 = vpop.f32.mrf.mxu0
      %v1965 = vadd.f32 %v1804, %v1964
      %v1966 = vpop.f32.mrf.mxu0
      %1967 = vmatprep.mubr.bf16.mxu0 %v1215
      %1968 = vmatmul.mubr.bf16.gmra.mxu0 %v1214
      %v1969 = vpop.f32.mrf.mxu0
      %v1970 = vadd.f32 %v1809, %v1969
      %v1971 = vpop.f32.mrf.mxu0
      %v1972 = vpop.f32.mrf.mxu0
      %v1973 = vadd.f32 %v1812, %v1972
      %v1974 = vpop.f32.mrf.mxu0
      %1975 = vmatprep.mubr.bf16.mxu0 %v1222
      %1976 = vmatmul.mubr.bf16.gmra.mxu0 %v1221
      %v1977 = vpop.f32.mrf.mxu0
      %v1978 = vadd.f32 %v1817, %v1977
      %v1979 = vpop.f32.mrf.mxu0
      %v1980 = vpop.f32.mrf.mxu0
      %v1981 = vadd.f32 %v1820, %v1980
      %v1982 = vpop.f32.mrf.mxu0
      %1983 = vmatprep.mubr.bf16.mxu0 %v1229
      %1984 = vmatmul.mubr.bf16.gmra.mxu0 %v1228
      %v1985 = vpop.f32.mrf.mxu0
      %v1986 = vadd.f32 %v1825, %v1985
      %v1987 = vpop.f32.mrf.mxu0
      %v1988 = vpop.f32.mrf.mxu0
      %v1989 = vadd.f32 %v1828, %v1988
      %v1990 = vpop.f32.mrf.mxu0
      %1991 = vmatprep.mubr.bf16.mxu0 %v1236
      %1992 = vmatmul.mubr.bf16.gmra.mxu0 %v1235
      %v1993 = vpop.f32.mrf.mxu0
      %v1994 = vadd.f32 %v1833, %v1993
      %v1995 = vpop.f32.mrf.mxu0
      %v1996 = vpop.f32.mrf.mxu0
      %v1997 = vadd.f32 %v1836, %v1996
      %v1998 = vpop.f32.mrf.mxu0
      %1999 = vmatprep.mubr.bf16.mxu0 %v1243
      %2000 = vmatmul.mubr.bf16.gmra.mxu0 %v1242
      %v2001 = vpop.f32.mrf.mxu0
      %v2002 = vadd.f32 %v1841, %v2001
      %v2003 = vpop.f32.mrf.mxu0
      %v2004 = vpop.f32.mrf.mxu0
      %v2005 = vadd.f32 %v1844, %v2004
      %v2006 = vpop.f32.mrf.mxu0
      %2007 = vmatprep.mubr.bf16.mxu0 %v1250
      %2008 = vmatmul.mubr.bf16.gmra.mxu0 %v1249
      %v2009 = vpop.f32.mrf.mxu0
      %v2010 = vadd.f32 %v1849, %v2009
      %v2011 = vpop.f32.mrf.mxu0
      %v2012 = vpop.f32.mrf.mxu0
      %v2013 = vadd.f32 %v1852, %v2012
      %v2014 = vpop.f32.mrf.mxu0
      %2015 = vmatprep.mubr.bf16.mxu0 %v1257
      %2016 = vmatmul.mubr.bf16.gmra.mxu0 %v1256
      %v2017 = vpop.f32.mrf.mxu0
      %v2018 = vadd.f32 %v1857, %v2017
      %v2019 = vpop.f32.mrf.mxu0
      %v2020 = vpop.f32.mrf.mxu0
      %v2021 = vadd.f32 %v1860, %v2020
      %v2022 = vpop.f32.mrf.mxu0
      %2023 = vmatprep.mubr.bf16.mxu0 %v1264
      %2024 = vmatmul.mubr.bf16.gmra.mxu0 %v1263
      %v2025 = vpop.f32.mrf.mxu0
      %v2026 = vadd.f32 %v1865, %v2025
      %v2027 = vpop.f32.mrf.mxu0
      %v2028 = vpop.f32.mrf.mxu0
      %v2029 = vadd.f32 %v1868, %v2028
      %v2030 = vpop.f32.mrf.mxu0
      %2031 = vmatprep.mubr.bf16.mxu0 %v1271
      %2032 = vmatmul.mubr.bf16.gmra.mxu0 %v1270
      %v2033 = vpop.f32.mrf.mxu0
      %v2034 = vadd.f32 %v1873, %v2033
      %v2035 = vpop.f32.mrf.mxu0
      %v2036 = vpop.f32.mrf.mxu0
      %v2037 = vadd.f32 %v1876, %v2036
      %v2038 = vpop.f32.mrf.mxu0
      %2039 = vmatprep.mubr.bf16.mxu0 %v1278
      %2040 = vmatmul.mubr.bf16.gmra.mxu0 %v1277
      %v2041 = vpop.f32.mrf.mxu0
      %v2042 = vadd.f32 %v1881, %v2041
      %v2043 = vpop.f32.mrf.mxu0
      %v2044 = vpop.f32.mrf.mxu0
      %v2045 = vadd.f32 %v1884, %v2044
      %v2046 = vpop.f32.mrf.mxu0
      %2047 = vmatprep.mubr.bf16.mxu0 %v1285
      %2048 = vmatmul.mubr.bf16.gmra.mxu0 %v1284
      %v2049 = vpop.f32.mrf.mxu0
      %v2050 = vadd.f32 %v1889, %v2049
      %v2051 = vpop.f32.mrf.mxu0
      %v2052 = vpop.f32.mrf.mxu0
      %v2053 = vadd.f32 %v1892, %v2052
      %v2054 = vpop.f32.mrf.mxu0
      %2055 = vmatprep.mubr.bf16.mxu0 %v1292
      %2056 = vmatmul.mubr.bf16.gmra.mxu0 %v1291
      %v2057 = vpop.f32.mrf.mxu0
      %v2058 = vadd.f32 %v1897, %v2057
      %v2059 = vpop.f32.mrf.mxu0
      %v2060 = vpop.f32.mrf.mxu0
      %v2061 = vadd.f32 %v1900, %v2060
      %v2062 = vpop.f32.mrf.mxu0
      %2063 = vmatprep.mubr.bf16.mxu0 %v1299
      %2064 = vmatmul.mubr.bf16.gmra.mxu0 %v1298
      %v2065 = vpop.f32.mrf.mxu0
      %v2066 = vadd.f32 %v1905, %v2065
      %v2067 = vpop.f32.mrf.mxu0
      %v2068 = vpop.f32.mrf.mxu0
      %v2069 = vadd.f32 %v1908, %v2068
      %v2070 = vpop.f32.mrf.mxu0
      %2071 = vmatprep.mubr.bf16.mxu0 %v1306
      %2072 = vmatmul.mubr.bf16.gmra.mxu0 %v1305
      %v2073 = vpop.f32.mrf.mxu0
      %v2074 = vadd.f32 %v1913, %v2073
      %v2075 = vpop.f32.mrf.mxu0
      %v2076 = vpop.f32.mrf.mxu0
      %v2077 = vadd.f32 %v1916, %v2076
      %v2078 = vpop.f32.mrf.mxu0
      %2079 = vdwg.mxu0
      %2080 = vmatprep.subr.bf16.mxu0 0
      %2081 = vmatpush1.bf16.msra.mxu0 %v1685
      %2082 = vmatprep.subr.bf16.mxu0 0
      %2083 = vmatpush1.bf16.msra.mxu0 %v1684
      %2084 = vmatprep.subr.bf16.mxu0 0
      %2085 = vmatpush1.bf16.msra.mxu0 %v1683
      %2086 = vmatprep.subr.bf16.mxu0 0
      %2087 = vmatpush1.bf16.msra.mxu0 %v1682
      %2088 = vmatprep.subr.bf16.mxu0 0
      %2089 = vmatpush1.bf16.msra.mxu0 %v1681
      %2090 = vmatprep.subr.bf16.mxu0 0
      %2091 = vmatpush1.bf16.msra.mxu0 %v1680
      %2092 = vmatprep.subr.bf16.mxu0 0
      %2093 = vmatpush1.bf16.msra.mxu0 %v1679
      %2094 = vmatprep.subr.bf16.mxu0 0
      %2095 = vmatpush1.bf16.msra.mxu0 %v1678
      %2096 = vmatprep.subr.bf16.mxu0 0
      %2097 = vmatpush2.bf16.msra.mxu0 %v1693
      %2098 = vmatprep.subr.bf16.mxu0 0
      %2099 = vmatpush2.bf16.msra.mxu0 %v1692
      %2100 = vmatprep.subr.bf16.mxu0 0
      %2101 = vmatpush2.bf16.msra.mxu0 %v1691
      %2102 = vmatprep.subr.bf16.mxu0 0
      %2103 = vmatpush2.bf16.msra.mxu0 %v1690
      %2104 = vmatprep.subr.bf16.mxu0 0
      %2105 = vmatpush2.bf16.msra.mxu0 %v1689
      %2106 = vmatprep.subr.bf16.mxu0 0
      %2107 = vmatpush2.bf16.msra.mxu0 %v1688
      %2108 = vmatprep.subr.bf16.mxu0 0
      %2109 = vmatpush2.bf16.msra.mxu0 %v1687
      %2110 = vmatprep.subr.bf16.mxu0 0
      %2111 = vmatpush2.bf16.msra.mxu0 %v1686
      %2112 = vmatprep.mubr.bf16.mxu0 %v1203
      %2113 = vmatmul.mubr.bf16.gmra.mxu0 %v1202
      %v2114 = vpop.f32.mrf.mxu0
      %v2115 = vadd.f32 %v1954, %v2114
      %v2116 = vpop.f32.mrf.mxu0
      %v2117 = vpop.f32.mrf.mxu0
      %v2118 = vadd.f32 %v1957, %v2117
      %v2119 = vpop.f32.mrf.mxu0
      %2120 = vmatprep.mubr.bf16.mxu0 %v1210
      %2121 = vmatmul.mubr.bf16.gmra.mxu0 %v1209
      %v2122 = vpop.f32.mrf.mxu0
      %v2123 = vadd.f32 %v1962, %v2122
      %v2124 = vpop.f32.mrf.mxu0
      %v2125 = vpop.f32.mrf.mxu0
      %v2126 = vadd.f32 %v1965, %v2125
      %v2127 = vpop.f32.mrf.mxu0
      %2128 = vmatprep.mubr.bf16.mxu0 %v1217
      %2129 = vmatmul.mubr.bf16.gmra.mxu0 %v1216
      %v2130 = vpop.f32.mrf.mxu0
      %v2131 = vadd.f32 %v1970, %v2130
      %v2132 = vpop.f32.mrf.mxu0
      %v2133 = vpop.f32.mrf.mxu0
      %v2134 = vadd.f32 %v1973, %v2133
      %v2135 = vpop.f32.mrf.mxu0
      %2136 = vmatprep.mubr.bf16.mxu0 %v1224
      %2137 = vmatmul.mubr.bf16.gmra.mxu0 %v1223
      %v2138 = vpop.f32.mrf.mxu0
      %v2139 = vadd.f32 %v1978, %v2138
      %v2140 = vpop.f32.mrf.mxu0
      %v2141 = vpop.f32.mrf.mxu0
      %v2142 = vadd.f32 %v1981, %v2141
      %v2143 = vpop.f32.mrf.mxu0
      %2144 = vmatprep.mubr.bf16.mxu0 %v1231
      %2145 = vmatmul.mubr.bf16.gmra.mxu0 %v1230
      %v2146 = vpop.f32.mrf.mxu0
      %v2147 = vadd.f32 %v1986, %v2146
      %v2148 = vpop.f32.mrf.mxu0
      %v2149 = vpop.f32.mrf.mxu0
      %v2150 = vadd.f32 %v1989, %v2149
      %v2151 = vpop.f32.mrf.mxu0
      %2152 = vmatprep.mubr.bf16.mxu0 %v1238
      %2153 = vmatmul.mubr.bf16.gmra.mxu0 %v1237
      %v2154 = vpop.f32.mrf.mxu0
      %v2155 = vadd.f32 %v1994, %v2154
      %v2156 = vpop.f32.mrf.mxu0
      %v2157 = vpop.f32.mrf.mxu0
      %v2158 = vadd.f32 %v1997, %v2157
      %v2159 = vpop.f32.mrf.mxu0
      %2160 = vmatprep.mubr.bf16.mxu0 %v1245
      %2161 = vmatmul.mubr.bf16.gmra.mxu0 %v1244
      %v2162 = vpop.f32.mrf.mxu0
      %v2163 = vadd.f32 %v2002, %v2162
      %v2164 = vpop.f32.mrf.mxu0
      %v2165 = vpop.f32.mrf.mxu0
      %v2166 = vadd.f32 %v2005, %v2165
      %v2167 = vpop.f32.mrf.mxu0
      %2168 = vmatprep.mubr.bf16.mxu0 %v1252
      %2169 = vmatmul.mubr.bf16.gmra.mxu0 %v1251
      %v2170 = vpop.f32.mrf.mxu0
      %v2171 = vadd.f32 %v2010, %v2170
      %v2172 = vpop.f32.mrf.mxu0
      %v2173 = vpop.f32.mrf.mxu0
      %v2174 = vadd.f32 %v2013, %v2173
      %v2175 = vpop.f32.mrf.mxu0
      %2176 = vmatprep.mubr.bf16.mxu0 %v1259
      %2177 = vmatmul.mubr.bf16.gmra.mxu0 %v1258
      %v2178 = vpop.f32.mrf.mxu0
      %v2179 = vadd.f32 %v2018, %v2178
      %v2180 = vpop.f32.mrf.mxu0
      %v2181 = vpop.f32.mrf.mxu0
      %v2182 = vadd.f32 %v2021, %v2181
      %v2183 = vpop.f32.mrf.mxu0
      %2184 = vmatprep.mubr.bf16.mxu0 %v1266
      %2185 = vmatmul.mubr.bf16.gmra.mxu0 %v1265
      %v2186 = vpop.f32.mrf.mxu0
      %v2187 = vadd.f32 %v2026, %v2186
      %v2188 = vpop.f32.mrf.mxu0
      %v2189 = vpop.f32.mrf.mxu0
      %v2190 = vadd.f32 %v2029, %v2189
      %v2191 = vpop.f32.mrf.mxu0
      %2192 = vmatprep.mubr.bf16.mxu0 %v1273
      %2193 = vmatmul.mubr.bf16.gmra.mxu0 %v1272
      %v2194 = vpop.f32.mrf.mxu0
      %v2195 = vadd.f32 %v2034, %v2194
      %v2196 = vpop.f32.mrf.mxu0
      %v2197 = vpop.f32.mrf.mxu0
      %v2198 = vadd.f32 %v2037, %v2197
      %v2199 = vpop.f32.mrf.mxu0
      %2200 = vmatprep.mubr.bf16.mxu0 %v1280
      %2201 = vmatmul.mubr.bf16.gmra.mxu0 %v1279
      %v2202 = vpop.f32.mrf.mxu0
      %v2203 = vadd.f32 %v2042, %v2202
      %v2204 = vpop.f32.mrf.mxu0
      %v2205 = vpop.f32.mrf.mxu0
      %v2206 = vadd.f32 %v2045, %v2205
      %v2207 = vpop.f32.mrf.mxu0
      %2208 = vmatprep.mubr.bf16.mxu0 %v1287
      %2209 = vmatmul.mubr.bf16.gmra.mxu0 %v1286
      %v2210 = vpop.f32.mrf.mxu0
      %v2211 = vadd.f32 %v2050, %v2210
      %v2212 = vpop.f32.mrf.mxu0
      %v2213 = vpop.f32.mrf.mxu0
      %v2214 = vadd.f32 %v2053, %v2213
      %v2215 = vpop.f32.mrf.mxu0
      %2216 = vmatprep.mubr.bf16.mxu0 %v1294
      %2217 = vmatmul.mubr.bf16.gmra.mxu0 %v1293
      %v2218 = vpop.f32.mrf.mxu0
      %v2219 = vadd.f32 %v2058, %v2218
      %v2220 = vpop.f32.mrf.mxu0
      %v2221 = vpop.f32.mrf.mxu0
      %v2222 = vadd.f32 %v2061, %v2221
      %v2223 = vpop.f32.mrf.mxu0
      %2224 = vmatprep.mubr.bf16.mxu0 %v1301
      %2225 = vmatmul.mubr.bf16.gmra.mxu0 %v1300
      %v2226 = vpop.f32.mrf.mxu0
      %v2227 = vadd.f32 %v2066, %v2226
      %v2228 = vpop.f32.mrf.mxu0
      %v2229 = vpop.f32.mrf.mxu0
      %v2230 = vadd.f32 %v2069, %v2229
      %v2231 = vpop.f32.mrf.mxu0
      %2232 = vmatprep.mubr.bf16.mxu0 %v1308
      %2233 = vmatmul.mubr.bf16.gmra.mxu0 %v1307
      %v2234 = vpop.f32.mrf.mxu0
      %v2235 = vadd.f32 %v2074, %v2234
      %v2236 = vpop.f32.mrf.mxu0
      %v2237 = vpop.f32.mrf.mxu0
      %v2238 = vadd.f32 %v2077, %v2237
      %v2239 = vpop.f32.mrf.mxu0
      %2240 = vdwg.mxu0
      %2241 = vmatprep.subr.bf16.mxu0 0
      %2242 = vmatpush1.bf16.msra.mxu0 %v1701
      %2243 = vmatprep.subr.bf16.mxu0 0
      %2244 = vmatpush1.bf16.msra.mxu0 %v1700
      %2245 = vmatprep.subr.bf16.mxu0 0
      %2246 = vmatpush1.bf16.msra.mxu0 %v1699
      %2247 = vmatprep.subr.bf16.mxu0 0
      %2248 = vmatpush1.bf16.msra.mxu0 %v1698
      %2249 = vmatprep.subr.bf16.mxu0 0
      %2250 = vmatpush1.bf16.msra.mxu0 %v1697
      %2251 = vmatprep.subr.bf16.mxu0 0
      %2252 = vmatpush1.bf16.msra.mxu0 %v1696
      %2253 = vmatprep.subr.bf16.mxu0 0
      %2254 = vmatpush1.bf16.msra.mxu0 %v1695
      %2255 = vmatprep.subr.bf16.mxu0 0
      %2256 = vmatpush1.bf16.msra.mxu0 %v1694
      %2257 = vmatprep.subr.bf16.mxu0 0
      %2258 = vmatpush2.bf16.msra.mxu0 0
      %2259 = vmatprep.subr.bf16.mxu0 0
      %2260 = vmatpush2.bf16.msra.mxu0 0
      %2261 = vmatprep.subr.bf16.mxu0 0
      %2262 = vmatpush2.bf16.msra.mxu0 0
      %2263 = vmatprep.subr.bf16.mxu0 0
      %2264 = vmatpush2.bf16.msra.mxu0 0
      %2265 = vmatprep.subr.bf16.mxu0 0
      %2266 = vmatpush2.bf16.msra.mxu0 0
      %2267 = vmatprep.subr.bf16.mxu0 0
      %2268 = vmatpush2.bf16.msra.mxu0 0
      %2269 = vmatprep.subr.bf16.mxu0 0
      %2270 = vmatpush2.bf16.msra.mxu0 0
      %2271 = vmatprep.subr.bf16.mxu0 0
      %2272 = vmatpush2.bf16.msra.mxu0 0
      %2273 = vmatprep.mubr.bf16.mxu0 0
      %2274 = vmatmul.mubr.bf16.gmra.mxu0 %v1204
      %v2275 = vpop.f32.mrf.mxu0
      %v2276 = vadd.f32 %v2115, %v2275
      %v2277 = vpop.f32.mrf.mxu0
      %v2278 = vpop.f32.mrf.mxu0
      %v2279 = vadd.f32 %v2118, %v2278
      %v2280 = vpop.f32.mrf.mxu0
      %2281 = vmatprep.mubr.bf16.mxu0 0
      %2282 = vmatmul.mubr.bf16.gmra.mxu0 %v1211
      %v2283 = vpop.f32.mrf.mxu0
      %v2284 = vadd.f32 %v2123, %v2283
      %v2285 = vpop.f32.mrf.mxu0
      %v2286 = vpop.f32.mrf.mxu0
      %v2287 = vadd.f32 %v2126, %v2286
      %v2288 = vpop.f32.mrf.mxu0
      %2289 = vmatprep.mubr.bf16.mxu0 0
      %2290 = vmatmul.mubr.bf16.gmra.mxu0 %v1218
      %v2291 = vpop.f32.mrf.mxu0
      %v2292 = vadd.f32 %v2131, %v2291
      %v2293 = vpop.f32.mrf.mxu0
      %v2294 = vpop.f32.mrf.mxu0
      %v2295 = vadd.f32 %v2134, %v2294
      %v2296 = vpop.f32.mrf.mxu0
      %2297 = vmatprep.mubr.bf16.mxu0 0
      %2298 = vmatmul.mubr.bf16.gmra.mxu0 %v1225
      %v2299 = vpop.f32.mrf.mxu0
      %v2300 = vadd.f32 %v2139, %v2299
      %v2301 = vpop.f32.mrf.mxu0
      %v2302 = vpop.f32.mrf.mxu0
      %v2303 = vadd.f32 %v2142, %v2302
      %v2304 = vpop.f32.mrf.mxu0
      %2305 = vmatprep.mubr.bf16.mxu0 0
      %2306 = vmatmul.mubr.bf16.gmra.mxu0 %v1232
      %v2307 = vpop.f32.mrf.mxu0
      %v2308 = vadd.f32 %v2147, %v2307
      %v2309 = vpop.f32.mrf.mxu0
      %v2310 = vpop.f32.mrf.mxu0
      %v2311 = vadd.f32 %v2150, %v2310
      %v2312 = vpop.f32.mrf.mxu0
      %2313 = vmatprep.mubr.bf16.mxu0 0
      %2314 = vmatmul.mubr.bf16.gmra.mxu0 %v1239
      %v2315 = vpop.f32.mrf.mxu0
      %v2316 = vadd.f32 %v2155, %v2315
      %v2317 = vpop.f32.mrf.mxu0
      %v2318 = vpop.f32.mrf.mxu0
      %v2319 = vadd.f32 %v2158, %v2318
      %v2320 = vpop.f32.mrf.mxu0
      %2321 = vmatprep.mubr.bf16.mxu0 0
      %2322 = vmatmul.mubr.bf16.gmra.mxu0 %v1246
      %v2323 = vpop.f32.mrf.mxu0
      %v2324 = vadd.f32 %v2163, %v2323
      %v2325 = vpop.f32.mrf.mxu0
      %v2326 = vpop.f32.mrf.mxu0
      %v2327 = vadd.f32 %v2166, %v2326
      %v2328 = vpop.f32.mrf.mxu0
      %2329 = vmatprep.mubr.bf16.mxu0 0
      %2330 = vmatmul.mubr.bf16.gmra.mxu0 %v1253
      %v2331 = vpop.f32.mrf.mxu0
      %v2332 = vadd.f32 %v2171, %v2331
      %v2333 = vpop.f32.mrf.mxu0
      %v2334 = vpop.f32.mrf.mxu0
      %v2335 = vadd.f32 %v2174, %v2334
      %v2336 = vpop.f32.mrf.mxu0
      %2337 = vmatprep.mubr.bf16.mxu0 0
      %2338 = vmatmul.mubr.bf16.gmra.mxu0 %v1260
      %v2339 = vpop.f32.mrf.mxu0
      %v2340 = vadd.f32 %v2179, %v2339
      %v2341 = vpop.f32.mrf.mxu0
      %v2342 = vpop.f32.mrf.mxu0
      %v2343 = vadd.f32 %v2182, %v2342
      %v2344 = vpop.f32.mrf.mxu0
      %2345 = vmatprep.mubr.bf16.mxu0 0
      %2346 = vmatmul.mubr.bf16.gmra.mxu0 %v1267
      %v2347 = vpop.f32.mrf.mxu0
      %v2348 = vadd.f32 %v2187, %v2347
      %v2349 = vpop.f32.mrf.mxu0
      %v2350 = vpop.f32.mrf.mxu0
      %v2351 = vadd.f32 %v2190, %v2350
      %v2352 = vpop.f32.mrf.mxu0
      %2353 = vmatprep.mubr.bf16.mxu0 0
      %2354 = vmatmul.mubr.bf16.gmra.mxu0 %v1274
      %v2355 = vpop.f32.mrf.mxu0
      %v2356 = vadd.f32 %v2195, %v2355
      %v2357 = vpop.f32.mrf.mxu0
      %v2358 = vpop.f32.mrf.mxu0
      %v2359 = vadd.f32 %v2198, %v2358
      %v2360 = vpop.f32.mrf.mxu0
      %2361 = vmatprep.mubr.bf16.mxu0 0
      %2362 = vmatmul.mubr.bf16.gmra.mxu0 %v1281
      %v2363 = vpop.f32.mrf.mxu0
      %v2364 = vadd.f32 %v2203, %v2363
      %v2365 = vpop.f32.mrf.mxu0
      %v2366 = vpop.f32.mrf.mxu0
      %v2367 = vadd.f32 %v2206, %v2366
      %v2368 = vpop.f32.mrf.mxu0
      %2369 = vmatprep.mubr.bf16.mxu0 0
      %2370 = vmatmul.mubr.bf16.gmra.mxu0 %v1288
      %v2371 = vpop.f32.mrf.mxu0
      %v2372 = vadd.f32 %v2211, %v2371
      %v2373 = vpop.f32.mrf.mxu0
      %v2374 = vpop.f32.mrf.mxu0
      %v2375 = vadd.f32 %v2214, %v2374
      %v2376 = vpop.f32.mrf.mxu0
      %2377 = vmatprep.mubr.bf16.mxu0 0
      %2378 = vmatmul.mubr.bf16.gmra.mxu0 %v1295
      %v2379 = vpop.f32.mrf.mxu0
      %v2380 = vadd.f32 %v2219, %v2379
      %v2381 = vpop.f32.mrf.mxu0
      %v2382 = vpop.f32.mrf.mxu0
      %v2383 = vadd.f32 %v2222, %v2382
      %v2384 = vpop.f32.mrf.mxu0
      %2385 = vmatprep.mubr.bf16.mxu0 0
      %2386 = vmatmul.mubr.bf16.gmra.mxu0 %v1302
      %v2387 = vpop.f32.mrf.mxu0
      %v2388 = vadd.f32 %v2227, %v2387
      %v2389 = vpop.f32.mrf.mxu0
      %v2390 = vpop.f32.mrf.mxu0
      %v2391 = vadd.f32 %v2230, %v2390
      %v2392 = vpop.f32.mrf.mxu0
      %2393 = vmatprep.mubr.bf16.mxu0 0
      %2394 = vmatmul.mubr.bf16.gmra.mxu0 %v1309
      %v2395 = vpop.f32.mrf.mxu0
      %v2396 = vadd.f32 %v2235, %v2395
      %v2397 = vpop.f32.mrf.mxu0
      %v2398 = vpop.f32.mrf.mxu0
      %v2399 = vadd.f32 %v2238, %v2398
      %v2400 = vpop.f32.mrf.mxu0
      %2401 = vdwg.mxu0
      %v2402 = vtanh.pop %v2276
      %v2403 = vtanh.pop %v2279
      %v2404 = vtanh.pop %v2284
      %v2405 = vtanh.pop %v2287
      %v2406 = vtanh.pop %v2292
      %v2407 = vtanh.pop %v2295
      %v2408 = vtanh.pop %v2300
      %v2409 = vtanh.pop %v2303
      %v2410 = vtanh.pop %v2308
      %v2411 = vtanh.pop %v2311
      %v2412 = vtanh.pop %v2316
      %v2413 = vtanh.pop %v2319
      %v2414 = vtanh.pop %v2324
      %v2415 = vtanh.pop %v2327
      %v2416 = vtanh.pop %v2332
      %v2417 = vtanh.pop %v2335
      %v2418 = vtanh.pop %v2340
      %v2419 = vtanh.pop %v2343
      %v2420 = vtanh.pop %v2348
      %v2421 = vtanh.pop %v2351
      %v2422 = vtanh.pop %v2356
      %v2423 = vtanh.pop %v2359
      %v2424 = vtanh.pop %v2364
      %v2425 = vtanh.pop %v2367
      %v2426 = vtanh.pop %v2372
      %v2427 = vtanh.pop %v2375
      %v2428 = vtanh.pop %v2380
      %v2429 = vtanh.pop %v2383
      %v2430 = vtanh.pop %v2388
      %v2431 = vtanh.pop %v2391
      %v2432 = vtanh.pop %v2396
      %v2433 = vtanh.pop %v2399
      %v2434 = vpack.c.bf16 %v2403, %v2402
      %v2435 = vpack.c.bf16 %v2405, %v2404
      %v2436 = vpack.c.bf16 %v2407, %v2406
      %v2437 = vpack.c.bf16 %v2409, %v2408
      %v2438 = vpack.c.bf16 %v2411, %v2410
      %v2439 = vpack.c.bf16 %v2413, %v2412
      %v2440 = vpack.c.bf16 %v2415, %v2414
      %v2441 = vpack.c.bf16 %v2417, %v2416
      %v2442 = vpack.c.bf16 %v2419, %v2418
      %v2443 = vpack.c.bf16 %v2421, %v2420
      %v2444 = vpack.c.bf16 %v2423, %v2422
      %v2445 = vpack.c.bf16 %v2425, %v2424
      %v2446 = vpack.c.bf16 %v2427, %v2426
      %v2447 = vpack.c.bf16 %v2429, %v2428
      %v2448 = vpack.c.bf16 %v2431, %v2430
      %v2449 = vpack.c.bf16 %v2433, %v2432
      %v2450 = vld [vmem:[%s3] sm:$0xf]
      %v2451 = vld [vmem:[%s3 + $0x4] sm:$0xf]
      %v2452 = vld [vmem:[%s3 + $0x8] sm:$0xf]
      %v2453 = vld [vmem:[%s3 + $0xc] sm:$0xf]
      %v2454 = vld [vmem:[%s3 + $0x10] sm:$0xf]
      %v2455 = vld [vmem:[%s3 + $0x14] sm:$0xf]
      %v2456 = vld [vmem:[%s3 + $0x18] sm:$0xf]
      %v2457 = vld [vmem:[%s3 + $0x1c] sm:$0xf]
      %v2458 = vld [vmem:[%s3 + $0x20] sm:$0xf]
      %v2459 = vld [vmem:[%s3 + $0x24] sm:$0xf]
      %v2460 = vld [vmem:[%s3 + $0x28] sm:$0xf]
      %v2461 = vld [vmem:[%s3 + $0x2c] sm:$0xf]
      %v2462 = vld [vmem:[%s3 + $0x30] sm:$0xf]
      %v2463 = vld [vmem:[%s3 + $0x34] sm:$0xf]
      %v2464 = vld [vmem:[%s3 + $0x38] sm:$0xf]
      %v2465 = vld [vmem:[%s3 + $0x3c] sm:$0xf]
      %v2466 = vld [vmem:[%s4] sm:$0x1]
      %v2468 = vlaneseq
      %v2469 = vshrl.u32 %v2468, 7
      %v2470 = vsub.s32 0, %v2469
      %v2471 = vrot.slane %v2466, %v2470
      %v2489 = vunpack.c.l.b16 %v2450
      %v2490 = vunpack.c.l.b16 %v2451
      %v2491 = vunpack.c.l.b16 %v2452
      %v2492 = vunpack.c.l.b16 %v2453
      %v2493 = vunpack.c.l.b16 %v2454
      %v2494 = vunpack.c.l.b16 %v2455
      %v2495 = vunpack.c.l.b16 %v2456
      %v2496 = vunpack.c.l.b16 %v2457
      %v2497 = vunpack.c.l.b16 %v2458
      %v2498 = vunpack.c.l.b16 %v2459
      %v2499 = vunpack.c.l.b16 %v2460
      %v2500 = vunpack.c.l.b16 %v2461
      %v2501 = vunpack.c.l.b16 %v2462
      %v2502 = vunpack.c.l.b16 %v2463
      %v2503 = vunpack.c.l.b16 %v2464
      %v2504 = vunpack.c.l.b16 %v2465
      %v2505 = vpack.c.b16 %v2490, %v2489
      %v2506 = vpack.c.b16 %v2492, %v2491
      %v2507 = vpack.c.b16 %v2494, %v2493
      %v2508 = vpack.c.b16 %v2496, %v2495
      %v2509 = vpack.c.b16 %v2498, %v2497
      %v2510 = vpack.c.b16 %v2500, %v2499
      %v2511 = vpack.c.b16 %v2502, %v2501
      %v2512 = vpack.c.b16 %v2504, %v2503
      %2521 = vmatprep.subr.bf16.mxu0 0
      %2522 = vmatpush1.bf16.msra.mxu0 %v2512
      %2523 = vmatprep.subr.bf16.mxu0 0
      %2524 = vmatpush1.bf16.msra.mxu0 %v2511
      %2525 = vmatprep.subr.bf16.mxu0 0
      %2526 = vmatpush1.bf16.msra.mxu0 %v2510
      %2527 = vmatprep.subr.bf16.mxu0 0
      %2528 = vmatpush1.bf16.msra.mxu0 %v2509
      %2529 = vmatprep.subr.bf16.mxu0 0
      %2530 = vmatpush1.bf16.msra.mxu0 %v2508
      %2531 = vmatprep.subr.bf16.mxu0 0
      %2532 = vmatpush1.bf16.msra.mxu0 %v2507
      %2533 = vmatprep.subr.bf16.mxu0 0
      %2534 = vmatpush1.bf16.msra.mxu0 %v2506
      %2535 = vmatprep.subr.bf16.mxu0 0
      %2536 = vmatpush1.bf16.msra.mxu0 %v2505
      %2537 = vmatprep.subr.bf16.mxu0 0
      %2538 = vmatpush2.bf16.msra.mxu0 0
      %2539 = vmatprep.subr.bf16.mxu0 0
      %2540 = vmatpush2.bf16.msra.mxu0 0
      %2541 = vmatprep.subr.bf16.mxu0 0
      %2542 = vmatpush2.bf16.msra.mxu0 0
      %2543 = vmatprep.subr.bf16.mxu0 0
      %2544 = vmatpush2.bf16.msra.mxu0 0
      %2545 = vmatprep.subr.bf16.mxu0 0
      %2546 = vmatpush2.bf16.msra.mxu0 0
      %2547 = vmatprep.subr.bf16.mxu0 0
      %2548 = vmatpush2.bf16.msra.mxu0 0
      %2549 = vmatprep.subr.bf16.mxu0 0
      %2550 = vmatpush2.bf16.msra.mxu0 0
      %2551 = vmatprep.subr.bf16.mxu0 0
      %2552 = vmatpush2.bf16.msra.mxu0 0
      %2553 = vmatprep.mubr.bf16.mxu0 0
      %2554 = vmatmul.mubr.bf16.gmra.mxu0 %v2434
      %v2555 = vpop.f32.mrf.mxu0
      %v2556 = vadd.f32 %v2471, %v2555
      %v2557 = vpop.f32.mrf.mxu0
      %v2558 = vpop.f32.mrf.mxu0
      %v2559 = vadd.f32 %v2471, %v2558
      %v2560 = vpop.f32.mrf.mxu0
      %2561 = vmatprep.mubr.bf16.mxu0 0
      %2562 = vmatmul.mubr.bf16.gmra.mxu0 %v2435
      %v2563 = vpop.f32.mrf.mxu0
      %v2564 = vadd.f32 %v2471, %v2563
      %v2565 = vpop.f32.mrf.mxu0
      %v2566 = vpop.f32.mrf.mxu0
      %v2567 = vadd.f32 %v2471, %v2566
      %v2568 = vpop.f32.mrf.mxu0
      %2569 = vmatprep.mubr.bf16.mxu0 0
      %2570 = vmatmul.mubr.bf16.gmra.mxu0 %v2436
      %v2571 = vpop.f32.mrf.mxu0
      %v2572 = vadd.f32 %v2471, %v2571
      %v2573 = vpop.f32.mrf.mxu0
      %v2574 = vpop.f32.mrf.mxu0
      %v2575 = vadd.f32 %v2471, %v2574
      %v2576 = vpop.f32.mrf.mxu0
      %2577 = vmatprep.mubr.bf16.mxu0 0
      %2578 = vmatmul.mubr.bf16.gmra.mxu0 %v2437
      %v2579 = vpop.f32.mrf.mxu0
      %v2580 = vadd.f32 %v2471, %v2579
      %v2581 = vpop.f32.mrf.mxu0
      %v2582 = vpop.f32.mrf.mxu0
      %v2583 = vadd.f32 %v2471, %v2582
      %v2584 = vpop.f32.mrf.mxu0
      %2585 = vmatprep.mubr.bf16.mxu0 0
      %2586 = vmatmul.mubr.bf16.gmra.mxu0 %v2438
      %v2587 = vpop.f32.mrf.mxu0
      %v2588 = vadd.f32 %v2471, %v2587
      %v2589 = vpop.f32.mrf.mxu0
      %v2590 = vpop.f32.mrf.mxu0
      %v2591 = vadd.f32 %v2471, %v2590
      %v2592 = vpop.f32.mrf.mxu0
      %2593 = vmatprep.mubr.bf16.mxu0 0
      %2594 = vmatmul.mubr.bf16.gmra.mxu0 %v2439
      %v2595 = vpop.f32.mrf.mxu0
      %v2596 = vadd.f32 %v2471, %v2595
      %v2597 = vpop.f32.mrf.mxu0
      %v2598 = vpop.f32.mrf.mxu0
      %v2599 = vadd.f32 %v2471, %v2598
      %v2600 = vpop.f32.mrf.mxu0
      %2601 = vmatprep.mubr.bf16.mxu0 0
      %2602 = vmatmul.mubr.bf16.gmra.mxu0 %v2440
      %v2603 = vpop.f32.mrf.mxu0
      %v2604 = vadd.f32 %v2471, %v2603
      %v2605 = vpop.f32.mrf.mxu0
      %v2606 = vpop.f32.mrf.mxu0
      %v2607 = vadd.f32 %v2471, %v2606
      %v2608 = vpop.f32.mrf.mxu0
      %2609 = vmatprep.mubr.bf16.mxu0 0
      %2610 = vmatmul.mubr.bf16.gmra.mxu0 %v2441
      %v2611 = vpop.f32.mrf.mxu0
      %v2612 = vadd.f32 %v2471, %v2611
      %v2613 = vpop.f32.mrf.mxu0
      %v2614 = vpop.f32.mrf.mxu0
      %v2615 = vadd.f32 %v2471, %v2614
      %v2616 = vpop.f32.mrf.mxu0
      %2617 = vmatprep.mubr.bf16.mxu0 0
      %2618 = vmatmul.mubr.bf16.gmra.mxu0 %v2442
      %v2619 = vpop.f32.mrf.mxu0
      %v2620 = vadd.f32 %v2471, %v2619
      %v2621 = vpop.f32.mrf.mxu0
      %v2622 = vpop.f32.mrf.mxu0
      %v2623 = vadd.f32 %v2471, %v2622
      %v2624 = vpop.f32.mrf.mxu0
      %2625 = vmatprep.mubr.bf16.mxu0 0
      %2626 = vmatmul.mubr.bf16.gmra.mxu0 %v2443
      %v2627 = vpop.f32.mrf.mxu0
      %v2628 = vadd.f32 %v2471, %v2627
      %v2629 = vpop.f32.mrf.mxu0
      %v2630 = vpop.f32.mrf.mxu0
      %v2631 = vadd.f32 %v2471, %v2630
      %v2632 = vpop.f32.mrf.mxu0
      %2633 = vmatprep.mubr.bf16.mxu0 0
      %2634 = vmatmul.mubr.bf16.gmra.mxu0 %v2444
      %v2635 = vpop.f32.mrf.mxu0
      %v2636 = vadd.f32 %v2471, %v2635
      %v2637 = vpop.f32.mrf.mxu0
      %v2638 = vpop.f32.mrf.mxu0
      %v2639 = vadd.f32 %v2471, %v2638
      %v2640 = vpop.f32.mrf.mxu0
      %2641 = vmatprep.mubr.bf16.mxu0 0
      %2642 = vmatmul.mubr.bf16.gmra.mxu0 %v2445
      %v2643 = vpop.f32.mrf.mxu0
      %v2644 = vadd.f32 %v2471, %v2643
      %v2645 = vpop.f32.mrf.mxu0
      %v2646 = vpop.f32.mrf.mxu0
      %v2647 = vadd.f32 %v2471, %v2646
      %v2648 = vpop.f32.mrf.mxu0
      %2649 = vmatprep.mubr.bf16.mxu0 0
      %2650 = vmatmul.mubr.bf16.gmra.mxu0 %v2446
      %v2651 = vpop.f32.mrf.mxu0
      %v2652 = vadd.f32 %v2471, %v2651
      %v2653 = vpop.f32.mrf.mxu0
      %v2654 = vpop.f32.mrf.mxu0
      %v2655 = vadd.f32 %v2471, %v2654
      %v2656 = vpop.f32.mrf.mxu0
      %2657 = vmatprep.mubr.bf16.mxu0 0
      %2658 = vmatmul.mubr.bf16.gmra.mxu0 %v2447
      %v2659 = vpop.f32.mrf.mxu0
      %v2660 = vadd.f32 %v2471, %v2659
      %v2661 = vpop.f32.mrf.mxu0
      %v2662 = vpop.f32.mrf.mxu0
      %v2663 = vadd.f32 %v2471, %v2662
      %v2664 = vpop.f32.mrf.mxu0
      %2665 = vmatprep.mubr.bf16.mxu0 0
      %2666 = vmatmul.mubr.bf16.gmra.mxu0 %v2448
      %v2667 = vpop.f32.mrf.mxu0
      %v2668 = vadd.f32 %v2471, %v2667
      %v2669 = vpop.f32.mrf.mxu0
      %v2670 = vpop.f32.mrf.mxu0
      %v2671 = vadd.f32 %v2471, %v2670
      %v2672 = vpop.f32.mrf.mxu0
      %2673 = vmatprep.mubr.bf16.mxu0 0
      %2674 = vmatmul.mubr.bf16.gmra.mxu0 %v2449
      %v2675 = vpop.f32.mrf.mxu0
      %v2676 = vadd.f32 %v2471, %v2675
      %v2677 = vpop.f32.mrf.mxu0
      %v2678 = vpop.f32.mrf.mxu0
      %v2679 = vadd.f32 %v2471, %v2678
      %v2680 = vpop.f32.mrf.mxu0
      %2681 = vdwg.mxu0
      %v2682 = vtanh.pop %v2556
      %v2683 = vtanh.pop %v2559
      %v2684 = vtanh.pop %v2564
      %v2685 = vtanh.pop %v2567
      %v2686 = vtanh.pop %v2572
      %v2687 = vtanh.pop %v2575
      %v2688 = vtanh.pop %v2580
      %v2689 = vtanh.pop %v2583
      %v2690 = vtanh.pop %v2588
      %v2691 = vtanh.pop %v2591
      %v2692 = vtanh.pop %v2596
      %v2693 = vtanh.pop %v2599
      %v2694 = vtanh.pop %v2604
      %v2695 = vtanh.pop %v2607
      %v2696 = vtanh.pop %v2612
      %v2697 = vtanh.pop %v2615
      %v2698 = vtanh.pop %v2620
      %v2699 = vtanh.pop %v2623
      %v2700 = vtanh.pop %v2628
      %v2701 = vtanh.pop %v2631
      %v2702 = vtanh.pop %v2636
      %v2703 = vtanh.pop %v2639
      %v2704 = vtanh.pop %v2644
      %v2705 = vtanh.pop %v2647
      %v2706 = vtanh.pop %v2652
      %v2707 = vtanh.pop %v2655
      %v2708 = vtanh.pop %v2660
      %v2709 = vtanh.pop %v2663
      %v2710 = vtanh.pop %v2668
      %v2711 = vtanh.pop %v2671
      %v2712 = vtanh.pop %v2676
      %v2713 = vtanh.pop %v2679
      %v2714 = vpack.c.bf16 %v2683, %v2682
      %v2715 = vpack.c.bf16 %v2685, %v2684
      %v2716 = vpack.c.bf16 %v2687, %v2686
      %v2717 = vpack.c.bf16 %v2689, %v2688
      %v2718 = vpack.c.bf16 %v2691, %v2690
      %v2719 = vpack.c.bf16 %v2693, %v2692
      %v2720 = vpack.c.bf16 %v2695, %v2694
      %v2721 = vpack.c.bf16 %v2697, %v2696
      %v2722 = vpack.c.bf16 %v2699, %v2698
      %v2723 = vpack.c.bf16 %v2701, %v2700
      %v2724 = vpack.c.bf16 %v2703, %v2702
      %v2725 = vpack.c.bf16 %v2705, %v2704
      %v2726 = vpack.c.bf16 %v2707, %v2706
      %v2727 = vpack.c.bf16 %v2709, %v2708
      %v2728 = vpack.c.bf16 %v2711, %v2710
      %v2729 = vpack.c.bf16 %v2713, %v2712
      %v2730 = vld [vmem:[%s5] sm:$0xf]
      %v2731 = vld [vmem:[%s5 + $0x4] sm:$0xf]
      %v2732 = vld [vmem:[%s5 + $0x8] sm:$0xf]
      %v2733 = vld [vmem:[%s5 + $0xc] sm:$0xf]
      %v2734 = vld [vmem:[%s5 + $0x10] sm:$0xf]
      %v2735 = vld [vmem:[%s5 + $0x14] sm:$0xf]
      %v2736 = vld [vmem:[%s5 + $0x18] sm:$0xf]
      %v2737 = vld [vmem:[%s5 + $0x1c] sm:$0xf]
      %v2738 = vld [vmem:[%s6] sm:$0x1]
      %v2740 = vlaneseq
      %v2741 = vshrl.u32 %v2740, 7
      %v2742 = vsub.s32 0, %v2741
      %v2743 = vrot.slane %v2738, %v2742
      %v2753 = vunpack.c.l.b16 %v2730
      %v2754 = vunpack.c.l.b16 %v2731
      %v2755 = vunpack.c.l.b16 %v2732
      %v2756 = vunpack.c.l.b16 %v2733
      %v2757 = vunpack.c.l.b16 %v2734
      %v2758 = vunpack.c.l.b16 %v2735
      %v2759 = vunpack.c.l.b16 %v2736
      %v2760 = vunpack.c.l.b16 %v2737
      %v2761 = vpack.c.b16 %v2754, %v2753
      %v2762 = vpack.c.b16 %v2756, %v2755
      %v2763 = vpack.c.b16 %v2758, %v2757
      %v2764 = vpack.c.b16 %v2760, %v2759
      %vm2769 = vcmask 523264
      %v2771 = vsel %vm2769, %v2714, 0
      %v2774 = vsel %vm2769, %v2715, 0
      %v2777 = vsel %vm2769, %v2716, 0
      %v2780 = vsel %vm2769, %v2717, 0
      %v2783 = vsel %vm2769, %v2718, 0
      %v2786 = vsel %vm2769, %v2719, 0
      %v2789 = vsel %vm2769, %v2720, 0
      %v2792 = vsel %vm2769, %v2721, 0
      %v2795 = vsel %vm2769, %v2722, 0
      %v2798 = vsel %vm2769, %v2723, 0
      %v2801 = vsel %vm2769, %v2724, 0
      %v2804 = vsel %vm2769, %v2725, 0
      %v2807 = vsel %vm2769, %v2726, 0
      %v2810 = vsel %vm2769, %v2727, 0
      %v2813 = vsel %vm2769, %v2728, 0
      %v2816 = vsel %vm2769, %v2729, 0
      %2818 = vmatprep.subr.bf16.mxu0 0
      %2819 = vmatpush1.bf16.msra.mxu0 0
      %2820 = vmatprep.subr.bf16.mxu0 0
      %2821 = vmatpush1.bf16.msra.mxu0 0
      %2822 = vmatprep.subr.bf16.mxu0 0
      %2823 = vmatpush1.bf16.msra.mxu0 0
      %2824 = vmatprep.subr.bf16.mxu0 0
      %2825 = vmatpush1.bf16.msra.mxu0 0
      %2826 = vmatprep.subr.bf16.mxu0 0
      %2827 = vmatpush1.bf16.msra.mxu0 %v2764
      %2828 = vmatprep.subr.bf16.mxu0 0
      %2829 = vmatpush1.bf16.msra.mxu0 %v2763
      %2830 = vmatprep.subr.bf16.mxu0 0
      %2831 = vmatpush1.bf16.msra.mxu0 %v2762
      %2832 = vmatprep.subr.bf16.mxu0 0
      %2833 = vmatpush1.bf16.msra.mxu0 %v2761
      %2834 = vmatprep.subr.bf16.mxu0 0
      %2835 = vmatpush2.bf16.msra.mxu0 0
      %2836 = vmatprep.subr.bf16.mxu0 0
      %2837 = vmatpush2.bf16.msra.mxu0 0
      %2838 = vmatprep.subr.bf16.mxu0 0
      %2839 = vmatpush2.bf16.msra.mxu0 0
      %2840 = vmatprep.subr.bf16.mxu0 0
      %2841 = vmatpush2.bf16.msra.mxu0 0
      %2842 = vmatprep.subr.bf16.mxu0 0
      %2843 = vmatpush2.bf16.msra.mxu0 0
      %2844 = vmatprep.subr.bf16.mxu0 0
      %2845 = vmatpush2.bf16.msra.mxu0 0
      %2846 = vmatprep.subr.bf16.mxu0 0
      %2847 = vmatpush2.bf16.msra.mxu0 0
      %2848 = vmatprep.subr.bf16.mxu0 0
      %2849 = vmatpush2.bf16.msra.mxu0 0
      %2850 = vmatprep.mubr.bf16.mxu0 0
      %2851 = vmatmul.mubr.bf16.gmra.mxu0 %v2771
      %v2852 = vpop.f32.mrf.mxu0
      %v2853 = vadd.f32 %v2743, %v2852
      %v2854 = vpop.f32.mrf.mxu0
      %v2855 = vpop.f32.mrf.mxu0
      %v2856 = vadd.f32 %v2743, %v2855
      %v2857 = vpop.f32.mrf.mxu0
      %2858 = vmatprep.mubr.bf16.mxu0 0
      %2859 = vmatmul.mubr.bf16.gmra.mxu0 %v2774
      %v2860 = vpop.f32.mrf.mxu0
      %v2861 = vadd.f32 %v2743, %v2860
      %v2862 = vpop.f32.mrf.mxu0
      %v2863 = vpop.f32.mrf.mxu0
      %v2864 = vadd.f32 %v2743, %v2863
      %v2865 = vpop.f32.mrf.mxu0
      %2866 = vmatprep.mubr.bf16.mxu0 0
      %2867 = vmatmul.mubr.bf16.gmra.mxu0 %v2777
      %v2868 = vpop.f32.mrf.mxu0
      %v2869 = vadd.f32 %v2743, %v2868
      %v2870 = vpop.f32.mrf.mxu0
      %v2871 = vpop.f32.mrf.mxu0
      %v2872 = vadd.f32 %v2743, %v2871
      %v2873 = vpop.f32.mrf.mxu0
      %2874 = vmatprep.mubr.bf16.mxu0 0
      %2875 = vmatmul.mubr.bf16.gmra.mxu0 %v2780
      %v2876 = vpop.f32.mrf.mxu0
      %v2877 = vadd.f32 %v2743, %v2876
      %v2878 = vpop.f32.mrf.mxu0
      %v2879 = vpop.f32.mrf.mxu0
      %v2880 = vadd.f32 %v2743, %v2879
      %v2881 = vpop.f32.mrf.mxu0
      %2882 = vmatprep.mubr.bf16.mxu0 0
      %2883 = vmatmul.mubr.bf16.gmra.mxu0 %v2783
      %v2884 = vpop.f32.mrf.mxu0
      %v2885 = vadd.f32 %v2743, %v2884
      %v2886 = vpop.f32.mrf.mxu0
      %v2887 = vpop.f32.mrf.mxu0
      %v2888 = vadd.f32 %v2743, %v2887
      %v2889 = vpop.f32.mrf.mxu0
      %2890 = vmatprep.mubr.bf16.mxu0 0
      %2891 = vmatmul.mubr.bf16.gmra.mxu0 %v2786
      %v2892 = vpop.f32.mrf.mxu0
      %v2893 = vadd.f32 %v2743, %v2892
      %v2894 = vpop.f32.mrf.mxu0
      %v2895 = vpop.f32.mrf.mxu0
      %v2896 = vadd.f32 %v2743, %v2895
      %v2897 = vpop.f32.mrf.mxu0
      %2898 = vmatprep.mubr.bf16.mxu0 0
      %2899 = vmatmul.mubr.bf16.gmra.mxu0 %v2789
      %v2900 = vpop.f32.mrf.mxu0
      %v2901 = vadd.f32 %v2743, %v2900
      %v2902 = vpop.f32.mrf.mxu0
      %v2903 = vpop.f32.mrf.mxu0
      %v2904 = vadd.f32 %v2743, %v2903
      %v2905 = vpop.f32.mrf.mxu0
      %2906 = vmatprep.mubr.bf16.mxu0 0
      %2907 = vmatmul.mubr.bf16.gmra.mxu0 %v2792
      %v2908 = vpop.f32.mrf.mxu0
      %v2909 = vadd.f32 %v2743, %v2908
      %v2910 = vpop.f32.mrf.mxu0
      %v2911 = vpop.f32.mrf.mxu0
      %v2912 = vadd.f32 %v2743, %v2911
      %v2913 = vpop.f32.mrf.mxu0
      %2914 = vmatprep.mubr.bf16.mxu0 0
      %2915 = vmatmul.mubr.bf16.gmra.mxu0 %v2795
      %v2916 = vpop.f32.mrf.mxu0
      %v2917 = vadd.f32 %v2743, %v2916
      %v2918 = vpop.f32.mrf.mxu0
      %v2919 = vpop.f32.mrf.mxu0
      %v2920 = vadd.f32 %v2743, %v2919
      %v2921 = vpop.f32.mrf.mxu0
      %2922 = vmatprep.mubr.bf16.mxu0 0
      %2923 = vmatmul.mubr.bf16.gmra.mxu0 %v2798
      %v2924 = vpop.f32.mrf.mxu0
      %v2925 = vadd.f32 %v2743, %v2924
      %v2926 = vpop.f32.mrf.mxu0
      %v2927 = vpop.f32.mrf.mxu0
      %v2928 = vadd.f32 %v2743, %v2927
      %v2929 = vpop.f32.mrf.mxu0
      %2930 = vmatprep.mubr.bf16.mxu0 0
      %2931 = vmatmul.mubr.bf16.gmra.mxu0 %v2801
      %v2932 = vpop.f32.mrf.mxu0
      %v2933 = vadd.f32 %v2743, %v2932
      %v2934 = vpop.f32.mrf.mxu0
      %v2935 = vpop.f32.mrf.mxu0
      %v2936 = vadd.f32 %v2743, %v2935
      %v2937 = vpop.f32.mrf.mxu0
      %2938 = vmatprep.mubr.bf16.mxu0 0
      %2939 = vmatmul.mubr.bf16.gmra.mxu0 %v2804
      %v2940 = vpop.f32.mrf.mxu0
      %v2941 = vadd.f32 %v2743, %v2940
      %v2942 = vpop.f32.mrf.mxu0
      %v2943 = vpop.f32.mrf.mxu0
      %v2944 = vadd.f32 %v2743, %v2943
      %v2945 = vpop.f32.mrf.mxu0
      %2946 = vmatprep.mubr.bf16.mxu0 0
      %2947 = vmatmul.mubr.bf16.gmra.mxu0 %v2807
      %v2948 = vpop.f32.mrf.mxu0
      %v2949 = vadd.f32 %v2743, %v2948
      %v2950 = vpop.f32.mrf.mxu0
      %v2951 = vpop.f32.mrf.mxu0
      %v2952 = vadd.f32 %v2743, %v2951
      %v2953 = vpop.f32.mrf.mxu0
      %2954 = vmatprep.mubr.bf16.mxu0 0
      %2955 = vmatmul.mubr.bf16.gmra.mxu0 %v2810
      %v2956 = vpop.f32.mrf.mxu0
      %v2957 = vadd.f32 %v2743, %v2956
      %v2958 = vpop.f32.mrf.mxu0
      %v2959 = vpop.f32.mrf.mxu0
      %v2960 = vadd.f32 %v2743, %v2959
      %v2961 = vpop.f32.mrf.mxu0
      %2962 = vmatprep.mubr.bf16.mxu0 0
      %2963 = vmatmul.mubr.bf16.gmra.mxu0 %v2813
      %v2964 = vpop.f32.mrf.mxu0
      %v2965 = vadd.f32 %v2743, %v2964
      %v2966 = vpop.f32.mrf.mxu0
      %v2967 = vpop.f32.mrf.mxu0
      %v2968 = vadd.f32 %v2743, %v2967
      %v2969 = vpop.f32.mrf.mxu0
      %2970 = vmatprep.mubr.bf16.mxu0 0
      %2971 = vmatmul.mubr.bf16.gmra.mxu0 %v2816
      %v2972 = vpop.f32.mrf.mxu0
      %v2973 = vadd.f32 %v2743, %v2972
      %v2974 = vpop.f32.mrf.mxu0
      %v2975 = vpop.f32.mrf.mxu0
      %v2976 = vadd.f32 %v2743, %v2975
      %v2977 = vpop.f32.mrf.mxu0
      %2978 = vdwg.mxu0
      %v2979 = vtanh.pop %v2853
      %v2980 = vtanh.pop %v2856
      %v2981 = vtanh.pop %v2861
      %v2982 = vtanh.pop %v2864
      %v2983 = vtanh.pop %v2869
      %v2984 = vtanh.pop %v2872
      %v2985 = vtanh.pop %v2877
      %v2986 = vtanh.pop %v2880
      %v2987 = vtanh.pop %v2885
      %v2988 = vtanh.pop %v2888
      %v2989 = vtanh.pop %v2893
      %v2990 = vtanh.pop %v2896
      %v2991 = vtanh.pop %v2901
      %v2992 = vtanh.pop %v2904
      %v2993 = vtanh.pop %v2909
      %v2994 = vtanh.pop %v2912
      %v2995 = vtanh.pop %v2917
      %v2996 = vtanh.pop %v2920
      %v2997 = vtanh.pop %v2925
      %v2998 = vtanh.pop %v2928
      %v2999 = vtanh.pop %v2933
      %v3000 = vtanh.pop %v2936
      %v3001 = vtanh.pop %v2941
      %v3002 = vtanh.pop %v2944
      %v3003 = vtanh.pop %v2949
      %v3004 = vtanh.pop %v2952
      %v3005 = vtanh.pop %v2957
      %v3006 = vtanh.pop %v2960
      %v3007 = vtanh.pop %v2965
      %v3008 = vtanh.pop %v2968
      %v3009 = vtanh.pop %v2973
      %v3010 = vtanh.pop %v2976
      %v3011 = vpack.c.bf16 %v2980, %v2979
      %v3012 = vpack.c.bf16 %v2982, %v2981
      %v3013 = vpack.c.bf16 %v2984, %v2983
      %v3014 = vpack.c.bf16 %v2986, %v2985
      %v3015 = vpack.c.bf16 %v2988, %v2987
      %v3016 = vpack.c.bf16 %v2990, %v2989
      %v3017 = vpack.c.bf16 %v2992, %v2991
      %v3018 = vpack.c.bf16 %v2994, %v2993
      %v3019 = vpack.c.bf16 %v2996, %v2995
      %v3020 = vpack.c.bf16 %v2998, %v2997
      %v3021 = vpack.c.bf16 %v3000, %v2999
      %v3022 = vpack.c.bf16 %v3002, %v3001
      %v3023 = vpack.c.bf16 %v3004, %v3003
      %v3024 = vpack.c.bf16 %v3006, %v3005
      %v3025 = vpack.c.bf16 %v3008, %v3007
      %v3026 = vpack.c.bf16 %v3010, %v3009
      %v3027 = vld [vmem:[%s7] sm:$0xf]
      %v3028 = vld [vmem:[%s7 + $0x4] sm:$0x3]
      %v3029 = vld [vmem:[%s8] sm:$0x1]
      %v3031 = vlaneseq
      %v3032 = vshrl.u32 %v3031, 7
      %v3033 = vsub.s32 0, %v3032
      %v3034 = vrot.slane %v3029, %v3033
      %v3038 = vunpack.c.l.b16 %v3027
      %v3039 = vunpack.c.l.b16 %v3028
      %v3040 = vpack.c.b16 %v3039, %v3038
      %vm3041 = vcmask 97280
      %v3043 = vsel %vm3041, %v3011, 0
      %v3046 = vsel %vm3041, %v3012, 0
      %v3049 = vsel %vm3041, %v3013, 0
      %v3052 = vsel %vm3041, %v3014, 0
      %v3055 = vsel %vm3041, %v3015, 0
      %v3058 = vsel %vm3041, %v3016, 0
      %v3061 = vsel %vm3041, %v3017, 0
      %v3064 = vsel %vm3041, %v3018, 0
      %v3067 = vsel %vm3041, %v3019, 0
      %v3070 = vsel %vm3041, %v3020, 0
      %v3073 = vsel %vm3041, %v3021, 0
      %v3076 = vsel %vm3041, %v3022, 0
      %v3079 = vsel %vm3041, %v3023, 0
      %v3082 = vsel %vm3041, %v3024, 0
      %v3085 = vsel %vm3041, %v3025, 0
      %v3088 = vsel %vm3041, %v3026, 0
      %vm3090 = vcmask 1045504
      %v3092 = vsel %vm3090, %v3040, 0
      %3094 = vmatprep.subr.bf16.mxu0 0
      %3095 = vmatpush1.bf16.msra.mxu0 0
      %3096 = vmatprep.subr.bf16.mxu0 0
      %3097 = vmatpush1.bf16.msra.mxu0 0
      %3098 = vmatprep.subr.bf16.mxu0 0
      %3099 = vmatpush1.bf16.msra.mxu0 0
      %3100 = vmatprep.subr.bf16.mxu0 0
      %3101 = vmatpush1.bf16.msra.mxu0 0
      %3102 = vmatprep.subr.bf16.mxu0 0
      %3103 = vmatpush1.bf16.msra.mxu0 0
      %3104 = vmatprep.subr.bf16.mxu0 0
      %3105 = vmatpush1.bf16.msra.mxu0 0
      %3106 = vmatprep.subr.bf16.mxu0 0
      %3107 = vmatpush1.bf16.msra.mxu0 0
      %3108 = vmatprep.subr.bf16.mxu0 0
      %3109 = vmatpush1.bf16.msra.mxu0 %v3092
      %3110 = vmatprep.subr.bf16.mxu0 0
      %3111 = vmatpush2.bf16.msra.mxu0 0
      %3112 = vmatprep.subr.bf16.mxu0 0
      %3113 = vmatpush2.bf16.msra.mxu0 0
      %3114 = vmatprep.subr.bf16.mxu0 0
      %3115 = vmatpush2.bf16.msra.mxu0 0
      %3116 = vmatprep.subr.bf16.mxu0 0
      %3117 = vmatpush2.bf16.msra.mxu0 0
      %3118 = vmatprep.subr.bf16.mxu0 0
      %3119 = vmatpush2.bf16.msra.mxu0 0
      %3120 = vmatprep.subr.bf16.mxu0 0
      %3121 = vmatpush2.bf16.msra.mxu0 0
      %3122 = vmatprep.subr.bf16.mxu0 0
      %3123 = vmatpush2.bf16.msra.mxu0 0
      %3124 = vmatprep.subr.bf16.mxu0 0
      %3125 = vmatpush2.bf16.msra.mxu0 0
      %3126 = vmatprep.mubr.bf16.mxu0 0
      %3127 = vmatmul.mubr.bf16.gmra.mxu0 %v3043
      %v3128 = vpop.f32.mrf.mxu0
      %v3129 = vadd.f32 %v3034, %v3128
      %v3130 = vpop.f32.mrf.mxu0
      %v3131 = vpop.f32.mrf.mxu0
      %v3132 = vadd.f32 %v3034, %v3131
      %v3133 = vpop.f32.mrf.mxu0
      %3134 = vmatprep.mubr.bf16.mxu0 0
      %3135 = vmatmul.mubr.bf16.gmra.mxu0 %v3046
      %v3136 = vpop.f32.mrf.mxu0
      %v3137 = vadd.f32 %v3034, %v3136
      %v3138 = vpop.f32.mrf.mxu0
      %v3139 = vpop.f32.mrf.mxu0
      %v3140 = vadd.f32 %v3034, %v3139
      %v3141 = vpop.f32.mrf.mxu0
      %3142 = vmatprep.mubr.bf16.mxu0 0
      %3143 = vmatmul.mubr.bf16.gmra.mxu0 %v3049
      %v3144 = vpop.f32.mrf.mxu0
      %v3145 = vadd.f32 %v3034, %v3144
      %v3146 = vpop.f32.mrf.mxu0
      %v3147 = vpop.f32.mrf.mxu0
      %v3148 = vadd.f32 %v3034, %v3147
      %v3149 = vpop.f32.mrf.mxu0
      %3150 = vmatprep.mubr.bf16.mxu0 0
      %3151 = vmatmul.mubr.bf16.gmra.mxu0 %v3052
      %v3152 = vpop.f32.mrf.mxu0
      %v3153 = vadd.f32 %v3034, %v3152
      %v3154 = vpop.f32.mrf.mxu0
      %v3155 = vpop.f32.mrf.mxu0
      %v3156 = vadd.f32 %v3034, %v3155
      %v3157 = vpop.f32.mrf.mxu0
      %3158 = vmatprep.mubr.bf16.mxu0 0
      %3159 = vmatmul.mubr.bf16.gmra.mxu0 %v3055
      %v3160 = vpop.f32.mrf.mxu0
      %v3161 = vadd.f32 %v3034, %v3160
      %v3162 = vpop.f32.mrf.mxu0
      %v3163 = vpop.f32.mrf.mxu0
      %v3164 = vadd.f32 %v3034, %v3163
      %v3165 = vpop.f32.mrf.mxu0
      %3166 = vmatprep.mubr.bf16.mxu0 0
      %3167 = vmatmul.mubr.bf16.gmra.mxu0 %v3058
      %v3168 = vpop.f32.mrf.mxu0
      %v3169 = vadd.f32 %v3034, %v3168
      %v3170 = vpop.f32.mrf.mxu0
      %v3171 = vpop.f32.mrf.mxu0
      %v3172 = vadd.f32 %v3034, %v3171
      %v3173 = vpop.f32.mrf.mxu0
      %3174 = vmatprep.mubr.bf16.mxu0 0
      %3175 = vmatmul.mubr.bf16.gmra.mxu0 %v3061
      %v3176 = vpop.f32.mrf.mxu0
      %v3177 = vadd.f32 %v3034, %v3176
      %v3178 = vpop.f32.mrf.mxu0
      %v3179 = vpop.f32.mrf.mxu0
      %v3180 = vadd.f32 %v3034, %v3179
      %v3181 = vpop.f32.mrf.mxu0
      %3182 = vmatprep.mubr.bf16.mxu0 0
      %3183 = vmatmul.mubr.bf16.gmra.mxu0 %v3064
      %v3184 = vpop.f32.mrf.mxu0
      %v3185 = vadd.f32 %v3034, %v3184
      %v3186 = vpop.f32.mrf.mxu0
      %v3187 = vpop.f32.mrf.mxu0
      %v3188 = vadd.f32 %v3034, %v3187
      %v3189 = vpop.f32.mrf.mxu0
      %3190 = vmatprep.mubr.bf16.mxu0 0
      %3191 = vmatmul.mubr.bf16.gmra.mxu0 %v3067
      %v3192 = vpop.f32.mrf.mxu0
      %v3193 = vadd.f32 %v3034, %v3192
      %v3194 = vpop.f32.mrf.mxu0
      %v3195 = vpop.f32.mrf.mxu0
      %v3196 = vadd.f32 %v3034, %v3195
      %v3197 = vpop.f32.mrf.mxu0
      %3198 = vmatprep.mubr.bf16.mxu0 0
      %3199 = vmatmul.mubr.bf16.gmra.mxu0 %v3070
      %v3200 = vpop.f32.mrf.mxu0
      %v3201 = vadd.f32 %v3034, %v3200
      %v3202 = vpop.f32.mrf.mxu0
      %v3203 = vpop.f32.mrf.mxu0
      %v3204 = vadd.f32 %v3034, %v3203
      %v3205 = vpop.f32.mrf.mxu0
      %3206 = vmatprep.mubr.bf16.mxu0 0
      %3207 = vmatmul.mubr.bf16.gmra.mxu0 %v3073
      %v3208 = vpop.f32.mrf.mxu0
      %v3209 = vadd.f32 %v3034, %v3208
      %v3210 = vpop.f32.mrf.mxu0
      %v3211 = vpop.f32.mrf.mxu0
      %v3212 = vadd.f32 %v3034, %v3211
      %v3213 = vpop.f32.mrf.mxu0
      %3214 = vmatprep.mubr.bf16.mxu0 0
      %3215 = vmatmul.mubr.bf16.gmra.mxu0 %v3076
      %v3216 = vpop.f32.mrf.mxu0
      %v3217 = vadd.f32 %v3034, %v3216
      %v3218 = vpop.f32.mrf.mxu0
      %v3219 = vpop.f32.mrf.mxu0
      %v3220 = vadd.f32 %v3034, %v3219
      %v3221 = vpop.f32.mrf.mxu0
      %3222 = vmatprep.mubr.bf16.mxu0 0
      %3223 = vmatmul.mubr.bf16.gmra.mxu0 %v3079
      %v3224 = vpop.f32.mrf.mxu0
      %v3225 = vadd.f32 %v3034, %v3224
      %v3226 = vpop.f32.mrf.mxu0
      %v3227 = vpop.f32.mrf.mxu0
      %v3228 = vadd.f32 %v3034, %v3227
      %v3229 = vpop.f32.mrf.mxu0
      %3230 = vmatprep.mubr.bf16.mxu0 0
      %3231 = vmatmul.mubr.bf16.gmra.mxu0 %v3082
      %v3232 = vpop.f32.mrf.mxu0
      %v3233 = vadd.f32 %v3034, %v3232
      %v3234 = vpop.f32.mrf.mxu0
      %v3235 = vpop.f32.mrf.mxu0
      %v3236 = vadd.f32 %v3034, %v3235
      %v3237 = vpop.f32.mrf.mxu0
      %3238 = vmatprep.mubr.bf16.mxu0 0
      %3239 = vmatmul.mubr.bf16.gmra.mxu0 %v3085
      %v3240 = vpop.f32.mrf.mxu0
      %v3241 = vadd.f32 %v3034, %v3240
      %v3242 = vpop.f32.mrf.mxu0
      %v3243 = vpop.f32.mrf.mxu0
      %v3244 = vadd.f32 %v3034, %v3243
      %v3245 = vpop.f32.mrf.mxu0
      %3246 = vmatprep.mubr.bf16.mxu0 0
      %3247 = vmatmul.mubr.bf16.gmra.mxu0 %v3088
      %v3248 = vpop.f32.mrf.mxu0
      %v3249 = vadd.f32 %v3034, %v3248
      %v3250 = vpop.f32.mrf.mxu0
      %v3251 = vpop.f32.mrf.mxu0
      %v3252 = vadd.f32 %v3034, %v3251
      %v3253 = vpop.f32.mrf.mxu0
      %3254 = vdwg.mxu0
      %vm3255 = vcmask 23552
      %3256 = vst.msk [vmem:[%s589] sm:$0xff] %vm3255, %v3129
      %3257 = vst.msk [vmem:[%s589 + $0x8] sm:$0xff] %vm3255, %v3132
      %3258 = vst.msk [vmem:[%s589 + $0x10] sm:$0xff] %vm3255, %v3137
      %3259 = vst.msk [vmem:[%s589 + $0x18] sm:$0xff] %vm3255, %v3140
      %3260 = vst.msk [vmem:[%s589 + $0x20] sm:$0xff] %vm3255, %v3145
      %3261 = vst.msk [vmem:[%s589 + $0x28] sm:$0xff] %vm3255, %v3148
      %3262 = vst.msk [vmem:[%s589 + $0x30] sm:$0xff] %vm3255, %v3153
      %3263 = vst.msk [vmem:[%s589 + $0x38] sm:$0xff] %vm3255, %v3156
      %3264 = vst.msk [vmem:[%s589 + $0x40] sm:$0xff] %vm3255, %v3161
      %3265 = vst.msk [vmem:[%s589 + $0x48] sm:$0xff] %vm3255, %v3164
      %3266 = vst.msk [vmem:[%s589 + $0x50] sm:$0xff] %vm3255, %v3169
      %3267 = vst.msk [vmem:[%s589 + $0x58] sm:$0xff] %vm3255, %v3172
      %3268 = vst.msk [vmem:[%s589 + $0x60] sm:$0xff] %vm3255, %v3177
      %3269 = vst.msk [vmem:[%s589 + $0x68] sm:$0xff] %vm3255, %v3180
      %3270 = vst.msk [vmem:[%s589 + $0x70] sm:$0xff] %vm3255, %v3185
      %3271 = vst.msk [vmem:[%s589 + $0x78] sm:$0xff] %vm3255, %v3188
      %3272 = vst.msk [vmem:[%s589 + $0x80] sm:$0xff] %vm3255, %v3193
      %3273 = vst.msk [vmem:[%s589 + $0x88] sm:$0xff] %vm3255, %v3196
      %3274 = vst.msk [vmem:[%s589 + $0x90] sm:$0xff] %vm3255, %v3201
      %3275 = vst.msk [vmem:[%s589 + $0x98] sm:$0xff] %vm3255, %v3204
      %3276 = vst.msk [vmem:[%s589 + $0xa0] sm:$0xff] %vm3255, %v3209
      %3277 = vst.msk [vmem:[%s589 + $0xa8] sm:$0xff] %vm3255, %v3212
      %3278 = vst.msk [vmem:[%s589 + $0xb0] sm:$0xff] %vm3255, %v3217
      %3279 = vst.msk [vmem:[%s589 + $0xb8] sm:$0xff] %vm3255, %v3220
      %3280 = vst.msk [vmem:[%s589 + $0xc0] sm:$0xff] %vm3255, %v3225
      %3281 = vst.msk [vmem:[%s589 + $0xc8] sm:$0xff] %vm3255, %v3228
      %3282 = vst.msk [vmem:[%s589 + $0xd0] sm:$0xff] %vm3255, %v3233
      %3283 = vst.msk [vmem:[%s589 + $0xd8] sm:$0xff] %vm3255, %v3236
      %3284 = vst.msk [vmem:[%s589 + $0xe0] sm:$0xff] %vm3255, %v3241
      %3285 = vst.msk [vmem:[%s589 + $0xe8] sm:$0xff] %vm3255, %v3244
      %3286 = vst.msk [vmem:[%s589 + $0xf0] sm:$0xff] %vm3255, %v3249
      %3287 = vst.msk [vmem:[%s589 + $0xf8] sm:$0xff] %vm3255, %v3252
      %v3288 = vld [vmem:[%s9] sm:$0xf]
      %v3289 = vld [vmem:[%s9 + $0x4] sm:$0x3]
      %v3290 = vld [vmem:[%s10] sm:$0x1]
      %v3292 = vlaneseq
      %v3293 = vshrl.u32 %v3292, 7
      %v3294 = vsub.s32 0, %v3293
      %v3295 = vrot.slane %v3290, %v3294
      %v3299 = vunpack.c.l.b16 %v3288
      %v3300 = vunpack.c.l.b16 %v3289
      %v3301 = vpack.c.b16 %v3300, %v3299
      %v3303 = vsel %vm3090, %v3301, 0
      %3305 = vmatprep.subr.bf16.mxu0 0
      %3306 = vmatpush1.bf16.msra.mxu0 0
      %3307 = vmatprep.subr.bf16.mxu0 0
      %3308 = vmatpush1.bf16.msra.mxu0 0
      %3309 = vmatprep.subr.bf16.mxu0 0
      %3310 = vmatpush1.bf16.msra.mxu0 0
      %3311 = vmatprep.subr.bf16.mxu0 0
      %3312 = vmatpush1.bf16.msra.mxu0 0
      %3313 = vmatprep.subr.bf16.mxu0 0
      %3314 = vmatpush1.bf16.msra.mxu0 0
      %3315 = vmatprep.subr.bf16.mxu0 0
      %3316 = vmatpush1.bf16.msra.mxu0 0
      %3317 = vmatprep.subr.bf16.mxu0 0
      %3318 = vmatpush1.bf16.msra.mxu0 0
      %3319 = vmatprep.subr.bf16.mxu0 0
      %3320 = vmatpush1.bf16.msra.mxu0 %v3303
      %3321 = vmatprep.subr.bf16.mxu0 0
      %3322 = vmatpush2.bf16.msra.mxu0 0
      %3323 = vmatprep.subr.bf16.mxu0 0
      %3324 = vmatpush2.bf16.msra.mxu0 0
      %3325 = vmatprep.subr.bf16.mxu0 0
      %3326 = vmatpush2.bf16.msra.mxu0 0
      %3327 = vmatprep.subr.bf16.mxu0 0
      %3328 = vmatpush2.bf16.msra.mxu0 0
      %3329 = vmatprep.subr.bf16.mxu0 0
      %3330 = vmatpush2.bf16.msra.mxu0 0
      %3331 = vmatprep.subr.bf16.mxu0 0
      %3332 = vmatpush2.bf16.msra.mxu0 0
      %3333 = vmatprep.subr.bf16.mxu0 0
      %3334 = vmatpush2.bf16.msra.mxu0 0
      %3335 = vmatprep.subr.bf16.mxu0 0
      %3336 = vmatpush2.bf16.msra.mxu0 0
      %3337 = vmatprep.mubr.bf16.mxu0 0
      %3338 = vmatmul.mubr.bf16.gmra.mxu0 %v3043
      %v3339 = vpop.f32.mrf.mxu0
      %v3340 = vadd.f32 %v3295, %v3339
      %v3341 = vpop.f32.mrf.mxu0
      %v3342 = vpop.f32.mrf.mxu0
      %v3343 = vadd.f32 %v3295, %v3342
      %v3344 = vpop.f32.mrf.mxu0
      %3345 = vmatprep.mubr.bf16.mxu0 0
      %3346 = vmatmul.mubr.bf16.gmra.mxu0 %v3046
      %v3347 = vpop.f32.mrf.mxu0
      %v3348 = vadd.f32 %v3295, %v3347
      %v3349 = vpop.f32.mrf.mxu0
      %v3350 = vpop.f32.mrf.mxu0
      %v3351 = vadd.f32 %v3295, %v3350
      %v3352 = vpop.f32.mrf.mxu0
      %3353 = vmatprep.mubr.bf16.mxu0 0
      %3354 = vmatmul.mubr.bf16.gmra.mxu0 %v3049
      %v3355 = vpop.f32.mrf.mxu0
      %v3356 = vadd.f32 %v3295, %v3355
      %v3357 = vpop.f32.mrf.mxu0
      %v3358 = vpop.f32.mrf.mxu0
      %v3359 = vadd.f32 %v3295, %v3358
      %v3360 = vpop.f32.mrf.mxu0
      %3361 = vmatprep.mubr.bf16.mxu0 0
      %3362 = vmatmul.mubr.bf16.gmra.mxu0 %v3052
      %v3363 = vpop.f32.mrf.mxu0
      %v3364 = vadd.f32 %v3295, %v3363
      %v3365 = vpop.f32.mrf.mxu0
      %v3366 = vpop.f32.mrf.mxu0
      %v3367 = vadd.f32 %v3295, %v3366
      %v3368 = vpop.f32.mrf.mxu0
      %3369 = vmatprep.mubr.bf16.mxu0 0
      %3370 = vmatmul.mubr.bf16.gmra.mxu0 %v3055
      %v3371 = vpop.f32.mrf.mxu0
      %v3372 = vadd.f32 %v3295, %v3371
      %v3373 = vpop.f32.mrf.mxu0
      %v3374 = vpop.f32.mrf.mxu0
      %v3375 = vadd.f32 %v3295, %v3374
      %v3376 = vpop.f32.mrf.mxu0
      %3377 = vmatprep.mubr.bf16.mxu0 0
      %3378 = vmatmul.mubr.bf16.gmra.mxu0 %v3058
      %v3379 = vpop.f32.mrf.mxu0
      %v3380 = vadd.f32 %v3295, %v3379
      %v3381 = vpop.f32.mrf.mxu0
      %v3382 = vpop.f32.mrf.mxu0
      %v3383 = vadd.f32 %v3295, %v3382
      %v3384 = vpop.f32.mrf.mxu0
      %3385 = vmatprep.mubr.bf16.mxu0 0
      %3386 = vmatmul.mubr.bf16.gmra.mxu0 %v3061
      %v3387 = vpop.f32.mrf.mxu0
      %v3388 = vadd.f32 %v3295, %v3387
      %v3389 = vpop.f32.mrf.mxu0
      %v3390 = vpop.f32.mrf.mxu0
      %v3391 = vadd.f32 %v3295, %v3390
      %v3392 = vpop.f32.mrf.mxu0
      %3393 = vmatprep.mubr.bf16.mxu0 0
      %3394 = vmatmul.mubr.bf16.gmra.mxu0 %v3064
      %v3395 = vpop.f32.mrf.mxu0
      %v3396 = vadd.f32 %v3295, %v3395
      %v3397 = vpop.f32.mrf.mxu0
      %v3398 = vpop.f32.mrf.mxu0
      %v3399 = vadd.f32 %v3295, %v3398
      %v3400 = vpop.f32.mrf.mxu0
      %3401 = vmatprep.mubr.bf16.mxu0 0
      %3402 = vmatmul.mubr.bf16.gmra.mxu0 %v3067
      %v3403 = vpop.f32.mrf.mxu0
      %v3404 = vadd.f32 %v3295, %v3403
      %v3405 = vpop.f32.mrf.mxu0
      %v3406 = vpop.f32.mrf.mxu0
      %v3407 = vadd.f32 %v3295, %v3406
      %v3408 = vpop.f32.mrf.mxu0
      %3409 = vmatprep.mubr.bf16.mxu0 0
      %3410 = vmatmul.mubr.bf16.gmra.mxu0 %v3070
      %v3411 = vpop.f32.mrf.mxu0
      %v3412 = vadd.f32 %v3295, %v3411
      %v3413 = vpop.f32.mrf.mxu0
      %v3414 = vpop.f32.mrf.mxu0
      %v3415 = vadd.f32 %v3295, %v3414
      %v3416 = vpop.f32.mrf.mxu0
      %3417 = vmatprep.mubr.bf16.mxu0 0
      %3418 = vmatmul.mubr.bf16.gmra.mxu0 %v3073
      %v3419 = vpop.f32.mrf.mxu0
      %v3420 = vadd.f32 %v3295, %v3419
      %v3421 = vpop.f32.mrf.mxu0
      %v3422 = vpop.f32.mrf.mxu0
      %v3423 = vadd.f32 %v3295, %v3422
      %v3424 = vpop.f32.mrf.mxu0
      %3425 = vmatprep.mubr.bf16.mxu0 0
      %3426 = vmatmul.mubr.bf16.gmra.mxu0 %v3076
      %v3427 = vpop.f32.mrf.mxu0
      %v3428 = vadd.f32 %v3295, %v3427
      %v3429 = vpop.f32.mrf.mxu0
      %v3430 = vpop.f32.mrf.mxu0
      %v3431 = vadd.f32 %v3295, %v3430
      %v3432 = vpop.f32.mrf.mxu0
      %3433 = vmatprep.mubr.bf16.mxu0 0
      %3434 = vmatmul.mubr.bf16.gmra.mxu0 %v3079
      %v3435 = vpop.f32.mrf.mxu0
      %v3436 = vadd.f32 %v3295, %v3435
      %v3437 = vpop.f32.mrf.mxu0
      %v3438 = vpop.f32.mrf.mxu0
      %v3439 = vadd.f32 %v3295, %v3438
      %v3440 = vpop.f32.mrf.mxu0
      %3441 = vmatprep.mubr.bf16.mxu0 0
      %3442 = vmatmul.mubr.bf16.gmra.mxu0 %v3082
      %v3443 = vpop.f32.mrf.mxu0
      %v3444 = vadd.f32 %v3295, %v3443
      %v3445 = vpop.f32.mrf.mxu0
      %v3446 = vpop.f32.mrf.mxu0
      %v3447 = vadd.f32 %v3295, %v3446
      %v3448 = vpop.f32.mrf.mxu0
      %3449 = vmatprep.mubr.bf16.mxu0 0
      %3450 = vmatmul.mubr.bf16.gmra.mxu0 %v3085
      %v3451 = vpop.f32.mrf.mxu0
      %v3452 = vadd.f32 %v3295, %v3451
      %v3453 = vpop.f32.mrf.mxu0
      %v3454 = vpop.f32.mrf.mxu0
      %v3455 = vadd.f32 %v3295, %v3454
      %v3456 = vpop.f32.mrf.mxu0
      %3457 = vmatprep.mubr.bf16.mxu0 0
      %3458 = vmatmul.mubr.bf16.gmra.mxu0 %v3088
      %v3459 = vpop.f32.mrf.mxu0
      %v3460 = vadd.f32 %v3295, %v3459
      %v3461 = vpop.f32.mrf.mxu0
      %v3462 = vpop.f32.mrf.mxu0
      %v3463 = vadd.f32 %v3295, %v3462
      %v3464 = vpop.f32.mrf.mxu0
      %3465 = vdwg.mxu0
      %v3466 = vtanh.pop %v3340
      %v3467 = vtanh.pop %v3343
      %v3468 = vtanh.pop %v3348
      %v3469 = vtanh.pop %v3351
      %v3470 = vtanh.pop %v3356
      %v3471 = vtanh.pop %v3359
      %v3472 = vtanh.pop %v3364
      %v3473 = vtanh.pop %v3367
      %v3474 = vtanh.pop %v3372
      %v3475 = vtanh.pop %v3375
      %v3476 = vtanh.pop %v3380
      %v3477 = vtanh.pop %v3383
      %v3478 = vtanh.pop %v3388
      %v3479 = vtanh.pop %v3391
      %v3480 = vtanh.pop %v3396
      %v3481 = vtanh.pop %v3399
      %v3482 = vtanh.pop %v3404
      %v3483 = vtanh.pop %v3407
      %v3484 = vtanh.pop %v3412
      %v3485 = vtanh.pop %v3415
      %v3486 = vtanh.pop %v3420
      %v3487 = vtanh.pop %v3423
      %v3488 = vtanh.pop %v3428
      %v3489 = vtanh.pop %v3431
      %v3490 = vtanh.pop %v3436
      %v3491 = vtanh.pop %v3439
      %v3492 = vtanh.pop %v3444
      %v3493 = vtanh.pop %v3447
      %v3494 = vtanh.pop %v3452
      %v3495 = vtanh.pop %v3455
      %v3496 = vtanh.pop %v3460
      %v3497 = vtanh.pop %v3463
      %v3498 = vpack.c.bf16 %v3467, %v3466
      %v3499 = vpack.c.bf16 %v3469, %v3468
      %v3500 = vpack.c.bf16 %v3471, %v3470
      %v3501 = vpack.c.bf16 %v3473, %v3472
      %v3502 = vpack.c.bf16 %v3475, %v3474
      %v3503 = vpack.c.bf16 %v3477, %v3476
      %v3504 = vpack.c.bf16 %v3479, %v3478
      %v3505 = vpack.c.bf16 %v3481, %v3480
      %v3506 = vpack.c.bf16 %v3483, %v3482
      %v3507 = vpack.c.bf16 %v3485, %v3484
      %v3508 = vpack.c.bf16 %v3487, %v3486
      %v3509 = vpack.c.bf16 %v3489, %v3488
      %v3510 = vpack.c.bf16 %v3491, %v3490
      %v3511 = vpack.c.bf16 %v3493, %v3492
      %v3512 = vpack.c.bf16 %v3495, %v3494
      %v3513 = vpack.c.bf16 %v3497, %v3496
      %v3514 = vld [vmem:[%s11] sm:$0xf]
      %v3515 = vld [vmem:[%s11 + $0x4] sm:$0x3]
      %v3516 = vld [vmem:[%s12] sm:$0x1]
      %v3518 = vlaneseq
      %v3519 = vshrl.u32 %v3518, 7
      %v3520 = vsub.s32 0, %v3519
      %v3521 = vrot.slane %v3516, %v3520
      %v3525 = vunpack.c.l.b16 %v3514
      %v3526 = vunpack.c.l.b16 %v3515
      %v3527 = vpack.c.b16 %v3526, %v3525
      %v3529 = vsel %vm3041, %v3498, 0
      %v3532 = vsel %vm3041, %v3499, 0
      %v3535 = vsel %vm3041, %v3500, 0
      %v3538 = vsel %vm3041, %v3501, 0
      %v3541 = vsel %vm3041, %v3502, 0
      %v3544 = vsel %vm3041, %v3503, 0
      %v3547 = vsel %vm3041, %v3504, 0
      %v3550 = vsel %vm3041, %v3505, 0
      %v3553 = vsel %vm3041, %v3506, 0
      %v3556 = vsel %vm3041, %v3507, 0
      %v3559 = vsel %vm3041, %v3508, 0
      %v3562 = vsel %vm3041, %v3509, 0
      %v3565 = vsel %vm3041, %v3510, 0
      %v3568 = vsel %vm3041, %v3511, 0
      %v3571 = vsel %vm3041, %v3512, 0
      %v3574 = vsel %vm3041, %v3513, 0
      %v3577 = vsel %vm3090, %v3527, 0
      %3579 = vmatprep.subr.bf16.mxu0 0
      %3580 = vmatpush1.bf16.msra.mxu0 0
      %3581 = vmatprep.subr.bf16.mxu0 0
      %3582 = vmatpush1.bf16.msra.mxu0 0
      %3583 = vmatprep.subr.bf16.mxu0 0
      %3584 = vmatpush1.bf16.msra.mxu0 0
      %3585 = vmatprep.subr.bf16.mxu0 0
      %3586 = vmatpush1.bf16.msra.mxu0 0
      %3587 = vmatprep.subr.bf16.mxu0 0
      %3588 = vmatpush1.bf16.msra.mxu0 0
      %3589 = vmatprep.subr.bf16.mxu0 0
      %3590 = vmatpush1.bf16.msra.mxu0 0
      %3591 = vmatprep.subr.bf16.mxu0 0
      %3592 = vmatpush1.bf16.msra.mxu0 0
      %3593 = vmatprep.subr.bf16.mxu0 0
      %3594 = vmatpush1.bf16.msra.mxu0 %v3577
      %3595 = vmatprep.subr.bf16.mxu0 0
      %3596 = vmatpush2.bf16.msra.mxu0 0
      %3597 = vmatprep.subr.bf16.mxu0 0
      %3598 = vmatpush2.bf16.msra.mxu0 0
      %3599 = vmatprep.subr.bf16.mxu0 0
      %3600 = vmatpush2.bf16.msra.mxu0 0
      %3601 = vmatprep.subr.bf16.mxu0 0
      %3602 = vmatpush2.bf16.msra.mxu0 0
      %3603 = vmatprep.subr.bf16.mxu0 0
      %3604 = vmatpush2.bf16.msra.mxu0 0
      %3605 = vmatprep.subr.bf16.mxu0 0
      %3606 = vmatpush2.bf16.msra.mxu0 0
      %3607 = vmatprep.subr.bf16.mxu0 0
      %3608 = vmatpush2.bf16.msra.mxu0 0
      %3609 = vmatprep.subr.bf16.mxu0 0
      %3610 = vmatpush2.bf16.msra.mxu0 0
      %3611 = vmatprep.mubr.bf16.mxu0 0
      %3612 = vmatmul.mubr.bf16.gmra.mxu0 %v3529
      %v3613 = vpop.f32.mrf.mxu0
      %v3614 = vadd.f32 %v3521, %v3613
      %v3615 = vpop.f32.mrf.mxu0
      %v3616 = vpop.f32.mrf.mxu0
      %v3617 = vadd.f32 %v3521, %v3616
      %v3618 = vpop.f32.mrf.mxu0
      %3619 = vmatprep.mubr.bf16.mxu0 0
      %3620 = vmatmul.mubr.bf16.gmra.mxu0 %v3532
      %v3621 = vpop.f32.mrf.mxu0
      %v3622 = vadd.f32 %v3521, %v3621
      %v3623 = vpop.f32.mrf.mxu0
      %v3624 = vpop.f32.mrf.mxu0
      %v3625 = vadd.f32 %v3521, %v3624
      %v3626 = vpop.f32.mrf.mxu0
      %3627 = vmatprep.mubr.bf16.mxu0 0
      %3628 = vmatmul.mubr.bf16.gmra.mxu0 %v3535
      %v3629 = vpop.f32.mrf.mxu0
      %v3630 = vadd.f32 %v3521, %v3629
      %v3631 = vpop.f32.mrf.mxu0
      %v3632 = vpop.f32.mrf.mxu0
      %v3633 = vadd.f32 %v3521, %v3632
      %v3634 = vpop.f32.mrf.mxu0
      %3635 = vmatprep.mubr.bf16.mxu0 0
      %3636 = vmatmul.mubr.bf16.gmra.mxu0 %v3538
      %v3637 = vpop.f32.mrf.mxu0
      %v3638 = vadd.f32 %v3521, %v3637
      %v3639 = vpop.f32.mrf.mxu0
      %v3640 = vpop.f32.mrf.mxu0
      %v3641 = vadd.f32 %v3521, %v3640
      %v3642 = vpop.f32.mrf.mxu0
      %3643 = vmatprep.mubr.bf16.mxu0 0
      %3644 = vmatmul.mubr.bf16.gmra.mxu0 %v3541
      %v3645 = vpop.f32.mrf.mxu0
      %v3646 = vadd.f32 %v3521, %v3645
      %v3647 = vpop.f32.mrf.mxu0
      %v3648 = vpop.f32.mrf.mxu0
      %v3649 = vadd.f32 %v3521, %v3648
      %v3650 = vpop.f32.mrf.mxu0
      %3651 = vmatprep.mubr.bf16.mxu0 0
      %3652 = vmatmul.mubr.bf16.gmra.mxu0 %v3544
      %v3653 = vpop.f32.mrf.mxu0
      %v3654 = vadd.f32 %v3521, %v3653
      %v3655 = vpop.f32.mrf.mxu0
      %v3656 = vpop.f32.mrf.mxu0
      %v3657 = vadd.f32 %v3521, %v3656
      %v3658 = vpop.f32.mrf.mxu0
      %3659 = vmatprep.mubr.bf16.mxu0 0
      %3660 = vmatmul.mubr.bf16.gmra.mxu0 %v3547
      %v3661 = vpop.f32.mrf.mxu0
      %v3662 = vadd.f32 %v3521, %v3661
      %v3663 = vpop.f32.mrf.mxu0
      %v3664 = vpop.f32.mrf.mxu0
      %v3665 = vadd.f32 %v3521, %v3664
      %v3666 = vpop.f32.mrf.mxu0
      %3667 = vmatprep.mubr.bf16.mxu0 0
      %3668 = vmatmul.mubr.bf16.gmra.mxu0 %v3550
      %v3669 = vpop.f32.mrf.mxu0
      %v3670 = vadd.f32 %v3521, %v3669
      %v3671 = vpop.f32.mrf.mxu0
      %v3672 = vpop.f32.mrf.mxu0
      %v3673 = vadd.f32 %v3521, %v3672
      %v3674 = vpop.f32.mrf.mxu0
      %3675 = vmatprep.mubr.bf16.mxu0 0
      %3676 = vmatmul.mubr.bf16.gmra.mxu0 %v3553
      %v3677 = vpop.f32.mrf.mxu0
      %v3678 = vadd.f32 %v3521, %v3677
      %v3679 = vpop.f32.mrf.mxu0
      %v3680 = vpop.f32.mrf.mxu0
      %v3681 = vadd.f32 %v3521, %v3680
      %v3682 = vpop.f32.mrf.mxu0
      %3683 = vmatprep.mubr.bf16.mxu0 0
      %3684 = vmatmul.mubr.bf16.gmra.mxu0 %v3556
      %v3685 = vpop.f32.mrf.mxu0
      %v3686 = vadd.f32 %v3521, %v3685
      %v3687 = vpop.f32.mrf.mxu0
      %v3688 = vpop.f32.mrf.mxu0
      %v3689 = vadd.f32 %v3521, %v3688
      %v3690 = vpop.f32.mrf.mxu0
      %3691 = vmatprep.mubr.bf16.mxu0 0
      %3692 = vmatmul.mubr.bf16.gmra.mxu0 %v3559
      %v3693 = vpop.f32.mrf.mxu0
      %v3694 = vadd.f32 %v3521, %v3693
      %v3695 = vpop.f32.mrf.mxu0
      %v3696 = vpop.f32.mrf.mxu0
      %v3697 = vadd.f32 %v3521, %v3696
      %v3698 = vpop.f32.mrf.mxu0
      %3699 = vmatprep.mubr.bf16.mxu0 0
      %3700 = vmatmul.mubr.bf16.gmra.mxu0 %v3562
      %v3701 = vpop.f32.mrf.mxu0
      %v3702 = vadd.f32 %v3521, %v3701
      %v3703 = vpop.f32.mrf.mxu0
      %v3704 = vpop.f32.mrf.mxu0
      %v3705 = vadd.f32 %v3521, %v3704
      %v3706 = vpop.f32.mrf.mxu0
      %3707 = vmatprep.mubr.bf16.mxu0 0
      %3708 = vmatmul.mubr.bf16.gmra.mxu0 %v3565
      %v3709 = vpop.f32.mrf.mxu0
      %v3710 = vadd.f32 %v3521, %v3709
      %v3711 = vpop.f32.mrf.mxu0
      %v3712 = vpop.f32.mrf.mxu0
      %v3713 = vadd.f32 %v3521, %v3712
      %v3714 = vpop.f32.mrf.mxu0
      %3715 = vmatprep.mubr.bf16.mxu0 0
      %3716 = vmatmul.mubr.bf16.gmra.mxu0 %v3568
      %v3717 = vpop.f32.mrf.mxu0
      %v3718 = vadd.f32 %v3521, %v3717
      %v3719 = vpop.f32.mrf.mxu0
      %v3720 = vpop.f32.mrf.mxu0
      %v3721 = vadd.f32 %v3521, %v3720
      %v3722 = vpop.f32.mrf.mxu0
      %3723 = vmatprep.mubr.bf16.mxu0 0
      %3724 = vmatmul.mubr.bf16.gmra.mxu0 %v3571
      %v3725 = vpop.f32.mrf.mxu0
      %v3726 = vadd.f32 %v3521, %v3725
      %v3727 = vpop.f32.mrf.mxu0
      %v3728 = vpop.f32.mrf.mxu0
      %v3729 = vadd.f32 %v3521, %v3728
      %v3730 = vpop.f32.mrf.mxu0
      %3731 = vmatprep.mubr.bf16.mxu0 0
      %3732 = vmatmul.mubr.bf16.gmra.mxu0 %v3574
      %v3733 = vpop.f32.mrf.mxu0
      %v3734 = vadd.f32 %v3521, %v3733
      %v3735 = vpop.f32.mrf.mxu0
      %v3736 = vpop.f32.mrf.mxu0
      %v3737 = vadd.f32 %v3521, %v3736
      %v3738 = vpop.f32.mrf.mxu0
      %3739 = vdwg.mxu0
      %v3740 = vtanh.pop %v3614
      %v3741 = vtanh.pop %v3617
      %v3742 = vtanh.pop %v3622
      %v3743 = vtanh.pop %v3625
      %v3744 = vtanh.pop %v3630
      %v3745 = vtanh.pop %v3633
      %v3746 = vtanh.pop %v3638
      %v3747 = vtanh.pop %v3641
      %v3748 = vtanh.pop %v3646
      %v3749 = vtanh.pop %v3649
      %v3750 = vtanh.pop %v3654
      %v3751 = vtanh.pop %v3657
      %v3752 = vtanh.pop %v3662
      %v3753 = vtanh.pop %v3665
      %v3754 = vtanh.pop %v3670
      %v3755 = vtanh.pop %v3673
      %v3756 = vtanh.pop %v3678
      %v3757 = vtanh.pop %v3681
      %v3758 = vtanh.pop %v3686
      %v3759 = vtanh.pop %v3689
      %v3760 = vtanh.pop %v3694
      %v3761 = vtanh.pop %v3697
      %v3762 = vtanh.pop %v3702
      %v3763 = vtanh.pop %v3705
      %v3764 = vtanh.pop %v3710
      %v3765 = vtanh.pop %v3713
      %v3766 = vtanh.pop %v3718
      %v3767 = vtanh.pop %v3721
      %v3768 = vtanh.pop %v3726
      %v3769 = vtanh.pop %v3729
      %v3770 = vtanh.pop %v3734
      %v3771 = vtanh.pop %v3737
      %v3772 = vpack.c.bf16 %v3741, %v3740
      %v3773 = vpack.c.bf16 %v3743, %v3742
      %v3774 = vpack.c.bf16 %v3745, %v3744
      %v3775 = vpack.c.bf16 %v3747, %v3746
      %v3776 = vpack.c.bf16 %v3749, %v3748
      %v3777 = vpack.c.bf16 %v3751, %v3750
      %v3778 = vpack.c.bf16 %v3753, %v3752
      %v3779 = vpack.c.bf16 %v3755, %v3754
      %v3780 = vpack.c.bf16 %v3757, %v3756
      %v3781 = vpack.c.bf16 %v3759, %v3758
      %v3782 = vpack.c.bf16 %v3761, %v3760
      %v3783 = vpack.c.bf16 %v3763, %v3762
      %v3784 = vpack.c.bf16 %v3765, %v3764
      %v3785 = vpack.c.bf16 %v3767, %v3766
      %v3786 = vpack.c.bf16 %v3769, %v3768
      %v3787 = vpack.c.bf16 %v3771, %v3770
      %v3788 = vld [vmem:[%s13] sm:$0xf]
      %v3789 = vld [vmem:[%s13 + $0x4] sm:$0xf]
      %v3790 = vld [vmem:[%s13 + $0x8] sm:$0xf]
      %v3791 = vld [vmem:[%s13 + $0xc] sm:$0xf]
      %v3792 = vld [vmem:[%s13 + $0x10] sm:$0xf]
      %v3793 = vld [vmem:[%s13 + $0x14] sm:$0xf]
      %v3794 = vld [vmem:[%s13 + $0x18] sm:$0xf]
      %v3795 = vld [vmem:[%s13 + $0x1c] sm:$0xf]
      %v3796 = vld [vmem:[%s14] sm:$0x1]
      %v3798 = vlaneseq
      %v3799 = vshrl.u32 %v3798, 7
      %v3800 = vsub.s32 0, %v3799
      %v3801 = vrot.slane %v3796, %v3800
      %v3811 = vunpack.c.l.b16 %v3788
      %v3812 = vunpack.c.l.b16 %v3789
      %v3813 = vunpack.c.l.b16 %v3790
      %v3814 = vunpack.c.l.b16 %v3791
      %v3815 = vunpack.c.l.b16 %v3792
      %v3816 = vunpack.c.l.b16 %v3793
      %v3817 = vunpack.c.l.b16 %v3794
      %v3818 = vunpack.c.l.b16 %v3795
      %v3819 = vpack.c.b16 %v3812, %v3811
      %v3820 = vpack.c.b16 %v3814, %v3813
      %v3821 = vpack.c.b16 %v3816, %v3815
      %v3822 = vpack.c.b16 %v3818, %v3817
      %v3828 = vsel %vm2769, %v3772, 0
      %v3831 = vsel %vm2769, %v3773, 0
      %v3834 = vsel %vm2769, %v3774, 0
      %v3837 = vsel %vm2769, %v3775, 0
      %v3840 = vsel %vm2769, %v3776, 0
      %v3843 = vsel %vm2769, %v3777, 0
      %v3846 = vsel %vm2769, %v3778, 0
      %v3849 = vsel %vm2769, %v3779, 0
      %v3852 = vsel %vm2769, %v3780, 0
      %v3855 = vsel %vm2769, %v3781, 0
      %v3858 = vsel %vm2769, %v3782, 0
      %v3861 = vsel %vm2769, %v3783, 0
      %v3864 = vsel %vm2769, %v3784, 0
      %v3867 = vsel %vm2769, %v3785, 0
      %v3870 = vsel %vm2769, %v3786, 0
      %v3873 = vsel %vm2769, %v3787, 0
      %3875 = vmatprep.subr.bf16.mxu0 0
      %3876 = vmatpush1.bf16.msra.mxu0 0
      %3877 = vmatprep.subr.bf16.mxu0 0
      %3878 = vmatpush1.bf16.msra.mxu0 0
      %3879 = vmatprep.subr.bf16.mxu0 0
      %3880 = vmatpush1.bf16.msra.mxu0 0
      %3881 = vmatprep.subr.bf16.mxu0 0
      %3882 = vmatpush1.bf16.msra.mxu0 0
      %3883 = vmatprep.subr.bf16.mxu0 0
      %3884 = vmatpush1.bf16.msra.mxu0 %v3822
      %3885 = vmatprep.subr.bf16.mxu0 0
      %3886 = vmatpush1.bf16.msra.mxu0 %v3821
      %3887 = vmatprep.subr.bf16.mxu0 0
      %3888 = vmatpush1.bf16.msra.mxu0 %v3820
      %3889 = vmatprep.subr.bf16.mxu0 0
      %3890 = vmatpush1.bf16.msra.mxu0 %v3819
      %3891 = vmatprep.subr.bf16.mxu0 0
      %3892 = vmatpush2.bf16.msra.mxu0 0
      %3893 = vmatprep.subr.bf16.mxu0 0
      %3894 = vmatpush2.bf16.msra.mxu0 0
      %3895 = vmatprep.subr.bf16.mxu0 0
      %3896 = vmatpush2.bf16.msra.mxu0 0
      %3897 = vmatprep.subr.bf16.mxu0 0
      %3898 = vmatpush2.bf16.msra.mxu0 0
      %3899 = vmatprep.subr.bf16.mxu0 0
      %3900 = vmatpush2.bf16.msra.mxu0 0
      %3901 = vmatprep.subr.bf16.mxu0 0
      %3902 = vmatpush2.bf16.msra.mxu0 0
      %3903 = vmatprep.subr.bf16.mxu0 0
      %3904 = vmatpush2.bf16.msra.mxu0 0
      %3905 = vmatprep.subr.bf16.mxu0 0
      %3906 = vmatpush2.bf16.msra.mxu0 0
      %3907 = vmatprep.mubr.bf16.mxu0 0
      %3908 = vmatmul.mubr.bf16.gmra.mxu0 %v3828
      %v3909 = vpop.f32.mrf.mxu0
      %v3910 = vadd.f32 %v3801, %v3909
      %v3911 = vpop.f32.mrf.mxu0
      %v3912 = vpop.f32.mrf.mxu0
      %v3913 = vadd.f32 %v3801, %v3912
      %v3914 = vpop.f32.mrf.mxu0
      %3915 = vmatprep.mubr.bf16.mxu0 0
      %3916 = vmatmul.mubr.bf16.gmra.mxu0 %v3831
      %v3917 = vpop.f32.mrf.mxu0
      %v3918 = vadd.f32 %v3801, %v3917
      %v3919 = vpop.f32.mrf.mxu0
      %v3920 = vpop.f32.mrf.mxu0
      %v3921 = vadd.f32 %v3801, %v3920
      %v3922 = vpop.f32.mrf.mxu0
      %3923 = vmatprep.mubr.bf16.mxu0 0
      %3924 = vmatmul.mubr.bf16.gmra.mxu0 %v3834
      %v3925 = vpop.f32.mrf.mxu0
      %v3926 = vadd.f32 %v3801, %v3925
      %v3927 = vpop.f32.mrf.mxu0
      %v3928 = vpop.f32.mrf.mxu0
      %v3929 = vadd.f32 %v3801, %v3928
      %v3930 = vpop.f32.mrf.mxu0
      %3931 = vmatprep.mubr.bf16.mxu0 0
      %3932 = vmatmul.mubr.bf16.gmra.mxu0 %v3837
      %v3933 = vpop.f32.mrf.mxu0
      %v3934 = vadd.f32 %v3801, %v3933
      %v3935 = vpop.f32.mrf.mxu0
      %v3936 = vpop.f32.mrf.mxu0
      %v3937 = vadd.f32 %v3801, %v3936
      %v3938 = vpop.f32.mrf.mxu0
      %3939 = vmatprep.mubr.bf16.mxu0 0
      %3940 = vmatmul.mubr.bf16.gmra.mxu0 %v3840
      %v3941 = vpop.f32.mrf.mxu0
      %v3942 = vadd.f32 %v3801, %v3941
      %v3943 = vpop.f32.mrf.mxu0
      %v3944 = vpop.f32.mrf.mxu0
      %v3945 = vadd.f32 %v3801, %v3944
      %v3946 = vpop.f32.mrf.mxu0
      %3947 = vmatprep.mubr.bf16.mxu0 0
      %3948 = vmatmul.mubr.bf16.gmra.mxu0 %v3843
      %v3949 = vpop.f32.mrf.mxu0
      %v3950 = vadd.f32 %v3801, %v3949
      %v3951 = vpop.f32.mrf.mxu0
      %v3952 = vpop.f32.mrf.mxu0
      %v3953 = vadd.f32 %v3801, %v3952
      %v3954 = vpop.f32.mrf.mxu0
      %3955 = vmatprep.mubr.bf16.mxu0 0
      %3956 = vmatmul.mubr.bf16.gmra.mxu0 %v3846
      %v3957 = vpop.f32.mrf.mxu0
      %v3958 = vadd.f32 %v3801, %v3957
      %v3959 = vpop.f32.mrf.mxu0
      %v3960 = vpop.f32.mrf.mxu0
      %v3961 = vadd.f32 %v3801, %v3960
      %v3962 = vpop.f32.mrf.mxu0
      %3963 = vmatprep.mubr.bf16.mxu0 0
      %3964 = vmatmul.mubr.bf16.gmra.mxu0 %v3849
      %v3965 = vpop.f32.mrf.mxu0
      %v3966 = vadd.f32 %v3801, %v3965
      %v3967 = vpop.f32.mrf.mxu0
      %v3968 = vpop.f32.mrf.mxu0
      %v3969 = vadd.f32 %v3801, %v3968
      %v3970 = vpop.f32.mrf.mxu0
      %3971 = vmatprep.mubr.bf16.mxu0 0
      %3972 = vmatmul.mubr.bf16.gmra.mxu0 %v3852
      %v3973 = vpop.f32.mrf.mxu0
      %v3974 = vadd.f32 %v3801, %v3973
      %v3975 = vpop.f32.mrf.mxu0
      %v3976 = vpop.f32.mrf.mxu0
      %v3977 = vadd.f32 %v3801, %v3976
      %v3978 = vpop.f32.mrf.mxu0
      %3979 = vmatprep.mubr.bf16.mxu0 0
      %3980 = vmatmul.mubr.bf16.gmra.mxu0 %v3855
      %v3981 = vpop.f32.mrf.mxu0
      %v3982 = vadd.f32 %v3801, %v3981
      %v3983 = vpop.f32.mrf.mxu0
      %v3984 = vpop.f32.mrf.mxu0
      %v3985 = vadd.f32 %v3801, %v3984
      %v3986 = vpop.f32.mrf.mxu0
      %3987 = vmatprep.mubr.bf16.mxu0 0
      %3988 = vmatmul.mubr.bf16.gmra.mxu0 %v3858
      %v3989 = vpop.f32.mrf.mxu0
      %v3990 = vadd.f32 %v3801, %v3989
      %v3991 = vpop.f32.mrf.mxu0
      %v3992 = vpop.f32.mrf.mxu0
      %v3993 = vadd.f32 %v3801, %v3992
      %v3994 = vpop.f32.mrf.mxu0
      %3995 = vmatprep.mubr.bf16.mxu0 0
      %3996 = vmatmul.mubr.bf16.gmra.mxu0 %v3861
      %v3997 = vpop.f32.mrf.mxu0
      %v3998 = vadd.f32 %v3801, %v3997
      %v3999 = vpop.f32.mrf.mxu0
      %v4000 = vpop.f32.mrf.mxu0
      %v4001 = vadd.f32 %v3801, %v4000
      %v4002 = vpop.f32.mrf.mxu0
      %4003 = vmatprep.mubr.bf16.mxu0 0
      %4004 = vmatmul.mubr.bf16.gmra.mxu0 %v3864
      %v4005 = vpop.f32.mrf.mxu0
      %v4006 = vadd.f32 %v3801, %v4005
      %v4007 = vpop.f32.mrf.mxu0
      %v4008 = vpop.f32.mrf.mxu0
      %v4009 = vadd.f32 %v3801, %v4008
      %v4010 = vpop.f32.mrf.mxu0
      %4011 = vmatprep.mubr.bf16.mxu0 0
      %4012 = vmatmul.mubr.bf16.gmra.mxu0 %v3867
      %v4013 = vpop.f32.mrf.mxu0
      %v4014 = vadd.f32 %v3801, %v4013
      %v4015 = vpop.f32.mrf.mxu0
      %v4016 = vpop.f32.mrf.mxu0
      %v4017 = vadd.f32 %v3801, %v4016
      %v4018 = vpop.f32.mrf.mxu0
      %4019 = vmatprep.mubr.bf16.mxu0 0
      %4020 = vmatmul.mubr.bf16.gmra.mxu0 %v3870
      %v4021 = vpop.f32.mrf.mxu0
      %v4022 = vadd.f32 %v3801, %v4021
      %v4023 = vpop.f32.mrf.mxu0
      %v4024 = vpop.f32.mrf.mxu0
      %v4025 = vadd.f32 %v3801, %v4024
      %v4026 = vpop.f32.mrf.mxu0
      %4027 = vmatprep.mubr.bf16.mxu0 0
      %4028 = vmatmul.mubr.bf16.gmra.mxu0 %v3873
      %v4029 = vpop.f32.mrf.mxu0
      %v4030 = vadd.f32 %v3801, %v4029
      %v4031 = vpop.f32.mrf.mxu0
      %v4032 = vpop.f32.mrf.mxu0
      %v4033 = vadd.f32 %v3801, %v4032
      %v4034 = vpop.f32.mrf.mxu0
      %4035 = vdwg.mxu0
      %v4036 = vtanh.pop %v3910
      %v4037 = vtanh.pop %v3913
      %v4038 = vtanh.pop %v3918
      %v4039 = vtanh.pop %v3921
      %v4040 = vtanh.pop %v3926
      %v4041 = vtanh.pop %v3929
      %v4042 = vtanh.pop %v3934
      %v4043 = vtanh.pop %v3937
      %v4044 = vtanh.pop %v3942
      %v4045 = vtanh.pop %v3945
      %v4046 = vtanh.pop %v3950
      %v4047 = vtanh.pop %v3953
      %v4048 = vtanh.pop %v3958
      %v4049 = vtanh.pop %v3961
      %v4050 = vtanh.pop %v3966
      %v4051 = vtanh.pop %v3969
      %v4052 = vtanh.pop %v3974
      %v4053 = vtanh.pop %v3977
      %v4054 = vtanh.pop %v3982
      %v4055 = vtanh.pop %v3985
      %v4056 = vtanh.pop %v3990
      %v4057 = vtanh.pop %v3993
      %v4058 = vtanh.pop %v3998
      %v4059 = vtanh.pop %v4001
      %v4060 = vtanh.pop %v4006
      %v4061 = vtanh.pop %v4009
      %v4062 = vtanh.pop %v4014
      %v4063 = vtanh.pop %v4017
      %v4064 = vtanh.pop %v4022
      %v4065 = vtanh.pop %v4025
      %v4066 = vtanh.pop %v4030
      %v4067 = vtanh.pop %v4033
      %v4068 = vpack.c.bf16 %v4037, %v4036
      %v4069 = vpack.c.bf16 %v4039, %v4038
      %v4070 = vpack.c.bf16 %v4041, %v4040
      %v4071 = vpack.c.bf16 %v4043, %v4042
      %v4072 = vpack.c.bf16 %v4045, %v4044
      %v4073 = vpack.c.bf16 %v4047, %v4046
      %v4074 = vpack.c.bf16 %v4049, %v4048
      %v4075 = vpack.c.bf16 %v4051, %v4050
      %v4076 = vpack.c.bf16 %v4053, %v4052
      %v4077 = vpack.c.bf16 %v4055, %v4054
      %v4078 = vpack.c.bf16 %v4057, %v4056
      %v4079 = vpack.c.bf16 %v4059, %v4058
      %v4080 = vpack.c.bf16 %v4061, %v4060
      %v4081 = vpack.c.bf16 %v4063, %v4062
      %v4082 = vpack.c.bf16 %v4065, %v4064
      %v4083 = vpack.c.bf16 %v4067, %v4066
      %v4084 = vld [vmem:[%s15] sm:$0xff]
      %v4085 = vld [vmem:[%s15 + $0x8] sm:$0xff]
      %v4086 = vld [vmem:[%s15 + $0x10] sm:$0xff]
      %v4087 = vld [vmem:[%s15 + $0x18] sm:$0xf]
      %v4088 = vld [vmem:[%s15 + $0x1c] sm:$0xff]
      %v4089 = vld [vmem:[%s15 + $0x24] sm:$0xff]
      %v4090 = vld [vmem:[%s15 + $0x2c] sm:$0xff]
      %v4091 = vld [vmem:[%s15 + $0x34] sm:$0xf]
      %v4092 = vld [vmem:[%s15 + $0x38] sm:$0xff]
      %v4093 = vld [vmem:[%s15 + $0x40] sm:$0xff]
      %v4094 = vld [vmem:[%s15 + $0x48] sm:$0xff]
      %v4095 = vld [vmem:[%s15 + $0x50] sm:$0xf]
      %v4096 = vld [vmem:[%s15 + $0x54] sm:$0xff]
      %v4097 = vld [vmem:[%s15 + $0x5c] sm:$0xff]
      %v4098 = vld [vmem:[%s15 + $0x64] sm:$0xff]
      %v4099 = vld [vmem:[%s15 + $0x6c] sm:$0xf]
      %v4100 = vld [vmem:[%s15 + $0x70] sm:$0xff]
      %v4101 = vld [vmem:[%s15 + $0x78] sm:$0xff]
      %v4102 = vld [vmem:[%s15 + $0x80] sm:$0xff]
      %v4103 = vld [vmem:[%s15 + $0x88] sm:$0xf]
      %v4104 = vld [vmem:[%s15 + $0x8c] sm:$0xff]
      %v4105 = vld [vmem:[%s15 + $0x94] sm:$0xff]
      %v4106 = vld [vmem:[%s15 + $0x9c] sm:$0xff]
      %v4107 = vld [vmem:[%s15 + $0xa4] sm:$0xf]
      %v4108 = vld [vmem:[%s15 + $0xa8] sm:$0xff]
      %v4109 = vld [vmem:[%s15 + $0xb0] sm:$0xff]
      %v4110 = vld [vmem:[%s15 + $0xb8] sm:$0xff]
      %v4111 = vld [vmem:[%s15 + $0xc0] sm:$0xf]
      %v4112 = vld [vmem:[%s15 + $0xc4] sm:$0xff]
      %v4113 = vld [vmem:[%s15 + $0xcc] sm:$0xff]
      %v4114 = vld [vmem:[%s15 + $0xd4] sm:$0xff]
      %v4115 = vld [vmem:[%s15 + $0xdc] sm:$0xf]
      %v4116 = vld [vmem:[%s15 + $0xe0] sm:$0xff]
      %v4117 = vld [vmem:[%s15 + $0xe8] sm:$0xff]
      %v4118 = vld [vmem:[%s15 + $0xf0] sm:$0xff]
      %v4119 = vld [vmem:[%s15 + $0xf8] sm:$0xf]
      %v4120 = vld [vmem:[%s15 + $0xfc] sm:$0xff]
      %v4121 = vld [vmem:[%s15 + $0x104] sm:$0xff]
      %v4122 = vld [vmem:[%s15 + $0x10c] sm:$0xff]
      %v4123 = vld [vmem:[%s15 + $0x114] sm:$0xf]
      %v4124 = vld [vmem:[%s15 + $0x118] sm:$0xff]
      %v4125 = vld [vmem:[%s15 + $0x120] sm:$0xff]
      %v4126 = vld [vmem:[%s15 + $0x128] sm:$0xff]
      %v4127 = vld [vmem:[%s15 + $0x130] sm:$0xf]
      %v4128 = vld [vmem:[%s15 + $0x134] sm:$0xff]
      %v4129 = vld [vmem:[%s15 + $0x13c] sm:$0xff]
      %v4130 = vld [vmem:[%s15 + $0x144] sm:$0xff]
      %v4131 = vld [vmem:[%s15 + $0x14c] sm:$0xf]
      %v4132 = vld [vmem:[%s15 + $0x150] sm:$0xff]
      %v4133 = vld [vmem:[%s15 + $0x158] sm:$0xff]
      %v4134 = vld [vmem:[%s15 + $0x160] sm:$0xff]
      %v4135 = vld [vmem:[%s15 + $0x168] sm:$0xf]
      %v4136 = vld [vmem:[%s15 + $0x16c] sm:$0xff]
      %v4137 = vld [vmem:[%s15 + $0x174] sm:$0xff]
      %v4138 = vld [vmem:[%s15 + $0x17c] sm:$0xff]
      %v4139 = vld [vmem:[%s15 + $0x184] sm:$0xf]
      %v4140 = vld [vmem:[%s15 + $0x188] sm:$0xff]
      %v4141 = vld [vmem:[%s15 + $0x190] sm:$0xff]
      %v4142 = vld [vmem:[%s15 + $0x198] sm:$0xff]
      %v4143 = vld [vmem:[%s15 + $0x1a0] sm:$0xf]
      %v4144 = vld [vmem:[%s15 + $0x1a4] sm:$0xff]
      %v4145 = vld [vmem:[%s15 + $0x1ac] sm:$0xff]
      %v4146 = vld [vmem:[%s15 + $0x1b4] sm:$0xff]
      %v4147 = vld [vmem:[%s15 + $0x1bc] sm:$0xf]
      %v4148 = vld [vmem:[%s16] sm:$0xff]
      %v4150 = vlaneseq
      %v4151 = vshrl.u32 %v4150, 7
      %v4152 = vsub.s32 0, %v4151
      %v4153 = vrot.slane %v4148, %v4152
      %v4154 = vlaneseq
      %v4155 = vshrl.u32 %v4154, 7
      %v4156 = vsub.s32 1, %v4155
      %v4157 = vrot.slane %v4148, %v4156
      %v4158 = vlaneseq
      %v4159 = vshrl.u32 %v4158, 7
      %v4160 = vsub.s32 2, %v4159
      %v4161 = vrot.slane %v4148, %v4160
      %v4162 = vlaneseq
      %v4163 = vshrl.u32 %v4162, 7
      %v4164 = vsub.s32 3, %v4163
      %v4165 = vrot.slane %v4148, %v4164
      %v4166 = vlaneseq
      %v4167 = vshrl.u32 %v4166, 7
      %v4168 = vsub.s32 4, %v4167
      %v4169 = vrot.slane %v4148, %v4168
      %v4170 = vlaneseq
      %v4171 = vshrl.u32 %v4170, 7
      %v4172 = vsub.s32 5, %v4171
      %v4173 = vrot.slane %v4148, %v4172
      %v4174 = vlaneseq
      %v4175 = vshrl.u32 %v4174, 7
      %v4176 = vsub.s32 6, %v4175
      %v4177 = vrot.slane %v4148, %v4176
      %v4249 = vunpack.c.l.b16 %v4084
      %v4250 = vunpack.c.h.b16 %v4084
      %v4251 = vunpack.c.l.b16 %v4085
      %v4252 = vunpack.c.h.b16 %v4085
      %v4253 = vunpack.c.l.b16 %v4086
      %v4254 = vunpack.c.h.b16 %v4086
      %v4255 = vunpack.c.l.b16 %v4087
      %v4256 = vunpack.c.l.b16 %v4088
      %v4257 = vunpack.c.h.b16 %v4088
      %v4258 = vunpack.c.l.b16 %v4089
      %v4259 = vunpack.c.h.b16 %v4089
      %v4260 = vunpack.c.l.b16 %v4090
      %v4261 = vunpack.c.h.b16 %v4090
      %v4262 = vunpack.c.l.b16 %v4091
      %v4263 = vunpack.c.l.b16 %v4092
      %v4264 = vunpack.c.h.b16 %v4092
      %v4265 = vunpack.c.l.b16 %v4093
      %v4266 = vunpack.c.h.b16 %v4093
      %v4267 = vunpack.c.l.b16 %v4094
      %v4268 = vunpack.c.h.b16 %v4094
      %v4269 = vunpack.c.l.b16 %v4095
      %v4270 = vunpack.c.l.b16 %v4096
      %v4271 = vunpack.c.h.b16 %v4096
      %v4272 = vunpack.c.l.b16 %v4097
      %v4273 = vunpack.c.h.b16 %v4097
      %v4274 = vunpack.c.l.b16 %v4098
      %v4275 = vunpack.c.h.b16 %v4098
      %v4276 = vunpack.c.l.b16 %v4099
      %v4277 = vunpack.c.l.b16 %v4100
      %v4278 = vunpack.c.h.b16 %v4100
      %v4279 = vunpack.c.l.b16 %v4101
      %v4280 = vunpack.c.h.b16 %v4101
      %v4281 = vunpack.c.l.b16 %v4102
      %v4282 = vunpack.c.h.b16 %v4102
      %v4283 = vunpack.c.l.b16 %v4103
      %v4284 = vunpack.c.l.b16 %v4104
      %v4285 = vunpack.c.h.b16 %v4104
      %v4286 = vunpack.c.l.b16 %v4105
      %v4287 = vunpack.c.h.b16 %v4105
      %v4288 = vunpack.c.l.b16 %v4106
      %v4289 = vunpack.c.h.b16 %v4106
      %v4290 = vunpack.c.l.b16 %v4107
      %v4291 = vunpack.c.l.b16 %v4108
      %v4292 = vunpack.c.h.b16 %v4108
      %v4293 = vunpack.c.l.b16 %v4109
      %v4294 = vunpack.c.h.b16 %v4109
      %v4295 = vunpack.c.l.b16 %v4110
      %v4296 = vunpack.c.h.b16 %v4110
      %v4297 = vunpack.c.l.b16 %v4111
      %v4298 = vunpack.c.l.b16 %v4112
      %v4299 = vunpack.c.h.b16 %v4112
      %v4300 = vunpack.c.l.b16 %v4113
      %v4301 = vunpack.c.h.b16 %v4113
      %v4302 = vunpack.c.l.b16 %v4114
      %v4303 = vunpack.c.h.b16 %v4114
      %v4304 = vunpack.c.l.b16 %v4115
      %v4305 = vunpack.c.l.b16 %v4116
      %v4306 = vunpack.c.h.b16 %v4116
      %v4307 = vunpack.c.l.b16 %v4117
      %v4308 = vunpack.c.h.b16 %v4117
      %v4309 = vunpack.c.l.b16 %v4118
      %v4310 = vunpack.c.h.b16 %v4118
      %v4311 = vunpack.c.l.b16 %v4119
      %v4312 = vunpack.c.l.b16 %v4120
      %v4313 = vunpack.c.h.b16 %v4120
      %v4314 = vunpack.c.l.b16 %v4121
      %v4315 = vunpack.c.h.b16 %v4121
      %v4316 = vunpack.c.l.b16 %v4122
      %v4317 = vunpack.c.h.b16 %v4122
      %v4318 = vunpack.c.l.b16 %v4123
      %v4319 = vunpack.c.l.b16 %v4124
      %v4320 = vunpack.c.h.b16 %v4124
      %v4321 = vunpack.c.l.b16 %v4125
      %v4322 = vunpack.c.h.b16 %v4125
      %v4323 = vunpack.c.l.b16 %v4126
      %v4324 = vunpack.c.h.b16 %v4126
      %v4325 = vunpack.c.l.b16 %v4127
      %v4326 = vunpack.c.l.b16 %v4128
      %v4327 = vunpack.c.h.b16 %v4128
      %v4328 = vunpack.c.l.b16 %v4129
      %v4329 = vunpack.c.h.b16 %v4129
      %v4330 = vunpack.c.l.b16 %v4130
      %v4331 = vunpack.c.h.b16 %v4130
      %v4332 = vunpack.c.l.b16 %v4131
      %v4333 = vunpack.c.l.b16 %v4132
      %v4334 = vunpack.c.h.b16 %v4132
      %v4335 = vunpack.c.l.b16 %v4133
      %v4336 = vunpack.c.h.b16 %v4133
      %v4337 = vunpack.c.l.b16 %v4134
      %v4338 = vunpack.c.h.b16 %v4134
      %v4339 = vunpack.c.l.b16 %v4135
      %v4340 = vunpack.c.l.b16 %v4136
      %v4341 = vunpack.c.h.b16 %v4136
      %v4342 = vunpack.c.l.b16 %v4137
      %v4343 = vunpack.c.h.b16 %v4137
      %v4344 = vunpack.c.l.b16 %v4138
      %v4345 = vunpack.c.h.b16 %v4138
      %v4346 = vunpack.c.l.b16 %v4139
      %v4347 = vunpack.c.l.b16 %v4140
      %v4348 = vunpack.c.h.b16 %v4140
      %v4349 = vunpack.c.l.b16 %v4141
      %v4350 = vunpack.c.h.b16 %v4141
      %v4351 = vunpack.c.l.b16 %v4142
      %v4352 = vunpack.c.h.b16 %v4142
      %v4353 = vunpack.c.l.b16 %v4143
      %v4354 = vunpack.c.l.b16 %v4144
      %v4355 = vunpack.c.h.b16 %v4144
      %v4356 = vunpack.c.l.b16 %v4145
      %v4357 = vunpack.c.h.b16 %v4145
      %v4358 = vunpack.c.l.b16 %v4146
      %v4359 = vunpack.c.h.b16 %v4146
      %v4360 = vunpack.c.l.b16 %v4147
      %v4361 = vpack.c.b16 %v4256, %v4249
      %v4362 = vpack.c.b16 %v4257, %v4250
      %v4363 = vpack.c.b16 %v4258, %v4251
      %v4364 = vpack.c.b16 %v4259, %v4252
      %v4365 = vpack.c.b16 %v4260, %v4253
      %v4366 = vpack.c.b16 %v4261, %v4254
      %v4367 = vpack.c.b16 %v4262, %v4255
      %v4368 = vpack.c.b16 %v4270, %v4263
      %v4369 = vpack.c.b16 %v4271, %v4264
      %v4370 = vpack.c.b16 %v4272, %v4265
      %v4371 = vpack.c.b16 %v4273, %v4266
      %v4372 = vpack.c.b16 %v4274, %v4267
      %v4373 = vpack.c.b16 %v4275, %v4268
      %v4374 = vpack.c.b16 %v4276, %v4269
      %v4375 = vpack.c.b16 %v4284, %v4277
      %v4376 = vpack.c.b16 %v4285, %v4278
      %v4377 = vpack.c.b16 %v4286, %v4279
      %v4378 = vpack.c.b16 %v4287, %v4280
      %v4379 = vpack.c.b16 %v4288, %v4281
      %v4380 = vpack.c.b16 %v4289, %v4282
      %v4381 = vpack.c.b16 %v4290, %v4283
      %v4382 = vpack.c.b16 %v4298, %v4291
      %v4383 = vpack.c.b16 %v4299, %v4292
      %v4384 = vpack.c.b16 %v4300, %v4293
      %v4385 = vpack.c.b16 %v4301, %v4294
      %v4386 = vpack.c.b16 %v4302, %v4295
      %v4387 = vpack.c.b16 %v4303, %v4296
      %v4388 = vpack.c.b16 %v4304, %v4297
      %v4389 = vpack.c.b16 %v4312, %v4305
      %v4390 = vpack.c.b16 %v4313, %v4306
      %v4391 = vpack.c.b16 %v4314, %v4307
      %v4392 = vpack.c.b16 %v4315, %v4308
      %v4393 = vpack.c.b16 %v4316, %v4309
      %v4394 = vpack.c.b16 %v4317, %v4310
      %v4395 = vpack.c.b16 %v4318, %v4311
      %v4396 = vpack.c.b16 %v4326, %v4319
      %v4397 = vpack.c.b16 %v4327, %v4320
      %v4398 = vpack.c.b16 %v4328, %v4321
      %v4399 = vpack.c.b16 %v4329, %v4322
      %v4400 = vpack.c.b16 %v4330, %v4323
      %v4401 = vpack.c.b16 %v4331, %v4324
      %v4402 = vpack.c.b16 %v4332, %v4325
      %v4403 = vpack.c.b16 %v4340, %v4333
      %v4404 = vpack.c.b16 %v4341, %v4334
      %v4405 = vpack.c.b16 %v4342, %v4335
      %v4406 = vpack.c.b16 %v4343, %v4336
      %v4407 = vpack.c.b16 %v4344, %v4337
      %v4408 = vpack.c.b16 %v4345, %v4338
      %v4409 = vpack.c.b16 %v4346, %v4339
      %v4410 = vpack.c.b16 %v4354, %v4347
      %v4411 = vpack.c.b16 %v4355, %v4348
      %v4412 = vpack.c.b16 %v4356, %v4349
      %v4413 = vpack.c.b16 %v4357, %v4350
      %v4414 = vpack.c.b16 %v4358, %v4351
      %v4415 = vpack.c.b16 %v4359, %v4352
      %v4416 = vpack.c.b16 %v4360, %v4353
      %4473 = vmatprep.subr.bf16.mxu0 %v4411
      %4474 = vmatpush1.bf16.msra.mxu0 %v4410
      %4475 = vmatprep.subr.bf16.mxu0 %v4404
      %4476 = vmatpush1.bf16.msra.mxu0 %v4403
      %4477 = vmatprep.subr.bf16.mxu0 %v4397
      %4478 = vmatpush1.bf16.msra.mxu0 %v4396
      %4479 = vmatprep.subr.bf16.mxu0 %v4390
      %4480 = vmatpush1.bf16.msra.mxu0 %v4389
      %4481 = vmatprep.subr.bf16.mxu0 %v4383
      %4482 = vmatpush1.bf16.msra.mxu0 %v4382
      %4483 = vmatprep.subr.bf16.mxu0 %v4376
      %4484 = vmatpush1.bf16.msra.mxu0 %v4375
      %4485 = vmatprep.subr.bf16.mxu0 %v4369
      %4486 = vmatpush1.bf16.msra.mxu0 %v4368
      %4487 = vmatprep.subr.bf16.mxu0 %v4362
      %4488 = vmatpush1.bf16.msra.mxu0 %v4361
      %4489 = vmatprep.subr.bf16.mxu0 0
      %4490 = vmatpush2.bf16.msra.mxu0 0
      %4491 = vmatprep.subr.bf16.mxu0 0
      %4492 = vmatpush2.bf16.msra.mxu0 0
      %4493 = vmatprep.subr.bf16.mxu0 0
      %4494 = vmatpush2.bf16.msra.mxu0 0
      %4495 = vmatprep.subr.bf16.mxu0 0
      %4496 = vmatpush2.bf16.msra.mxu0 0
      %4497 = vmatprep.subr.bf16.mxu0 0
      %4498 = vmatpush2.bf16.msra.mxu0 0
      %4499 = vmatprep.subr.bf16.mxu0 0
      %4500 = vmatpush2.bf16.msra.mxu0 0
      %4501 = vmatprep.subr.bf16.mxu0 0
      %4502 = vmatpush2.bf16.msra.mxu0 0
      %4503 = vmatprep.subr.bf16.mxu0 0
      %4504 = vmatpush2.bf16.msra.mxu0 0
      %4505 = vmatprep.mubr.bf16.mxu0 0
      %4506 = vmatmul.mubr.bf16.gmra.mxu0 %v4068
      %v4507 = vpop.f32.mrf.mxu0
      %v4508 = vadd.f32 %v4153, %v4507
      %v4509 = vpop.f32.mrf.mxu0
      %v4510 = vadd.f32 %v4157, %v4509
      %v4511 = vpop.f32.mrf.mxu0
      %v4512 = vadd.f32 %v4153, %v4511
      %v4513 = vpop.f32.mrf.mxu0
      %v4514 = vadd.f32 %v4157, %v4513
      %4515 = vmatprep.mubr.bf16.mxu0 0
      %4516 = vmatmul.mubr.bf16.gmra.mxu0 %v4069
      %v4517 = vpop.f32.mrf.mxu0
      %v4518 = vadd.f32 %v4153, %v4517
      %v4519 = vpop.f32.mrf.mxu0
      %v4520 = vadd.f32 %v4157, %v4519
      %v4521 = vpop.f32.mrf.mxu0
      %v4522 = vadd.f32 %v4153, %v4521
      %v4523 = vpop.f32.mrf.mxu0
      %v4524 = vadd.f32 %v4157, %v4523
      %4525 = vmatprep.mubr.bf16.mxu0 0
      %4526 = vmatmul.mubr.bf16.gmra.mxu0 %v4070
      %v4527 = vpop.f32.mrf.mxu0
      %v4528 = vadd.f32 %v4153, %v4527
      %v4529 = vpop.f32.mrf.mxu0
      %v4530 = vadd.f32 %v4157, %v4529
      %v4531 = vpop.f32.mrf.mxu0
      %v4532 = vadd.f32 %v4153, %v4531
      %v4533 = vpop.f32.mrf.mxu0
      %v4534 = vadd.f32 %v4157, %v4533
      %4535 = vmatprep.mubr.bf16.mxu0 0
      %4536 = vmatmul.mubr.bf16.gmra.mxu0 %v4071
      %v4537 = vpop.f32.mrf.mxu0
      %v4538 = vadd.f32 %v4153, %v4537
      %v4539 = vpop.f32.mrf.mxu0
      %v4540 = vadd.f32 %v4157, %v4539
      %v4541 = vpop.f32.mrf.mxu0
      %v4542 = vadd.f32 %v4153, %v4541
      %v4543 = vpop.f32.mrf.mxu0
      %v4544 = vadd.f32 %v4157, %v4543
      %4545 = vmatprep.mubr.bf16.mxu0 0
      %4546 = vmatmul.mubr.bf16.gmra.mxu0 %v4072
      %v4547 = vpop.f32.mrf.mxu0
      %v4548 = vadd.f32 %v4153, %v4547
      %v4549 = vpop.f32.mrf.mxu0
      %v4550 = vadd.f32 %v4157, %v4549
      %v4551 = vpop.f32.mrf.mxu0
      %v4552 = vadd.f32 %v4153, %v4551
      %v4553 = vpop.f32.mrf.mxu0
      %v4554 = vadd.f32 %v4157, %v4553
      %4555 = vmatprep.mubr.bf16.mxu0 0
      %4556 = vmatmul.mubr.bf16.gmra.mxu0 %v4073
      %v4557 = vpop.f32.mrf.mxu0
      %v4558 = vadd.f32 %v4153, %v4557
      %v4559 = vpop.f32.mrf.mxu0
      %v4560 = vadd.f32 %v4157, %v4559
      %v4561 = vpop.f32.mrf.mxu0
      %v4562 = vadd.f32 %v4153, %v4561
      %v4563 = vpop.f32.mrf.mxu0
      %v4564 = vadd.f32 %v4157, %v4563
      %4565 = vmatprep.mubr.bf16.mxu0 0
      %4566 = vmatmul.mubr.bf16.gmra.mxu0 %v4074
      %v4567 = vpop.f32.mrf.mxu0
      %v4568 = vadd.f32 %v4153, %v4567
      %v4569 = vpop.f32.mrf.mxu0
      %v4570 = vadd.f32 %v4157, %v4569
      %v4571 = vpop.f32.mrf.mxu0
      %v4572 = vadd.f32 %v4153, %v4571
      %v4573 = vpop.f32.mrf.mxu0
      %v4574 = vadd.f32 %v4157, %v4573
      %4575 = vmatprep.mubr.bf16.mxu0 0
      %4576 = vmatmul.mubr.bf16.gmra.mxu0 %v4075
      %v4577 = vpop.f32.mrf.mxu0
      %v4578 = vadd.f32 %v4153, %v4577
      %v4579 = vpop.f32.mrf.mxu0
      %v4580 = vadd.f32 %v4157, %v4579
      %v4581 = vpop.f32.mrf.mxu0
      %v4582 = vadd.f32 %v4153, %v4581
      %v4583 = vpop.f32.mrf.mxu0
      %v4584 = vadd.f32 %v4157, %v4583
      %4585 = vmatprep.mubr.bf16.mxu0 0
      %4586 = vmatmul.mubr.bf16.gmra.mxu0 %v4076
      %v4587 = vpop.f32.mrf.mxu0
      %v4588 = vadd.f32 %v4153, %v4587
      %v4589 = vpop.f32.mrf.mxu0
      %v4590 = vadd.f32 %v4157, %v4589
      %v4591 = vpop.f32.mrf.mxu0
      %v4592 = vadd.f32 %v4153, %v4591
      %v4593 = vpop.f32.mrf.mxu0
      %v4594 = vadd.f32 %v4157, %v4593
      %4595 = vmatprep.mubr.bf16.mxu0 0
      %4596 = vmatmul.mubr.bf16.gmra.mxu0 %v4077
      %v4597 = vpop.f32.mrf.mxu0
      %v4598 = vadd.f32 %v4153, %v4597
      %v4599 = vpop.f32.mrf.mxu0
      %v4600 = vadd.f32 %v4157, %v4599
      %v4601 = vpop.f32.mrf.mxu0
      %v4602 = vadd.f32 %v4153, %v4601
      %v4603 = vpop.f32.mrf.mxu0
      %v4604 = vadd.f32 %v4157, %v4603
      %4605 = vmatprep.mubr.bf16.mxu0 0
      %4606 = vmatmul.mubr.bf16.gmra.mxu0 %v4078
      %v4607 = vpop.f32.mrf.mxu0
      %v4608 = vadd.f32 %v4153, %v4607
      %v4609 = vpop.f32.mrf.mxu0
      %v4610 = vadd.f32 %v4157, %v4609
      %v4611 = vpop.f32.mrf.mxu0
      %v4612 = vadd.f32 %v4153, %v4611
      %v4613 = vpop.f32.mrf.mxu0
      %v4614 = vadd.f32 %v4157, %v4613
      %4615 = vmatprep.mubr.bf16.mxu0 0
      %4616 = vmatmul.mubr.bf16.gmra.mxu0 %v4079
      %v4617 = vpop.f32.mrf.mxu0
      %v4618 = vadd.f32 %v4153, %v4617
      %v4619 = vpop.f32.mrf.mxu0
      %v4620 = vadd.f32 %v4157, %v4619
      %v4621 = vpop.f32.mrf.mxu0
      %v4622 = vadd.f32 %v4153, %v4621
      %v4623 = vpop.f32.mrf.mxu0
      %v4624 = vadd.f32 %v4157, %v4623
      %4625 = vmatprep.mubr.bf16.mxu0 0
      %4626 = vmatmul.mubr.bf16.gmra.mxu0 %v4080
      %v4627 = vpop.f32.mrf.mxu0
      %v4628 = vadd.f32 %v4153, %v4627
      %v4629 = vpop.f32.mrf.mxu0
      %v4630 = vadd.f32 %v4157, %v4629
      %v4631 = vpop.f32.mrf.mxu0
      %v4632 = vadd.f32 %v4153, %v4631
      %v4633 = vpop.f32.mrf.mxu0
      %v4634 = vadd.f32 %v4157, %v4633
      %4635 = vmatprep.mubr.bf16.mxu0 0
      %4636 = vmatmul.mubr.bf16.gmra.mxu0 %v4081
      %v4637 = vpop.f32.mrf.mxu0
      %v4638 = vadd.f32 %v4153, %v4637
      %v4639 = vpop.f32.mrf.mxu0
      %v4640 = vadd.f32 %v4157, %v4639
      %v4641 = vpop.f32.mrf.mxu0
      %v4642 = vadd.f32 %v4153, %v4641
      %v4643 = vpop.f32.mrf.mxu0
      %v4644 = vadd.f32 %v4157, %v4643
      %4645 = vmatprep.mubr.bf16.mxu0 0
      %4646 = vmatmul.mubr.bf16.gmra.mxu0 %v4082
      %v4647 = vpop.f32.mrf.mxu0
      %v4648 = vadd.f32 %v4153, %v4647
      %v4649 = vpop.f32.mrf.mxu0
      %v4650 = vadd.f32 %v4157, %v4649
      %v4651 = vpop.f32.mrf.mxu0
      %v4652 = vadd.f32 %v4153, %v4651
      %v4653 = vpop.f32.mrf.mxu0
      %v4654 = vadd.f32 %v4157, %v4653
      %4655 = vmatprep.mubr.bf16.mxu0 0
      %4656 = vmatmul.mubr.bf16.gmra.mxu0 %v4083
      %v4657 = vpop.f32.mrf.mxu0
      %v4658 = vadd.f32 %v4153, %v4657
      %v4659 = vpop.f32.mrf.mxu0
      %v4660 = vadd.f32 %v4157, %v4659
      %v4661 = vpop.f32.mrf.mxu0
      %v4662 = vadd.f32 %v4153, %v4661
      %v4663 = vpop.f32.mrf.mxu0
      %v4664 = vadd.f32 %v4157, %v4663
      %4665 = vdwg.mxu0
      %4666 = vmatprep.subr.bf16.mxu0 %v4413
      %4667 = vmatpush1.bf16.msra.mxu0 %v4412
      %4668 = vmatprep.subr.bf16.mxu0 %v4406
      %4669 = vmatpush1.bf16.msra.mxu0 %v4405
      %4670 = vmatprep.subr.bf16.mxu0 %v4399
      %4671 = vmatpush1.bf16.msra.mxu0 %v4398
      %4672 = vmatprep.subr.bf16.mxu0 %v4392
      %4673 = vmatpush1.bf16.msra.mxu0 %v4391
      %4674 = vmatprep.subr.bf16.mxu0 %v4385
      %4675 = vmatpush1.bf16.msra.mxu0 %v4384
      %4676 = vmatprep.subr.bf16.mxu0 %v4378
      %4677 = vmatpush1.bf16.msra.mxu0 %v4377
      %4678 = vmatprep.subr.bf16.mxu0 %v4371
      %4679 = vmatpush1.bf16.msra.mxu0 %v4370
      %4680 = vmatprep.subr.bf16.mxu0 %v4364
      %4681 = vmatpush1.bf16.msra.mxu0 %v4363
      %4682 = vmatprep.subr.bf16.mxu0 0
      %4683 = vmatpush2.bf16.msra.mxu0 0
      %4684 = vmatprep.subr.bf16.mxu0 0
      %4685 = vmatpush2.bf16.msra.mxu0 0
      %4686 = vmatprep.subr.bf16.mxu0 0
      %4687 = vmatpush2.bf16.msra.mxu0 0
      %4688 = vmatprep.subr.bf16.mxu0 0
      %4689 = vmatpush2.bf16.msra.mxu0 0
      %4690 = vmatprep.subr.bf16.mxu0 0
      %4691 = vmatpush2.bf16.msra.mxu0 0
      %4692 = vmatprep.subr.bf16.mxu0 0
      %4693 = vmatpush2.bf16.msra.mxu0 0
      %4694 = vmatprep.subr.bf16.mxu0 0
      %4695 = vmatpush2.bf16.msra.mxu0 0
      %4696 = vmatprep.subr.bf16.mxu0 0
      %4697 = vmatpush2.bf16.msra.mxu0 0
      %4698 = vmatprep.mubr.bf16.mxu0 0
      %4699 = vmatmul.mubr.bf16.gmra.mxu0 %v4068
      %v4700 = vpop.f32.mrf.mxu0
      %v4701 = vadd.f32 %v4161, %v4700
      %v4702 = vpop.f32.mrf.mxu0
      %v4703 = vadd.f32 %v4165, %v4702
      %v4704 = vpop.f32.mrf.mxu0
      %v4705 = vadd.f32 %v4161, %v4704
      %v4706 = vpop.f32.mrf.mxu0
      %v4707 = vadd.f32 %v4165, %v4706
      %4708 = vmatprep.mubr.bf16.mxu0 0
      %4709 = vmatmul.mubr.bf16.gmra.mxu0 %v4069
      %v4710 = vpop.f32.mrf.mxu0
      %v4711 = vadd.f32 %v4161, %v4710
      %v4712 = vpop.f32.mrf.mxu0
      %v4713 = vadd.f32 %v4165, %v4712
      %v4714 = vpop.f32.mrf.mxu0
      %v4715 = vadd.f32 %v4161, %v4714
      %v4716 = vpop.f32.mrf.mxu0
      %v4717 = vadd.f32 %v4165, %v4716
      %4718 = vmatprep.mubr.bf16.mxu0 0
      %4719 = vmatmul.mubr.bf16.gmra.mxu0 %v4070
      %v4720 = vpop.f32.mrf.mxu0
      %v4721 = vadd.f32 %v4161, %v4720
      %v4722 = vpop.f32.mrf.mxu0
      %v4723 = vadd.f32 %v4165, %v4722
      %v4724 = vpop.f32.mrf.mxu0
      %v4725 = vadd.f32 %v4161, %v4724
      %v4726 = vpop.f32.mrf.mxu0
      %v4727 = vadd.f32 %v4165, %v4726
      %4728 = vmatprep.mubr.bf16.mxu0 0
      %4729 = vmatmul.mubr.bf16.gmra.mxu0 %v4071
      %v4730 = vpop.f32.mrf.mxu0
      %v4731 = vadd.f32 %v4161, %v4730
      %v4732 = vpop.f32.mrf.mxu0
      %v4733 = vadd.f32 %v4165, %v4732
      %v4734 = vpop.f32.mrf.mxu0
      %v4735 = vadd.f32 %v4161, %v4734
      %v4736 = vpop.f32.mrf.mxu0
      %v4737 = vadd.f32 %v4165, %v4736
      %4738 = vmatprep.mubr.bf16.mxu0 0
      %4739 = vmatmul.mubr.bf16.gmra.mxu0 %v4072
      %v4740 = vpop.f32.mrf.mxu0
      %v4741 = vadd.f32 %v4161, %v4740
      %v4742 = vpop.f32.mrf.mxu0
      %v4743 = vadd.f32 %v4165, %v4742
      %v4744 = vpop.f32.mrf.mxu0
      %v4745 = vadd.f32 %v4161, %v4744
      %v4746 = vpop.f32.mrf.mxu0
      %v4747 = vadd.f32 %v4165, %v4746
      %4748 = vmatprep.mubr.bf16.mxu0 0
      %4749 = vmatmul.mubr.bf16.gmra.mxu0 %v4073
      %v4750 = vpop.f32.mrf.mxu0
      %v4751 = vadd.f32 %v4161, %v4750
      %v4752 = vpop.f32.mrf.mxu0
      %v4753 = vadd.f32 %v4165, %v4752
      %v4754 = vpop.f32.mrf.mxu0
      %v4755 = vadd.f32 %v4161, %v4754
      %v4756 = vpop.f32.mrf.mxu0
      %v4757 = vadd.f32 %v4165, %v4756
      %4758 = vmatprep.mubr.bf16.mxu0 0
      %4759 = vmatmul.mubr.bf16.gmra.mxu0 %v4074
      %v4760 = vpop.f32.mrf.mxu0
      %v4761 = vadd.f32 %v4161, %v4760
      %v4762 = vpop.f32.mrf.mxu0
      %v4763 = vadd.f32 %v4165, %v4762
      %v4764 = vpop.f32.mrf.mxu0
      %v4765 = vadd.f32 %v4161, %v4764
      %v4766 = vpop.f32.mrf.mxu0
      %v4767 = vadd.f32 %v4165, %v4766
      %4768 = vmatprep.mubr.bf16.mxu0 0
      %4769 = vmatmul.mubr.bf16.gmra.mxu0 %v4075
      %v4770 = vpop.f32.mrf.mxu0
      %v4771 = vadd.f32 %v4161, %v4770
      %v4772 = vpop.f32.mrf.mxu0
      %v4773 = vadd.f32 %v4165, %v4772
      %v4774 = vpop.f32.mrf.mxu0
      %v4775 = vadd.f32 %v4161, %v4774
      %v4776 = vpop.f32.mrf.mxu0
      %v4777 = vadd.f32 %v4165, %v4776
      %4778 = vmatprep.mubr.bf16.mxu0 0
      %4779 = vmatmul.mubr.bf16.gmra.mxu0 %v4076
      %v4780 = vpop.f32.mrf.mxu0
      %v4781 = vadd.f32 %v4161, %v4780
      %v4782 = vpop.f32.mrf.mxu0
      %v4783 = vadd.f32 %v4165, %v4782
      %v4784 = vpop.f32.mrf.mxu0
      %v4785 = vadd.f32 %v4161, %v4784
      %v4786 = vpop.f32.mrf.mxu0
      %v4787 = vadd.f32 %v4165, %v4786
      %4788 = vmatprep.mubr.bf16.mxu0 0
      %4789 = vmatmul.mubr.bf16.gmra.mxu0 %v4077
      %v4790 = vpop.f32.mrf.mxu0
      %v4791 = vadd.f32 %v4161, %v4790
      %v4792 = vpop.f32.mrf.mxu0
      %v4793 = vadd.f32 %v4165, %v4792
      %v4794 = vpop.f32.mrf.mxu0
      %v4795 = vadd.f32 %v4161, %v4794
      %v4796 = vpop.f32.mrf.mxu0
      %v4797 = vadd.f32 %v4165, %v4796
      %4798 = vmatprep.mubr.bf16.mxu0 0
      %4799 = vmatmul.mubr.bf16.gmra.mxu0 %v4078
      %v4800 = vpop.f32.mrf.mxu0
      %v4801 = vadd.f32 %v4161, %v4800
      %v4802 = vpop.f32.mrf.mxu0
      %v4803 = vadd.f32 %v4165, %v4802
      %v4804 = vpop.f32.mrf.mxu0
      %v4805 = vadd.f32 %v4161, %v4804
      %v4806 = vpop.f32.mrf.mxu0
      %v4807 = vadd.f32 %v4165, %v4806
      %4808 = vmatprep.mubr.bf16.mxu0 0
      %4809 = vmatmul.mubr.bf16.gmra.mxu0 %v4079
      %v4810 = vpop.f32.mrf.mxu0
      %v4811 = vadd.f32 %v4161, %v4810
      %v4812 = vpop.f32.mrf.mxu0
      %v4813 = vadd.f32 %v4165, %v4812
      %v4814 = vpop.f32.mrf.mxu0
      %v4815 = vadd.f32 %v4161, %v4814
      %v4816 = vpop.f32.mrf.mxu0
      %v4817 = vadd.f32 %v4165, %v4816
      %4818 = vmatprep.mubr.bf16.mxu0 0
      %4819 = vmatmul.mubr.bf16.gmra.mxu0 %v4080
      %v4820 = vpop.f32.mrf.mxu0
      %v4821 = vadd.f32 %v4161, %v4820
      %v4822 = vpop.f32.mrf.mxu0
      %v4823 = vadd.f32 %v4165, %v4822
      %v4824 = vpop.f32.mrf.mxu0
      %v4825 = vadd.f32 %v4161, %v4824
      %v4826 = vpop.f32.mrf.mxu0
      %v4827 = vadd.f32 %v4165, %v4826
      %4828 = vmatprep.mubr.bf16.mxu0 0
      %4829 = vmatmul.mubr.bf16.gmra.mxu0 %v4081
      %v4830 = vpop.f32.mrf.mxu0
      %v4831 = vadd.f32 %v4161, %v4830
      %v4832 = vpop.f32.mrf.mxu0
      %v4833 = vadd.f32 %v4165, %v4832
      %v4834 = vpop.f32.mrf.mxu0
      %v4835 = vadd.f32 %v4161, %v4834
      %v4836 = vpop.f32.mrf.mxu0
      %v4837 = vadd.f32 %v4165, %v4836
      %4838 = vmatprep.mubr.bf16.mxu0 0
      %4839 = vmatmul.mubr.bf16.gmra.mxu0 %v4082
      %v4840 = vpop.f32.mrf.mxu0
      %v4841 = vadd.f32 %v4161, %v4840
      %v4842 = vpop.f32.mrf.mxu0
      %v4843 = vadd.f32 %v4165, %v4842
      %v4844 = vpop.f32.mrf.mxu0
      %v4845 = vadd.f32 %v4161, %v4844
      %v4846 = vpop.f32.mrf.mxu0
      %v4847 = vadd.f32 %v4165, %v4846
      %4848 = vmatprep.mubr.bf16.mxu0 0
      %4849 = vmatmul.mubr.bf16.gmra.mxu0 %v4083
      %v4850 = vpop.f32.mrf.mxu0
      %v4851 = vadd.f32 %v4161, %v4850
      %v4852 = vpop.f32.mrf.mxu0
      %v4853 = vadd.f32 %v4165, %v4852
      %v4854 = vpop.f32.mrf.mxu0
      %v4855 = vadd.f32 %v4161, %v4854
      %v4856 = vpop.f32.mrf.mxu0
      %v4857 = vadd.f32 %v4165, %v4856
      %4858 = vdwg.mxu0
      %4859 = vmatprep.subr.bf16.mxu0 %v4415
      %4860 = vmatpush1.bf16.msra.mxu0 %v4414
      %4861 = vmatprep.subr.bf16.mxu0 %v4408
      %4862 = vmatpush1.bf16.msra.mxu0 %v4407
      %4863 = vmatprep.subr.bf16.mxu0 %v4401
      %4864 = vmatpush1.bf16.msra.mxu0 %v4400
      %4865 = vmatprep.subr.bf16.mxu0 %v4394
      %4866 = vmatpush1.bf16.msra.mxu0 %v4393
      %4867 = vmatprep.subr.bf16.mxu0 %v4387
      %4868 = vmatpush1.bf16.msra.mxu0 %v4386
      %4869 = vmatprep.subr.bf16.mxu0 %v4380
      %4870 = vmatpush1.bf16.msra.mxu0 %v4379
      %4871 = vmatprep.subr.bf16.mxu0 %v4373
      %4872 = vmatpush1.bf16.msra.mxu0 %v4372
      %4873 = vmatprep.subr.bf16.mxu0 %v4366
      %4874 = vmatpush1.bf16.msra.mxu0 %v4365
      %4875 = vmatprep.subr.bf16.mxu0 0
      %4876 = vmatpush2.bf16.msra.mxu0 0
      %4877 = vmatprep.subr.bf16.mxu0 0
      %4878 = vmatpush2.bf16.msra.mxu0 0
      %4879 = vmatprep.subr.bf16.mxu0 0
      %4880 = vmatpush2.bf16.msra.mxu0 0
      %4881 = vmatprep.subr.bf16.mxu0 0
      %4882 = vmatpush2.bf16.msra.mxu0 0
      %4883 = vmatprep.subr.bf16.mxu0 0
      %4884 = vmatpush2.bf16.msra.mxu0 0
      %4885 = vmatprep.subr.bf16.mxu0 0
      %4886 = vmatpush2.bf16.msra.mxu0 0
      %4887 = vmatprep.subr.bf16.mxu0 0
      %4888 = vmatpush2.bf16.msra.mxu0 0
      %4889 = vmatprep.subr.bf16.mxu0 0
      %4890 = vmatpush2.bf16.msra.mxu0 0
      %4891 = vmatprep.mubr.bf16.mxu0 0
      %4892 = vmatmul.mubr.bf16.gmra.mxu0 %v4068
      %v4893 = vpop.f32.mrf.mxu0
      %v4894 = vadd.f32 %v4169, %v4893
      %v4895 = vpop.f32.mrf.mxu0
      %v4896 = vadd.f32 %v4173, %v4895
      %v4897 = vpop.f32.mrf.mxu0
      %v4898 = vadd.f32 %v4169, %v4897
      %v4899 = vpop.f32.mrf.mxu0
      %v4900 = vadd.f32 %v4173, %v4899
      %4901 = vmatprep.mubr.bf16.mxu0 0
      %4902 = vmatmul.mubr.bf16.gmra.mxu0 %v4069
      %v4903 = vpop.f32.mrf.mxu0
      %v4904 = vadd.f32 %v4169, %v4903
      %v4905 = vpop.f32.mrf.mxu0
      %v4906 = vadd.f32 %v4173, %v4905
      %v4907 = vpop.f32.mrf.mxu0
      %v4908 = vadd.f32 %v4169, %v4907
      %v4909 = vpop.f32.mrf.mxu0
      %v4910 = vadd.f32 %v4173, %v4909
      %4911 = vmatprep.mubr.bf16.mxu0 0
      %4912 = vmatmul.mubr.bf16.gmra.mxu0 %v4070
      %v4913 = vpop.f32.mrf.mxu0
      %v4914 = vadd.f32 %v4169, %v4913
      %v4915 = vpop.f32.mrf.mxu0
      %v4916 = vadd.f32 %v4173, %v4915
      %v4917 = vpop.f32.mrf.mxu0
      %v4918 = vadd.f32 %v4169, %v4917
      %v4919 = vpop.f32.mrf.mxu0
      %v4920 = vadd.f32 %v4173, %v4919
      %4921 = vmatprep.mubr.bf16.mxu0 0
      %4922 = vmatmul.mubr.bf16.gmra.mxu0 %v4071
      %v4923 = vpop.f32.mrf.mxu0
      %v4924 = vadd.f32 %v4169, %v4923
      %v4925 = vpop.f32.mrf.mxu0
      %v4926 = vadd.f32 %v4173, %v4925
      %v4927 = vpop.f32.mrf.mxu0
      %v4928 = vadd.f32 %v4169, %v4927
      %v4929 = vpop.f32.mrf.mxu0
      %v4930 = vadd.f32 %v4173, %v4929
      %4931 = vmatprep.mubr.bf16.mxu0 0
      %4932 = vmatmul.mubr.bf16.gmra.mxu0 %v4072
      %v4933 = vpop.f32.mrf.mxu0
      %v4934 = vadd.f32 %v4169, %v4933
      %v4935 = vpop.f32.mrf.mxu0
      %v4936 = vadd.f32 %v4173, %v4935
      %v4937 = vpop.f32.mrf.mxu0
      %v4938 = vadd.f32 %v4169, %v4937
      %v4939 = vpop.f32.mrf.mxu0
      %v4940 = vadd.f32 %v4173, %v4939
      %4941 = vmatprep.mubr.bf16.mxu0 0
      %4942 = vmatmul.mubr.bf16.gmra.mxu0 %v4073
      %v4943 = vpop.f32.mrf.mxu0
      %v4944 = vadd.f32 %v4169, %v4943
      %v4945 = vpop.f32.mrf.mxu0
      %v4946 = vadd.f32 %v4173, %v4945
      %v4947 = vpop.f32.mrf.mxu0
      %v4948 = vadd.f32 %v4169, %v4947
      %v4949 = vpop.f32.mrf.mxu0
      %v4950 = vadd.f32 %v4173, %v4949
      %4951 = vmatprep.mubr.bf16.mxu0 0
      %4952 = vmatmul.mubr.bf16.gmra.mxu0 %v4074
      %v4953 = vpop.f32.mrf.mxu0
      %v4954 = vadd.f32 %v4169, %v4953
      %v4955 = vpop.f32.mrf.mxu0
      %v4956 = vadd.f32 %v4173, %v4955
      %v4957 = vpop.f32.mrf.mxu0
      %v4958 = vadd.f32 %v4169, %v4957
      %v4959 = vpop.f32.mrf.mxu0
      %v4960 = vadd.f32 %v4173, %v4959
      %4961 = vmatprep.mubr.bf16.mxu0 0
      %4962 = vmatmul.mubr.bf16.gmra.mxu0 %v4075
      %v4963 = vpop.f32.mrf.mxu0
      %v4964 = vadd.f32 %v4169, %v4963
      %v4965 = vpop.f32.mrf.mxu0
      %v4966 = vadd.f32 %v4173, %v4965
      %v4967 = vpop.f32.mrf.mxu0
      %v4968 = vadd.f32 %v4169, %v4967
      %v4969 = vpop.f32.mrf.mxu0
      %v4970 = vadd.f32 %v4173, %v4969
      %4971 = vmatprep.mubr.bf16.mxu0 0
      %4972 = vmatmul.mubr.bf16.gmra.mxu0 %v4076
      %v4973 = vpop.f32.mrf.mxu0
      %v4974 = vadd.f32 %v4169, %v4973
      %v4975 = vpop.f32.mrf.mxu0
      %v4976 = vadd.f32 %v4173, %v4975
      %v4977 = vpop.f32.mrf.mxu0
      %v4978 = vadd.f32 %v4169, %v4977
      %v4979 = vpop.f32.mrf.mxu0
      %v4980 = vadd.f32 %v4173, %v4979
      %4981 = vmatprep.mubr.bf16.mxu0 0
      %4982 = vmatmul.mubr.bf16.gmra.mxu0 %v4077
      %v4983 = vpop.f32.mrf.mxu0
      %v4984 = vadd.f32 %v4169, %v4983
      %v4985 = vpop.f32.mrf.mxu0
      %v4986 = vadd.f32 %v4173, %v4985
      %v4987 = vpop.f32.mrf.mxu0
      %v4988 = vadd.f32 %v4169, %v4987
      %v4989 = vpop.f32.mrf.mxu0
      %v4990 = vadd.f32 %v4173, %v4989
      %4991 = vmatprep.mubr.bf16.mxu0 0
      %4992 = vmatmul.mubr.bf16.gmra.mxu0 %v4078
      %v4993 = vpop.f32.mrf.mxu0
      %v4994 = vadd.f32 %v4169, %v4993
      %v4995 = vpop.f32.mrf.mxu0
      %v4996 = vadd.f32 %v4173, %v4995
      %v4997 = vpop.f32.mrf.mxu0
      %v4998 = vadd.f32 %v4169, %v4997
      %v4999 = vpop.f32.mrf.mxu0
      %v5000 = vadd.f32 %v4173, %v4999
      %5001 = vmatprep.mubr.bf16.mxu0 0
      %5002 = vmatmul.mubr.bf16.gmra.mxu0 %v4079
      %v5003 = vpop.f32.mrf.mxu0
      %v5004 = vadd.f32 %v4169, %v5003
      %v5005 = vpop.f32.mrf.mxu0
      %v5006 = vadd.f32 %v4173, %v5005
      %v5007 = vpop.f32.mrf.mxu0
      %v5008 = vadd.f32 %v4169, %v5007
      %v5009 = vpop.f32.mrf.mxu0
      %v5010 = vadd.f32 %v4173, %v5009
      %5011 = vmatprep.mubr.bf16.mxu0 0
      %5012 = vmatmul.mubr.bf16.gmra.mxu0 %v4080
      %v5013 = vpop.f32.mrf.mxu0
      %v5014 = vadd.f32 %v4169, %v5013
      %v5015 = vpop.f32.mrf.mxu0
      %v5016 = vadd.f32 %v4173, %v5015
      %v5017 = vpop.f32.mrf.mxu0
      %v5018 = vadd.f32 %v4169, %v5017
      %v5019 = vpop.f32.mrf.mxu0
      %v5020 = vadd.f32 %v4173, %v5019
      %5021 = vmatprep.mubr.bf16.mxu0 0
      %5022 = vmatmul.mubr.bf16.gmra.mxu0 %v4081
      %v5023 = vpop.f32.mrf.mxu0
      %v5024 = vadd.f32 %v4169, %v5023
      %v5025 = vpop.f32.mrf.mxu0
      %v5026 = vadd.f32 %v4173, %v5025
      %v5027 = vpop.f32.mrf.mxu0
      %v5028 = vadd.f32 %v4169, %v5027
      %v5029 = vpop.f32.mrf.mxu0
      %v5030 = vadd.f32 %v4173, %v5029
      %5031 = vmatprep.mubr.bf16.mxu0 0
      %5032 = vmatmul.mubr.bf16.gmra.mxu0 %v4082
      %v5033 = vpop.f32.mrf.mxu0
      %v5034 = vadd.f32 %v4169, %v5033
      %v5035 = vpop.f32.mrf.mxu0
      %v5036 = vadd.f32 %v4173, %v5035
      %v5037 = vpop.f32.mrf.mxu0
      %v5038 = vadd.f32 %v4169, %v5037
      %v5039 = vpop.f32.mrf.mxu0
      %v5040 = vadd.f32 %v4173, %v5039
      %5041 = vmatprep.mubr.bf16.mxu0 0
      %5042 = vmatmul.mubr.bf16.gmra.mxu0 %v4083
      %v5043 = vpop.f32.mrf.mxu0
      %v5044 = vadd.f32 %v4169, %v5043
      %v5045 = vpop.f32.mrf.mxu0
      %v5046 = vadd.f32 %v4173, %v5045
      %v5047 = vpop.f32.mrf.mxu0
      %v5048 = vadd.f32 %v4169, %v5047
      %v5049 = vpop.f32.mrf.mxu0
      %v5050 = vadd.f32 %v4173, %v5049
      %5051 = vdwg.mxu0
      %5052 = vmatprep.subr.bf16.mxu0 0
      %5053 = vmatpush1.bf16.msra.mxu0 %v4416
      %5054 = vmatprep.subr.bf16.mxu0 0
      %5055 = vmatpush1.bf16.msra.mxu0 %v4409
      %5056 = vmatprep.subr.bf16.mxu0 0
      %5057 = vmatpush1.bf16.msra.mxu0 %v4402
      %5058 = vmatprep.subr.bf16.mxu0 0
      %5059 = vmatpush1.bf16.msra.mxu0 %v4395
      %5060 = vmatprep.subr.bf16.mxu0 0
      %5061 = vmatpush1.bf16.msra.mxu0 %v4388
      %5062 = vmatprep.subr.bf16.mxu0 0
      %5063 = vmatpush1.bf16.msra.mxu0 %v4381
      %5064 = vmatprep.subr.bf16.mxu0 0
      %5065 = vmatpush1.bf16.msra.mxu0 %v4374
      %5066 = vmatprep.subr.bf16.mxu0 0
      %5067 = vmatpush1.bf16.msra.mxu0 %v4367
      %5068 = vmatprep.subr.bf16.mxu0 0
      %5069 = vmatpush2.bf16.msra.mxu0 0
      %5070 = vmatprep.subr.bf16.mxu0 0
      %5071 = vmatpush2.bf16.msra.mxu0 0
      %5072 = vmatprep.subr.bf16.mxu0 0
      %5073 = vmatpush2.bf16.msra.mxu0 0
      %5074 = vmatprep.subr.bf16.mxu0 0
      %5075 = vmatpush2.bf16.msra.mxu0 0
      %5076 = vmatprep.subr.bf16.mxu0 0
      %5077 = vmatpush2.bf16.msra.mxu0 0
      %5078 = vmatprep.subr.bf16.mxu0 0
      %5079 = vmatpush2.bf16.msra.mxu0 0
      %5080 = vmatprep.subr.bf16.mxu0 0
      %5081 = vmatpush2.bf16.msra.mxu0 0
      %5082 = vmatprep.subr.bf16.mxu0 0
      %5083 = vmatpush2.bf16.msra.mxu0 0
      %5084 = vmatprep.mubr.bf16.mxu0 0
      %5085 = vmatmul.mubr.bf16.gmra.mxu0 %v4068
      %v5086 = vpop.f32.mrf.mxu0
      %v5087 = vadd.f32 %v4177, %v5086
      %v5088 = vpop.f32.mrf.mxu0
      %v5089 = vpop.f32.mrf.mxu0
      %v5090 = vadd.f32 %v4177, %v5089
      %v5091 = vpop.f32.mrf.mxu0
      %5092 = vmatprep.mubr.bf16.mxu0 0
      %5093 = vmatmul.mubr.bf16.gmra.mxu0 %v4069
      %v5094 = vpop.f32.mrf.mxu0
      %v5095 = vadd.f32 %v4177, %v5094
      %v5096 = vpop.f32.mrf.mxu0
      %v5097 = vpop.f32.mrf.mxu0
      %v5098 = vadd.f32 %v4177, %v5097
      %v5099 = vpop.f32.mrf.mxu0
      %5100 = vmatprep.mubr.bf16.mxu0 0
      %5101 = vmatmul.mubr.bf16.gmra.mxu0 %v4070
      %v5102 = vpop.f32.mrf.mxu0
      %v5103 = vadd.f32 %v4177, %v5102
      %v5104 = vpop.f32.mrf.mxu0
      %v5105 = vpop.f32.mrf.mxu0
      %v5106 = vadd.f32 %v4177, %v5105
      %v5107 = vpop.f32.mrf.mxu0
      %5108 = vmatprep.mubr.bf16.mxu0 0
      %5109 = vmatmul.mubr.bf16.gmra.mxu0 %v4071
      %v5110 = vpop.f32.mrf.mxu0
      %v5111 = vadd.f32 %v4177, %v5110
      %v5112 = vpop.f32.mrf.mxu0
      %v5113 = vpop.f32.mrf.mxu0
      %v5114 = vadd.f32 %v4177, %v5113
      %v5115 = vpop.f32.mrf.mxu0
      %5116 = vmatprep.mubr.bf16.mxu0 0
      %5117 = vmatmul.mubr.bf16.gmra.mxu0 %v4072
      %v5118 = vpop.f32.mrf.mxu0
      %v5119 = vadd.f32 %v4177, %v5118
      %v5120 = vpop.f32.mrf.mxu0
      %v5121 = vpop.f32.mrf.mxu0
      %v5122 = vadd.f32 %v4177, %v5121
      %v5123 = vpop.f32.mrf.mxu0
      %5124 = vmatprep.mubr.bf16.mxu0 0
      %5125 = vmatmul.mubr.bf16.gmra.mxu0 %v4073
      %v5126 = vpop.f32.mrf.mxu0
      %v5127 = vadd.f32 %v4177, %v5126
      %v5128 = vpop.f32.mrf.mxu0
      %v5129 = vpop.f32.mrf.mxu0
      %v5130 = vadd.f32 %v4177, %v5129
      %v5131 = vpop.f32.mrf.mxu0
      %5132 = vmatprep.mubr.bf16.mxu0 0
      %5133 = vmatmul.mubr.bf16.gmra.mxu0 %v4074
      %v5134 = vpop.f32.mrf.mxu0
      %v5135 = vadd.f32 %v4177, %v5134
      %v5136 = vpop.f32.mrf.mxu0
      %v5137 = vpop.f32.mrf.mxu0
      %v5138 = vadd.f32 %v4177, %v5137
      %v5139 = vpop.f32.mrf.mxu0
      %5140 = vmatprep.mubr.bf16.mxu0 0
      %5141 = vmatmul.mubr.bf16.gmra.mxu0 %v4075
      %v5142 = vpop.f32.mrf.mxu0
      %v5143 = vadd.f32 %v4177, %v5142
      %v5144 = vpop.f32.mrf.mxu0
      %v5145 = vpop.f32.mrf.mxu0
      %v5146 = vadd.f32 %v4177, %v5145
      %v5147 = vpop.f32.mrf.mxu0
      %5148 = vmatprep.mubr.bf16.mxu0 0
      %5149 = vmatmul.mubr.bf16.gmra.mxu0 %v4076
      %v5150 = vpop.f32.mrf.mxu0
      %v5151 = vadd.f32 %v4177, %v5150
      %v5152 = vpop.f32.mrf.mxu0
      %v5153 = vpop.f32.mrf.mxu0
      %v5154 = vadd.f32 %v4177, %v5153
      %v5155 = vpop.f32.mrf.mxu0
      %5156 = vmatprep.mubr.bf16.mxu0 0
      %5157 = vmatmul.mubr.bf16.gmra.mxu0 %v4077
      %v5158 = vpop.f32.mrf.mxu0
      %v5159 = vadd.f32 %v4177, %v5158
      %v5160 = vpop.f32.mrf.mxu0
      %v5161 = vpop.f32.mrf.mxu0
      %v5162 = vadd.f32 %v4177, %v5161
      %v5163 = vpop.f32.mrf.mxu0
      %5164 = vmatprep.mubr.bf16.mxu0 0
      %5165 = vmatmul.mubr.bf16.gmra.mxu0 %v4078
      %v5166 = vpop.f32.mrf.mxu0
      %v5167 = vadd.f32 %v4177, %v5166
      %v5168 = vpop.f32.mrf.mxu0
      %v5169 = vpop.f32.mrf.mxu0
      %v5170 = vadd.f32 %v4177, %v5169
      %v5171 = vpop.f32.mrf.mxu0
      %5172 = vmatprep.mubr.bf16.mxu0 0
      %5173 = vmatmul.mubr.bf16.gmra.mxu0 %v4079
      %v5174 = vpop.f32.mrf.mxu0
      %v5175 = vadd.f32 %v4177, %v5174
      %v5176 = vpop.f32.mrf.mxu0
      %v5177 = vpop.f32.mrf.mxu0
      %v5178 = vadd.f32 %v4177, %v5177
      %v5179 = vpop.f32.mrf.mxu0
      %5180 = vmatprep.mubr.bf16.mxu0 0
      %5181 = vmatmul.mubr.bf16.gmra.mxu0 %v4080
      %v5182 = vpop.f32.mrf.mxu0
      %v5183 = vadd.f32 %v4177, %v5182
      %v5184 = vpop.f32.mrf.mxu0
      %v5185 = vpop.f32.mrf.mxu0
      %v5186 = vadd.f32 %v4177, %v5185
      %v5187 = vpop.f32.mrf.mxu0
      %5188 = vmatprep.mubr.bf16.mxu0 0
      %5189 = vmatmul.mubr.bf16.gmra.mxu0 %v4081
      %v5190 = vpop.f32.mrf.mxu0
      %v5191 = vadd.f32 %v4177, %v5190
      %v5192 = vpop.f32.mrf.mxu0
      %v5193 = vpop.f32.mrf.mxu0
      %v5194 = vadd.f32 %v4177, %v5193
      %v5195 = vpop.f32.mrf.mxu0
      %5196 = vmatprep.mubr.bf16.mxu0 0
      %5197 = vmatmul.mubr.bf16.gmra.mxu0 %v4082
      %v5198 = vpop.f32.mrf.mxu0
      %v5199 = vadd.f32 %v4177, %v5198
      %v5200 = vpop.f32.mrf.mxu0
      %v5201 = vpop.f32.mrf.mxu0
      %v5202 = vadd.f32 %v4177, %v5201
      %v5203 = vpop.f32.mrf.mxu0
      %5204 = vmatprep.mubr.bf16.mxu0 0
      %5205 = vmatmul.mubr.bf16.gmra.mxu0 %v4083
      %v5206 = vpop.f32.mrf.mxu0
      %v5207 = vadd.f32 %v4177, %v5206
      %v5208 = vpop.f32.mrf.mxu0
      %v5209 = vpop.f32.mrf.mxu0
      %v5210 = vadd.f32 %v4177, %v5209
      %v5211 = vpop.f32.mrf.mxu0
      %5212 = vdwg.mxu0
      %v5213 = vsub.f32 0.0, %v4508
      %v5214 = vsub.f32 0.0, %v4510
      %v5215 = vsub.f32 0.0, %v4701
      %v5216 = vsub.f32 0.0, %v4703
      %v5217 = vsub.f32 0.0, %v4894
      %v5218 = vsub.f32 0.0, %v4896
      %v5219 = vsub.f32 0.0, %v5087
      %v5220 = vsub.f32 0.0, %v4512
      %v5221 = vsub.f32 0.0, %v4514
      %v5222 = vsub.f32 0.0, %v4705
      %v5223 = vsub.f32 0.0, %v4707
      %v5224 = vsub.f32 0.0, %v4898
      %v5225 = vsub.f32 0.0, %v4900
      %v5226 = vsub.f32 0.0, %v5090
      %v5227 = vsub.f32 0.0, %v4518
      %v5228 = vsub.f32 0.0, %v4520
      %v5229 = vsub.f32 0.0, %v4711
      %v5230 = vsub.f32 0.0, %v4713
      %v5231 = vsub.f32 0.0, %v4904
      %v5232 = vsub.f32 0.0, %v4906
      %v5233 = vsub.f32 0.0, %v5095
      %v5234 = vsub.f32 0.0, %v4522
      %v5235 = vsub.f32 0.0, %v4524
      %v5236 = vsub.f32 0.0, %v4715
      %v5237 = vsub.f32 0.0, %v4717
      %v5238 = vsub.f32 0.0, %v4908
      %v5239 = vsub.f32 0.0, %v4910
      %v5240 = vsub.f32 0.0, %v5098
      %v5241 = vsub.f32 0.0, %v4528
      %v5242 = vsub.f32 0.0, %v4530
      %v5243 = vsub.f32 0.0, %v4721
      %v5244 = vsub.f32 0.0, %v4723
      %v5245 = vsub.f32 0.0, %v4914
      %v5246 = vsub.f32 0.0, %v4916
      %v5247 = vsub.f32 0.0, %v5103
      %v5248 = vsub.f32 0.0, %v4532
      %v5249 = vsub.f32 0.0, %v4534
      %v5250 = vsub.f32 0.0, %v4725
      %v5251 = vsub.f32 0.0, %v4727
      %v5252 = vsub.f32 0.0, %v4918
      %v5253 = vsub.f32 0.0, %v4920
      %v5254 = vsub.f32 0.0, %v5106
      %v5255 = vsub.f32 0.0, %v4538
      %v5256 = vsub.f32 0.0, %v4540
      %v5257 = vsub.f32 0.0, %v4731
      %v5258 = vsub.f32 0.0, %v4733
      %v5259 = vsub.f32 0.0, %v4924
      %v5260 = vsub.f32 0.0, %v4926
      %v5261 = vsub.f32 0.0, %v5111
      %v5262 = vsub.f32 0.0, %v4542
      %v5263 = vsub.f32 0.0, %v4544
      %v5264 = vsub.f32 0.0, %v4735
      %v5265 = vsub.f32 0.0, %v4737
      %v5266 = vsub.f32 0.0, %v4928
      %v5267 = vsub.f32 0.0, %v4930
      %v5268 = vsub.f32 0.0, %v5114
      %v5269 = vsub.f32 0.0, %v4548
      %v5270 = vsub.f32 0.0, %v4550
      %v5271 = vsub.f32 0.0, %v4741
      %v5272 = vsub.f32 0.0, %v4743
      %v5273 = vsub.f32 0.0, %v4934
      %v5274 = vsub.f32 0.0, %v4936
      %v5275 = vsub.f32 0.0, %v5119
      %v5276 = vsub.f32 0.0, %v4552
      %v5277 = vsub.f32 0.0, %v4554
      %v5278 = vsub.f32 0.0, %v4745
      %v5279 = vsub.f32 0.0, %v4747
      %v5280 = vsub.f32 0.0, %v4938
      %v5281 = vsub.f32 0.0, %v4940
      %v5282 = vsub.f32 0.0, %v5122
      %v5283 = vsub.f32 0.0, %v4558
      %v5284 = vsub.f32 0.0, %v4560
      %v5285 = vsub.f32 0.0, %v4751
      %v5286 = vsub.f32 0.0, %v4753
      %v5287 = vsub.f32 0.0, %v4944
      %v5288 = vsub.f32 0.0, %v4946
      %v5289 = vsub.f32 0.0, %v5127
      %v5290 = vsub.f32 0.0, %v4562
      %v5291 = vsub.f32 0.0, %v4564
      %v5292 = vsub.f32 0.0, %v4755
      %v5293 = vsub.f32 0.0, %v4757
      %v5294 = vsub.f32 0.0, %v4948
      %v5295 = vsub.f32 0.0, %v4950
      %v5296 = vsub.f32 0.0, %v5130
      %v5297 = vsub.f32 0.0, %v4568
      %v5298 = vsub.f32 0.0, %v4570
      %v5299 = vsub.f32 0.0, %v4761
      %v5300 = vsub.f32 0.0, %v4763
      %v5301 = vsub.f32 0.0, %v4954
      %v5302 = vsub.f32 0.0, %v4956
      %v5303 = vsub.f32 0.0, %v5135
      %v5304 = vsub.f32 0.0, %v4572
      %v5305 = vsub.f32 0.0, %v4574
      %v5306 = vsub.f32 0.0, %v4765
      %v5307 = vsub.f32 0.0, %v4767
      %v5308 = vsub.f32 0.0, %v4958
      %v5309 = vsub.f32 0.0, %v4960
      %v5310 = vsub.f32 0.0, %v5138
      %v5311 = vsub.f32 0.0, %v4578
      %v5312 = vsub.f32 0.0, %v4580
      %v5313 = vsub.f32 0.0, %v4771
      %v5314 = vsub.f32 0.0, %v4773
      %v5315 = vsub.f32 0.0, %v4964
      %v5316 = vsub.f32 0.0, %v4966
      %v5317 = vsub.f32 0.0, %v5143
      %v5318 = vsub.f32 0.0, %v4582
      %v5319 = vsub.f32 0.0, %v4584
      %v5320 = vsub.f32 0.0, %v4775
      %v5321 = vsub.f32 0.0, %v4777
      %v5322 = vsub.f32 0.0, %v4968
      %v5323 = vsub.f32 0.0, %v4970
      %v5324 = vsub.f32 0.0, %v5146
      %v5325 = vsub.f32 0.0, %v4588
      %v5326 = vsub.f32 0.0, %v4590
      %v5327 = vsub.f32 0.0, %v4781
      %v5328 = vsub.f32 0.0, %v4783
      %v5329 = vsub.f32 0.0, %v4974
      %v5330 = vsub.f32 0.0, %v4976
      %v5331 = vsub.f32 0.0, %v5151
      %v5332 = vsub.f32 0.0, %v4592
      %v5333 = vsub.f32 0.0, %v4594
      %v5334 = vsub.f32 0.0, %v4785
      %v5335 = vsub.f32 0.0, %v4787
      %v5336 = vsub.f32 0.0, %v4978
      %v5337 = vsub.f32 0.0, %v4980
      %v5338 = vsub.f32 0.0, %v5154
      %v5339 = vsub.f32 0.0, %v4598
      %v5340 = vsub.f32 0.0, %v4600
      %v5341 = vsub.f32 0.0, %v4791
      %v5342 = vsub.f32 0.0, %v4793
      %v5343 = vsub.f32 0.0, %v4984
      %v5344 = vsub.f32 0.0, %v4986
      %v5345 = vsub.f32 0.0, %v5159
      %v5346 = vsub.f32 0.0, %v4602
      %v5347 = vsub.f32 0.0, %v4604
      %v5348 = vsub.f32 0.0, %v4795
      %v5349 = vsub.f32 0.0, %v4797
      %v5350 = vsub.f32 0.0, %v4988
      %v5351 = vsub.f32 0.0, %v4990
      %v5352 = vsub.f32 0.0, %v5162
      %v5353 = vsub.f32 0.0, %v4608
      %v5354 = vsub.f32 0.0, %v4610
      %v5355 = vsub.f32 0.0, %v4801
      %v5356 = vsub.f32 0.0, %v4803
      %v5357 = vsub.f32 0.0, %v4994
      %v5358 = vsub.f32 0.0, %v4996
      %v5359 = vsub.f32 0.0, %v5167
      %v5360 = vsub.f32 0.0, %v4612
      %v5361 = vsub.f32 0.0, %v4614
      %v5362 = vsub.f32 0.0, %v4805
      %v5363 = vsub.f32 0.0, %v4807
      %v5364 = vsub.f32 0.0, %v4998
      %v5365 = vsub.f32 0.0, %v5000
      %v5366 = vsub.f32 0.0, %v5170
      %v5367 = vsub.f32 0.0, %v4618
      %v5368 = vsub.f32 0.0, %v4620
      %v5369 = vsub.f32 0.0, %v4811
      %v5370 = vsub.f32 0.0, %v4813
      %v5371 = vsub.f32 0.0, %v5004
      %v5372 = vsub.f32 0.0, %v5006
      %v5373 = vsub.f32 0.0, %v5175
      %v5374 = vsub.f32 0.0, %v4622
      %v5375 = vsub.f32 0.0, %v4624
      %v5376 = vsub.f32 0.0, %v4815
      %v5377 = vsub.f32 0.0, %v4817
      %v5378 = vsub.f32 0.0, %v5008
      %v5379 = vsub.f32 0.0, %v5010
      %v5380 = vsub.f32 0.0, %v5178
      %v5381 = vsub.f32 0.0, %v4628
      %v5382 = vsub.f32 0.0, %v4630
      %v5383 = vsub.f32 0.0, %v4821
      %v5384 = vsub.f32 0.0, %v4823
      %v5385 = vsub.f32 0.0, %v5014
      %v5386 = vsub.f32 0.0, %v5016
      %v5387 = vsub.f32 0.0, %v5183
      %v5388 = vsub.f32 0.0, %v4632
      %v5389 = vsub.f32 0.0, %v4634
      %v5390 = vsub.f32 0.0, %v4825
      %v5391 = vsub.f32 0.0, %v4827
      %v5392 = vsub.f32 0.0, %v5018
      %v5393 = vsub.f32 0.0, %v5020
      %v5394 = vsub.f32 0.0, %v5186
      %v5395 = vsub.f32 0.0, %v4638
      %v5396 = vsub.f32 0.0, %v4640
      %v5397 = vsub.f32 0.0, %v4831
      %v5398 = vsub.f32 0.0, %v4833
      %v5399 = vsub.f32 0.0, %v5024
      %v5400 = vsub.f32 0.0, %v5026
      %v5401 = vsub.f32 0.0, %v5191
      %v5402 = vsub.f32 0.0, %v4642
      %v5403 = vsub.f32 0.0, %v4644
      %v5404 = vsub.f32 0.0, %v4835
      %v5405 = vsub.f32 0.0, %v4837
      %v5406 = vsub.f32 0.0, %v5028
      %v5407 = vsub.f32 0.0, %v5030
      %v5408 = vsub.f32 0.0, %v5194
      %v5409 = vsub.f32 0.0, %v4648
      %v5410 = vsub.f32 0.0, %v4650
      %v5411 = vsub.f32 0.0, %v4841
      %v5412 = vsub.f32 0.0, %v4843
      %v5413 = vsub.f32 0.0, %v5034
      %v5414 = vsub.f32 0.0, %v5036
      %v5415 = vsub.f32 0.0, %v5199
      %v5416 = vsub.f32 0.0, %v4652
      %v5417 = vsub.f32 0.0, %v4654
      %v5418 = vsub.f32 0.0, %v4845
      %v5419 = vsub.f32 0.0, %v4847
      %v5420 = vsub.f32 0.0, %v5038
      %v5421 = vsub.f32 0.0, %v5040
      %v5422 = vsub.f32 0.0, %v5202
      %v5423 = vsub.f32 0.0, %v4658
      %v5424 = vsub.f32 0.0, %v4660
      %v5425 = vsub.f32 0.0, %v4851
      %v5426 = vsub.f32 0.0, %v4853
      %v5427 = vsub.f32 0.0, %v5044
      %v5428 = vsub.f32 0.0, %v5046
      %v5429 = vsub.f32 0.0, %v5207
      %v5430 = vsub.f32 0.0, %v4662
      %v5431 = vsub.f32 0.0, %v4664
      %v5432 = vsub.f32 0.0, %v4855
      %v5433 = vsub.f32 0.0, %v4857
      %v5434 = vsub.f32 0.0, %v5048
      %v5435 = vsub.f32 0.0, %v5050
      %v5436 = vsub.f32 0.0, %v5210
      %v5437 = vmul.f32 %v5213, 1.442695
      %v5438 = vpow.pop %v5437
      %v5439 = vmul.f32 %v5214, 1.442695
      %v5440 = vpow.pop %v5439
      %v5441 = vmul.f32 %v5215, 1.442695
      %v5442 = vpow.pop %v5441
      %v5443 = vmul.f32 %v5216, 1.442695
      %v5444 = vpow.pop %v5443
      %v5445 = vmul.f32 %v5217, 1.442695
      %v5446 = vpow.pop %v5445
      %v5447 = vmul.f32 %v5218, 1.442695
      %v5448 = vpow.pop %v5447
      %v5449 = vmul.f32 %v5219, 1.442695
      %v5450 = vpow.pop %v5449
      %v5451 = vmul.f32 %v5220, 1.442695
      %v5452 = vpow.pop %v5451
      %v5453 = vmul.f32 %v5221, 1.442695
      %v5454 = vpow.pop %v5453
      %v5455 = vmul.f32 %v5222, 1.442695
      %v5456 = vpow.pop %v5455
      %v5457 = vmul.f32 %v5223, 1.442695
      %v5458 = vpow.pop %v5457
      %v5459 = vmul.f32 %v5224, 1.442695
      %v5460 = vpow.pop %v5459
      %v5461 = vmul.f32 %v5225, 1.442695
      %v5462 = vpow.pop %v5461
      %v5463 = vmul.f32 %v5226, 1.442695
      %v5464 = vpow.pop %v5463
      %v5465 = vmul.f32 %v5227, 1.442695
      %v5466 = vpow.pop %v5465
      %v5467 = vmul.f32 %v5228, 1.442695
      %v5468 = vpow.pop %v5467
      %v5469 = vmul.f32 %v5229, 1.442695
      %v5470 = vpow.pop %v5469
      %v5471 = vmul.f32 %v5230, 1.442695
      %v5472 = vpow.pop %v5471
      %v5473 = vmul.f32 %v5231, 1.442695
      %v5474 = vpow.pop %v5473
      %v5475 = vmul.f32 %v5232, 1.442695
      %v5476 = vpow.pop %v5475
      %v5477 = vmul.f32 %v5233, 1.442695
      %v5478 = vpow.pop %v5477
      %v5479 = vmul.f32 %v5234, 1.442695
      %v5480 = vpow.pop %v5479
      %v5481 = vmul.f32 %v5235, 1.442695
      %v5482 = vpow.pop %v5481
      %v5483 = vmul.f32 %v5236, 1.442695
      %v5484 = vpow.pop %v5483
      %v5485 = vmul.f32 %v5237, 1.442695
      %v5486 = vpow.pop %v5485
      %v5487 = vmul.f32 %v5238, 1.442695
      %v5488 = vpow.pop %v5487
      %v5489 = vmul.f32 %v5239, 1.442695
      %v5490 = vpow.pop %v5489
      %v5491 = vmul.f32 %v5240, 1.442695
      %v5492 = vpow.pop %v5491
      %v5493 = vmul.f32 %v5241, 1.442695
      %v5494 = vpow.pop %v5493
      %v5495 = vmul.f32 %v5242, 1.442695
      %v5496 = vpow.pop %v5495
      %v5497 = vmul.f32 %v5243, 1.442695
      %v5498 = vpow.pop %v5497
      %v5499 = vmul.f32 %v5244, 1.442695
      %v5500 = vpow.pop %v5499
      %v5501 = vmul.f32 %v5245, 1.442695
      %v5502 = vpow.pop %v5501
      %v5503 = vmul.f32 %v5246, 1.442695
      %v5504 = vpow.pop %v5503
      %v5505 = vmul.f32 %v5247, 1.442695
      %v5506 = vpow.pop %v5505
      %v5507 = vmul.f32 %v5248, 1.442695
      %v5508 = vpow.pop %v5507
      %v5509 = vmul.f32 %v5249, 1.442695
      %v5510 = vpow.pop %v5509
      %v5511 = vmul.f32 %v5250, 1.442695
      %v5512 = vpow.pop %v5511
      %v5513 = vmul.f32 %v5251, 1.442695
      %v5514 = vpow.pop %v5513
      %v5515 = vmul.f32 %v5252, 1.442695
      %v5516 = vpow.pop %v5515
      %v5517 = vmul.f32 %v5253, 1.442695
      %v5518 = vpow.pop %v5517
      %v5519 = vmul.f32 %v5254, 1.442695
      %v5520 = vpow.pop %v5519
      %v5521 = vmul.f32 %v5255, 1.442695
      %v5522 = vpow.pop %v5521
      %v5523 = vmul.f32 %v5256, 1.442695
      %v5524 = vpow.pop %v5523
      %v5525 = vmul.f32 %v5257, 1.442695
      %v5526 = vpow.pop %v5525
      %v5527 = vmul.f32 %v5258, 1.442695
      %v5528 = vpow.pop %v5527
      %v5529 = vmul.f32 %v5259, 1.442695
      %v5530 = vpow.pop %v5529
      %v5531 = vmul.f32 %v5260, 1.442695
      %v5532 = vpow.pop %v5531
      %v5533 = vmul.f32 %v5261, 1.442695
      %v5534 = vpow.pop %v5533
      %v5535 = vmul.f32 %v5262, 1.442695
      %v5536 = vpow.pop %v5535
      %v5537 = vmul.f32 %v5263, 1.442695
      %v5538 = vpow.pop %v5537
      %v5539 = vmul.f32 %v5264, 1.442695
      %v5540 = vpow.pop %v5539
      %v5541 = vmul.f32 %v5265, 1.442695
      %v5542 = vpow.pop %v5541
      %v5543 = vmul.f32 %v5266, 1.442695
      %v5544 = vpow.pop %v5543
      %v5545 = vmul.f32 %v5267, 1.442695
      %v5546 = vpow.pop %v5545
      %v5547 = vmul.f32 %v5268, 1.442695
      %v5548 = vpow.pop %v5547
      %v5549 = vmul.f32 %v5269, 1.442695
      %v5550 = vpow.pop %v5549
      %v5551 = vmul.f32 %v5270, 1.442695
      %v5552 = vpow.pop %v5551
      %v5553 = vmul.f32 %v5271, 1.442695
      %v5554 = vpow.pop %v5553
      %v5555 = vmul.f32 %v5272, 1.442695
      %v5556 = vpow.pop %v5555
      %v5557 = vmul.f32 %v5273, 1.442695
      %v5558 = vpow.pop %v5557
      %v5559 = vmul.f32 %v5274, 1.442695
      %v5560 = vpow.pop %v5559
      %v5561 = vmul.f32 %v5275, 1.442695
      %v5562 = vpow.pop %v5561
      %v5563 = vmul.f32 %v5276, 1.442695
      %v5564 = vpow.pop %v5563
      %v5565 = vmul.f32 %v5277, 1.442695
      %v5566 = vpow.pop %v5565
      %v5567 = vmul.f32 %v5278, 1.442695
      %v5568 = vpow.pop %v5567
      %v5569 = vmul.f32 %v5279, 1.442695
      %v5570 = vpow.pop %v5569
      %v5571 = vmul.f32 %v5280, 1.442695
      %v5572 = vpow.pop %v5571
      %v5573 = vmul.f32 %v5281, 1.442695
      %v5574 = vpow.pop %v5573
      %v5575 = vmul.f32 %v5282, 1.442695
      %v5576 = vpow.pop %v5575
      %v5577 = vmul.f32 %v5283, 1.442695
      %v5578 = vpow.pop %v5577
      %v5579 = vmul.f32 %v5284, 1.442695
      %v5580 = vpow.pop %v5579
      %v5581 = vmul.f32 %v5285, 1.442695
      %v5582 = vpow.pop %v5581
      %v5583 = vmul.f32 %v5286, 1.442695
      %v5584 = vpow.pop %v5583
      %v5585 = vmul.f32 %v5287, 1.442695
      %v5586 = vpow.pop %v5585
      %v5587 = vmul.f32 %v5288, 1.442695
      %v5588 = vpow.pop %v5587
      %v5589 = vmul.f32 %v5289, 1.442695
      %v5590 = vpow.pop %v5589
      %v5591 = vmul.f32 %v5290, 1.442695
      %v5592 = vpow.pop %v5591
      %v5593 = vmul.f32 %v5291, 1.442695
      %v5594 = vpow.pop %v5593
      %v5595 = vmul.f32 %v5292, 1.442695
      %v5596 = vpow.pop %v5595
      %v5597 = vmul.f32 %v5293, 1.442695
      %v5598 = vpow.pop %v5597
      %v5599 = vmul.f32 %v5294, 1.442695
      %v5600 = vpow.pop %v5599
      %v5601 = vmul.f32 %v5295, 1.442695
      %v5602 = vpow.pop %v5601
      %v5603 = vmul.f32 %v5296, 1.442695
      %v5604 = vpow.pop %v5603
      %v5605 = vmul.f32 %v5297, 1.442695
      %v5606 = vpow.pop %v5605
      %v5607 = vmul.f32 %v5298, 1.442695
      %v5608 = vpow.pop %v5607
      %v5609 = vmul.f32 %v5299, 1.442695
      %v5610 = vpow.pop %v5609
      %v5611 = vmul.f32 %v5300, 1.442695
      %v5612 = vpow.pop %v5611
      %v5613 = vmul.f32 %v5301, 1.442695
      %v5614 = vpow.pop %v5613
      %v5615 = vmul.f32 %v5302, 1.442695
      %v5616 = vpow.pop %v5615
      %v5617 = vmul.f32 %v5303, 1.442695
      %v5618 = vpow.pop %v5617
      %v5619 = vmul.f32 %v5304, 1.442695
      %v5620 = vpow.pop %v5619
      %v5621 = vmul.f32 %v5305, 1.442695
      %v5622 = vpow.pop %v5621
      %v5623 = vmul.f32 %v5306, 1.442695
      %v5624 = vpow.pop %v5623
      %v5625 = vmul.f32 %v5307, 1.442695
      %v5626 = vpow.pop %v5625
      %v5627 = vmul.f32 %v5308, 1.442695
      %v5628 = vpow.pop %v5627
      %v5629 = vmul.f32 %v5309, 1.442695
      %v5630 = vpow.pop %v5629
      %v5631 = vmul.f32 %v5310, 1.442695
      %v5632 = vpow.pop %v5631
      %v5633 = vmul.f32 %v5311, 1.442695
      %v5634 = vpow.pop %v5633
      %v5635 = vmul.f32 %v5312, 1.442695
      %v5636 = vpow.pop %v5635
      %v5637 = vmul.f32 %v5313, 1.442695
      %v5638 = vpow.pop %v5637
      %v5639 = vmul.f32 %v5314, 1.442695
      %v5640 = vpow.pop %v5639
      %v5641 = vmul.f32 %v5315, 1.442695
      %v5642 = vpow.pop %v5641
      %v5643 = vmul.f32 %v5316, 1.442695
      %v5644 = vpow.pop %v5643
      %v5645 = vmul.f32 %v5317, 1.442695
      %v5646 = vpow.pop %v5645
      %v5647 = vmul.f32 %v5318, 1.442695
      %v5648 = vpow.pop %v5647
      %v5649 = vmul.f32 %v5319, 1.442695
      %v5650 = vpow.pop %v5649
      %v5651 = vmul.f32 %v5320, 1.442695
      %v5652 = vpow.pop %v5651
      %v5653 = vmul.f32 %v5321, 1.442695
      %v5654 = vpow.pop %v5653
      %v5655 = vmul.f32 %v5322, 1.442695
      %v5656 = vpow.pop %v5655
      %v5657 = vmul.f32 %v5323, 1.442695
      %v5658 = vpow.pop %v5657
      %v5659 = vmul.f32 %v5324, 1.442695
      %v5660 = vpow.pop %v5659
      %v5661 = vmul.f32 %v5325, 1.442695
      %v5662 = vpow.pop %v5661
      %v5663 = vmul.f32 %v5326, 1.442695
      %v5664 = vpow.pop %v5663
      %v5665 = vmul.f32 %v5327, 1.442695
      %v5666 = vpow.pop %v5665
      %v5667 = vmul.f32 %v5328, 1.442695
      %v5668 = vpow.pop %v5667
      %v5669 = vmul.f32 %v5329, 1.442695
      %v5670 = vpow.pop %v5669
      %v5671 = vmul.f32 %v5330, 1.442695
      %v5672 = vpow.pop %v5671
      %v5673 = vmul.f32 %v5331, 1.442695
      %v5674 = vpow.pop %v5673
      %v5675 = vmul.f32 %v5332, 1.442695
      %v5676 = vpow.pop %v5675
      %v5677 = vmul.f32 %v5333, 1.442695
      %v5678 = vpow.pop %v5677
      %v5679 = vmul.f32 %v5334, 1.442695
      %v5680 = vpow.pop %v5679
      %v5681 = vmul.f32 %v5335, 1.442695
      %v5682 = vpow.pop %v5681
      %v5683 = vmul.f32 %v5336, 1.442695
      %v5684 = vpow.pop %v5683
      %v5685 = vmul.f32 %v5337, 1.442695
      %v5686 = vpow.pop %v5685
      %v5687 = vmul.f32 %v5338, 1.442695
      %v5688 = vpow.pop %v5687
      %v5689 = vmul.f32 %v5339, 1.442695
      %v5690 = vpow.pop %v5689
      %v5691 = vmul.f32 %v5340, 1.442695
      %v5692 = vpow.pop %v5691
      %v5693 = vmul.f32 %v5341, 1.442695
      %v5694 = vpow.pop %v5693
      %v5695 = vmul.f32 %v5342, 1.442695
      %v5696 = vpow.pop %v5695
      %v5697 = vmul.f32 %v5343, 1.442695
      %v5698 = vpow.pop %v5697
      %v5699 = vmul.f32 %v5344, 1.442695
      %v5700 = vpow.pop %v5699
      %v5701 = vmul.f32 %v5345, 1.442695
      %v5702 = vpow.pop %v5701
      %v5703 = vmul.f32 %v5346, 1.442695
      %v5704 = vpow.pop %v5703
      %v5705 = vmul.f32 %v5347, 1.442695
      %v5706 = vpow.pop %v5705
      %v5707 = vmul.f32 %v5348, 1.442695
      %v5708 = vpow.pop %v5707
      %v5709 = vmul.f32 %v5349, 1.442695
      %v5710 = vpow.pop %v5709
      %v5711 = vmul.f32 %v5350, 1.442695
      %v5712 = vpow.pop %v5711
      %v5713 = vmul.f32 %v5351, 1.442695
      %v5714 = vpow.pop %v5713
      %v5715 = vmul.f32 %v5352, 1.442695
      %v5716 = vpow.pop %v5715
      %v5717 = vmul.f32 %v5353, 1.442695
      %v5718 = vpow.pop %v5717
      %v5719 = vmul.f32 %v5354, 1.442695
      %v5720 = vpow.pop %v5719
      %v5721 = vmul.f32 %v5355, 1.442695
      %v5722 = vpow.pop %v5721
      %v5723 = vmul.f32 %v5356, 1.442695
      %v5724 = vpow.pop %v5723
      %v5725 = vmul.f32 %v5357, 1.442695
      %v5726 = vpow.pop %v5725
      %v5727 = vmul.f32 %v5358, 1.442695
      %v5728 = vpow.pop %v5727
      %v5729 = vmul.f32 %v5359, 1.442695
      %v5730 = vpow.pop %v5729
      %v5731 = vmul.f32 %v5360, 1.442695
      %v5732 = vpow.pop %v5731
      %v5733 = vmul.f32 %v5361, 1.442695
      %v5734 = vpow.pop %v5733
      %v5735 = vmul.f32 %v5362, 1.442695
      %v5736 = vpow.pop %v5735
      %v5737 = vmul.f32 %v5363, 1.442695
      %v5738 = vpow.pop %v5737
      %v5739 = vmul.f32 %v5364, 1.442695
      %v5740 = vpow.pop %v5739
      %v5741 = vmul.f32 %v5365, 1.442695
      %v5742 = vpow.pop %v5741
      %v5743 = vmul.f32 %v5366, 1.442695
      %v5744 = vpow.pop %v5743
      %v5745 = vmul.f32 %v5367, 1.442695
      %v5746 = vpow.pop %v5745
      %v5747 = vmul.f32 %v5368, 1.442695
      %v5748 = vpow.pop %v5747
      %v5749 = vmul.f32 %v5369, 1.442695
      %v5750 = vpow.pop %v5749
      %v5751 = vmul.f32 %v5370, 1.442695
      %v5752 = vpow.pop %v5751
      %v5753 = vmul.f32 %v5371, 1.442695
      %v5754 = vpow.pop %v5753
      %v5755 = vmul.f32 %v5372, 1.442695
      %v5756 = vpow.pop %v5755
      %v5757 = vmul.f32 %v5373, 1.442695
      %v5758 = vpow.pop %v5757
      %v5759 = vmul.f32 %v5374, 1.442695
      %v5760 = vpow.pop %v5759
      %v5761 = vmul.f32 %v5375, 1.442695
      %v5762 = vpow.pop %v5761
      %v5763 = vmul.f32 %v5376, 1.442695
      %v5764 = vpow.pop %v5763
      %v5765 = vmul.f32 %v5377, 1.442695
      %v5766 = vpow.pop %v5765
      %v5767 = vmul.f32 %v5378, 1.442695
      %v5768 = vpow.pop %v5767
      %v5769 = vmul.f32 %v5379, 1.442695
      %v5770 = vpow.pop %v5769
      %v5771 = vmul.f32 %v5380, 1.442695
      %v5772 = vpow.pop %v5771
      %v5773 = vmul.f32 %v5381, 1.442695
      %v5774 = vpow.pop %v5773
      %v5775 = vmul.f32 %v5382, 1.442695
      %v5776 = vpow.pop %v5775
      %v5777 = vmul.f32 %v5383, 1.442695
      %v5778 = vpow.pop %v5777
      %v5779 = vmul.f32 %v5384, 1.442695
      %v5780 = vpow.pop %v5779
      %v5781 = vmul.f32 %v5385, 1.442695
      %v5782 = vpow.pop %v5781
      %v5783 = vmul.f32 %v5386, 1.442695
      %v5784 = vpow.pop %v5783
      %v5785 = vmul.f32 %v5387, 1.442695
      %v5786 = vpow.pop %v5785
      %v5787 = vmul.f32 %v5388, 1.442695
      %v5788 = vpow.pop %v5787
      %v5789 = vmul.f32 %v5389, 1.442695
      %v5790 = vpow.pop %v5789
      %v5791 = vmul.f32 %v5390, 1.442695
      %v5792 = vpow.pop %v5791
      %v5793 = vmul.f32 %v5391, 1.442695
      %v5794 = vpow.pop %v5793
      %v5795 = vmul.f32 %v5392, 1.442695
      %v5796 = vpow.pop %v5795
      %v5797 = vmul.f32 %v5393, 1.442695
      %v5798 = vpow.pop %v5797
      %v5799 = vmul.f32 %v5394, 1.442695
      %v5800 = vpow.pop %v5799
      %v5801 = vmul.f32 %v5395, 1.442695
      %v5802 = vpow.pop %v5801
      %v5803 = vmul.f32 %v5396, 1.442695
      %v5804 = vpow.pop %v5803
      %v5805 = vmul.f32 %v5397, 1.442695
      %v5806 = vpow.pop %v5805
      %v5807 = vmul.f32 %v5398, 1.442695
      %v5808 = vpow.pop %v5807
      %v5809 = vmul.f32 %v5399, 1.442695
      %v5810 = vpow.pop %v5809
      %v5811 = vmul.f32 %v5400, 1.442695
      %v5812 = vpow.pop %v5811
      %v5813 = vmul.f32 %v5401, 1.442695
      %v5814 = vpow.pop %v5813
      %v5815 = vmul.f32 %v5402, 1.442695
      %v5816 = vpow.pop %v5815
      %v5817 = vmul.f32 %v5403, 1.442695
      %v5818 = vpow.pop %v5817
      %v5819 = vmul.f32 %v5404, 1.442695
      %v5820 = vpow.pop %v5819
      %v5821 = vmul.f32 %v5405, 1.442695
      %v5822 = vpow.pop %v5821
      %v5823 = vmul.f32 %v5406, 1.442695
      %v5824 = vpow.pop %v5823
      %v5825 = vmul.f32 %v5407, 1.442695
      %v5826 = vpow.pop %v5825
      %v5827 = vmul.f32 %v5408, 1.442695
      %v5828 = vpow.pop %v5827
      %v5829 = vmul.f32 %v5409, 1.442695
      %v5830 = vpow.pop %v5829
      %v5831 = vmul.f32 %v5410, 1.442695
      %v5832 = vpow.pop %v5831
      %v5833 = vmul.f32 %v5411, 1.442695
      %v5834 = vpow.pop %v5833
      %v5835 = vmul.f32 %v5412, 1.442695
      %v5836 = vpow.pop %v5835
      %v5837 = vmul.f32 %v5413, 1.442695
      %v5838 = vpow.pop %v5837
      %v5839 = vmul.f32 %v5414, 1.442695
      %v5840 = vpow.pop %v5839
      %v5841 = vmul.f32 %v5415, 1.442695
      %v5842 = vpow.pop %v5841
      %v5843 = vmul.f32 %v5416, 1.442695
      %v5844 = vpow.pop %v5843
      %v5845 = vmul.f32 %v5417, 1.442695
      %v5846 = vpow.pop %v5845
      %v5847 = vmul.f32 %v5418, 1.442695
      %v5848 = vpow.pop %v5847
      %v5849 = vmul.f32 %v5419, 1.442695
      %v5850 = vpow.pop %v5849
      %v5851 = vmul.f32 %v5420, 1.442695
      %v5852 = vpow.pop %v5851
      %v5853 = vmul.f32 %v5421, 1.442695
      %v5854 = vpow.pop %v5853
      %v5855 = vmul.f32 %v5422, 1.442695
      %v5856 = vpow.pop %v5855
      %v5857 = vmul.f32 %v5423, 1.442695
      %v5858 = vpow.pop %v5857
      %v5859 = vmul.f32 %v5424, 1.442695
      %v5860 = vpow.pop %v5859
      %v5861 = vmul.f32 %v5425, 1.442695
      %v5862 = vpow.pop %v5861
      %v5863 = vmul.f32 %v5426, 1.442695
      %v5864 = vpow.pop %v5863
      %v5865 = vmul.f32 %v5427, 1.442695
      %v5866 = vpow.pop %v5865
      %v5867 = vmul.f32 %v5428, 1.442695
      %v5868 = vpow.pop %v5867
      %v5869 = vmul.f32 %v5429, 1.442695
      %v5870 = vpow.pop %v5869
      %v5871 = vmul.f32 %v5430, 1.442695
      %v5872 = vpow.pop %v5871
      %v5873 = vmul.f32 %v5431, 1.442695
      %v5874 = vpow.pop %v5873
      %v5875 = vmul.f32 %v5432, 1.442695
      %v5876 = vpow.pop %v5875
      %v5877 = vmul.f32 %v5433, 1.442695
      %v5878 = vpow.pop %v5877
      %v5879 = vmul.f32 %v5434, 1.442695
      %v5880 = vpow.pop %v5879
      %v5881 = vmul.f32 %v5435, 1.442695
      %v5882 = vpow.pop %v5881
      %v5883 = vmul.f32 %v5436, 1.442695
      %v5884 = vpow.pop %v5883
      %v5885 = vadd.f32 %v5438, 1.0
      %v5886 = vadd.f32 %v5440, 1.0
      %v5887 = vadd.f32 %v5442, 1.0
      %v5888 = vadd.f32 %v5444, 1.0
      %v5889 = vadd.f32 %v5446, 1.0
      %v5890 = vadd.f32 %v5448, 1.0
      %v5891 = vadd.f32 %v5450, 1.0
      %v5892 = vadd.f32 %v5452, 1.0
      %v5893 = vadd.f32 %v5454, 1.0
      %v5894 = vadd.f32 %v5456, 1.0
      %v5895 = vadd.f32 %v5458, 1.0
      %v5896 = vadd.f32 %v5460, 1.0
      %v5897 = vadd.f32 %v5462, 1.0
      %v5898 = vadd.f32 %v5464, 1.0
      %v5899 = vadd.f32 %v5466, 1.0
      %v5900 = vadd.f32 %v5468, 1.0
      %v5901 = vadd.f32 %v5470, 1.0
      %v5902 = vadd.f32 %v5472, 1.0
      %v5903 = vadd.f32 %v5474, 1.0
      %v5904 = vadd.f32 %v5476, 1.0
      %v5905 = vadd.f32 %v5478, 1.0
      %v5906 = vadd.f32 %v5480, 1.0
      %v5907 = vadd.f32 %v5482, 1.0
      %v5908 = vadd.f32 %v5484, 1.0
      %v5909 = vadd.f32 %v5486, 1.0
      %v5910 = vadd.f32 %v5488, 1.0
      %v5911 = vadd.f32 %v5490, 1.0
      %v5912 = vadd.f32 %v5492, 1.0
      %v5913 = vadd.f32 %v5494, 1.0
      %v5914 = vadd.f32 %v5496, 1.0
      %v5915 = vadd.f32 %v5498, 1.0
      %v5916 = vadd.f32 %v5500, 1.0
      %v5917 = vadd.f32 %v5502, 1.0
      %v5918 = vadd.f32 %v5504, 1.0
      %v5919 = vadd.f32 %v5506, 1.0
      %v5920 = vadd.f32 %v5508, 1.0
      %v5921 = vadd.f32 %v5510, 1.0
      %v5922 = vadd.f32 %v5512, 1.0
      %v5923 = vadd.f32 %v5514, 1.0
      %v5924 = vadd.f32 %v5516, 1.0
      %v5925 = vadd.f32 %v5518, 1.0
      %v5926 = vadd.f32 %v5520, 1.0
      %v5927 = vadd.f32 %v5522, 1.0
      %v5928 = vadd.f32 %v5524, 1.0
      %v5929 = vadd.f32 %v5526, 1.0
      %v5930 = vadd.f32 %v5528, 1.0
      %v5931 = vadd.f32 %v5530, 1.0
      %v5932 = vadd.f32 %v5532, 1.0
      %v5933 = vadd.f32 %v5534, 1.0
      %v5934 = vadd.f32 %v5536, 1.0
      %v5935 = vadd.f32 %v5538, 1.0
      %v5936 = vadd.f32 %v5540, 1.0
      %v5937 = vadd.f32 %v5542, 1.0
      %v5938 = vadd.f32 %v5544, 1.0
      %v5939 = vadd.f32 %v5546, 1.0
      %v5940 = vadd.f32 %v5548, 1.0
      %v5941 = vadd.f32 %v5550, 1.0
      %v5942 = vadd.f32 %v5552, 1.0
      %v5943 = vadd.f32 %v5554, 1.0
      %v5944 = vadd.f32 %v5556, 1.0
      %v5945 = vadd.f32 %v5558, 1.0
      %v5946 = vadd.f32 %v5560, 1.0
      %v5947 = vadd.f32 %v5562, 1.0
      %v5948 = vadd.f32 %v5564, 1.0
      %v5949 = vadd.f32 %v5566, 1.0
      %v5950 = vadd.f32 %v5568, 1.0
      %v5951 = vadd.f32 %v5570, 1.0
      %v5952 = vadd.f32 %v5572, 1.0
      %v5953 = vadd.f32 %v5574, 1.0
      %v5954 = vadd.f32 %v5576, 1.0
      %v5955 = vadd.f32 %v5578, 1.0
      %v5956 = vadd.f32 %v5580, 1.0
      %v5957 = vadd.f32 %v5582, 1.0
      %v5958 = vadd.f32 %v5584, 1.0
      %v5959 = vadd.f32 %v5586, 1.0
      %v5960 = vadd.f32 %v5588, 1.0
      %v5961 = vadd.f32 %v5590, 1.0
      %v5962 = vadd.f32 %v5592, 1.0
      %v5963 = vadd.f32 %v5594, 1.0
      %v5964 = vadd.f32 %v5596, 1.0
      %v5965 = vadd.f32 %v5598, 1.0
      %v5966 = vadd.f32 %v5600, 1.0
      %v5967 = vadd.f32 %v5602, 1.0
      %v5968 = vadd.f32 %v5604, 1.0
      %v5969 = vadd.f32 %v5606, 1.0
      %v5970 = vadd.f32 %v5608, 1.0
      %v5971 = vadd.f32 %v5610, 1.0
      %v5972 = vadd.f32 %v5612, 1.0
      %v5973 = vadd.f32 %v5614, 1.0
      %v5974 = vadd.f32 %v5616, 1.0
      %v5975 = vadd.f32 %v5618, 1.0
      %v5976 = vadd.f32 %v5620, 1.0
      %v5977 = vadd.f32 %v5622, 1.0
      %v5978 = vadd.f32 %v5624, 1.0
      %v5979 = vadd.f32 %v5626, 1.0
      %v5980 = vadd.f32 %v5628, 1.0
      %v5981 = vadd.f32 %v5630, 1.0
      %v5982 = vadd.f32 %v5632, 1.0
      %v5983 = vadd.f32 %v5634, 1.0
      %v5984 = vadd.f32 %v5636, 1.0
      %v5985 = vadd.f32 %v5638, 1.0
      %v5986 = vadd.f32 %v5640, 1.0
      %v5987 = vadd.f32 %v5642, 1.0
      %v5988 = vadd.f32 %v5644, 1.0
      %v5989 = vadd.f32 %v5646, 1.0
      %v5990 = vadd.f32 %v5648, 1.0
      %v5991 = vadd.f32 %v5650, 1.0
      %v5992 = vadd.f32 %v5652, 1.0
      %v5993 = vadd.f32 %v5654, 1.0
      %v5994 = vadd.f32 %v5656, 1.0
      %v5995 = vadd.f32 %v5658, 1.0
      %v5996 = vadd.f32 %v5660, 1.0
      %v5997 = vadd.f32 %v5662, 1.0
      %v5998 = vadd.f32 %v5664, 1.0
      %v5999 = vadd.f32 %v5666, 1.0
      %v6000 = vadd.f32 %v5668, 1.0
      %v6001 = vadd.f32 %v5670, 1.0
      %v6002 = vadd.f32 %v5672, 1.0
      %v6003 = vadd.f32 %v5674, 1.0
      %v6004 = vadd.f32 %v5676, 1.0
      %v6005 = vadd.f32 %v5678, 1.0
      %v6006 = vadd.f32 %v5680, 1.0
      %v6007 = vadd.f32 %v5682, 1.0
      %v6008 = vadd.f32 %v5684, 1.0
      %v6009 = vadd.f32 %v5686, 1.0
      %v6010 = vadd.f32 %v5688, 1.0
      %v6011 = vadd.f32 %v5690, 1.0
      %v6012 = vadd.f32 %v5692, 1.0
      %v6013 = vadd.f32 %v5694, 1.0
      %v6014 = vadd.f32 %v5696, 1.0
      %v6015 = vadd.f32 %v5698, 1.0
      %v6016 = vadd.f32 %v5700, 1.0
      %v6017 = vadd.f32 %v5702, 1.0
      %v6018 = vadd.f32 %v5704, 1.0
      %v6019 = vadd.f32 %v5706, 1.0
      %v6020 = vadd.f32 %v5708, 1.0
      %v6021 = vadd.f32 %v5710, 1.0
      %v6022 = vadd.f32 %v5712, 1.0
      %v6023 = vadd.f32 %v5714, 1.0
      %v6024 = vadd.f32 %v5716, 1.0
      %v6025 = vadd.f32 %v5718, 1.0
      %v6026 = vadd.f32 %v5720, 1.0
      %v6027 = vadd.f32 %v5722, 1.0
      %v6028 = vadd.f32 %v5724, 1.0
      %v6029 = vadd.f32 %v5726, 1.0
      %v6030 = vadd.f32 %v5728, 1.0
      %v6031 = vadd.f32 %v5730, 1.0
      %v6032 = vadd.f32 %v5732, 1.0
      %v6033 = vadd.f32 %v5734, 1.0
      %v6034 = vadd.f32 %v5736, 1.0
      %v6035 = vadd.f32 %v5738, 1.0
      %v6036 = vadd.f32 %v5740, 1.0
      %v6037 = vadd.f32 %v5742, 1.0
      %v6038 = vadd.f32 %v5744, 1.0
      %v6039 = vadd.f32 %v5746, 1.0
      %v6040 = vadd.f32 %v5748, 1.0
      %v6041 = vadd.f32 %v5750, 1.0
      %v6042 = vadd.f32 %v5752, 1.0
      %v6043 = vadd.f32 %v5754, 1.0
      %v6044 = vadd.f32 %v5756, 1.0
      %v6045 = vadd.f32 %v5758, 1.0
      %v6046 = vadd.f32 %v5760, 1.0
      %v6047 = vadd.f32 %v5762, 1.0
      %v6048 = vadd.f32 %v5764, 1.0
      %v6049 = vadd.f32 %v5766, 1.0
      %v6050 = vadd.f32 %v5768, 1.0
      %v6051 = vadd.f32 %v5770, 1.0
      %v6052 = vadd.f32 %v5772, 1.0
      %v6053 = vadd.f32 %v5774, 1.0
      %v6054 = vadd.f32 %v5776, 1.0
      %v6055 = vadd.f32 %v5778, 1.0
      %v6056 = vadd.f32 %v5780, 1.0
      %v6057 = vadd.f32 %v5782, 1.0
      %v6058 = vadd.f32 %v5784, 1.0
      %v6059 = vadd.f32 %v5786, 1.0
      %v6060 = vadd.f32 %v5788, 1.0
      %v6061 = vadd.f32 %v5790, 1.0
      %v6062 = vadd.f32 %v5792, 1.0
      %v6063 = vadd.f32 %v5794, 1.0
      %v6064 = vadd.f32 %v5796, 1.0
      %v6065 = vadd.f32 %v5798, 1.0
      %v6066 = vadd.f32 %v5800, 1.0
      %v6067 = vadd.f32 %v5802, 1.0
      %v6068 = vadd.f32 %v5804, 1.0
      %v6069 = vadd.f32 %v5806, 1.0
      %v6070 = vadd.f32 %v5808, 1.0
      %v6071 = vadd.f32 %v5810, 1.0
      %v6072 = vadd.f32 %v5812, 1.0
      %v6073 = vadd.f32 %v5814, 1.0
      %v6074 = vadd.f32 %v5816, 1.0
      %v6075 = vadd.f32 %v5818, 1.0
      %v6076 = vadd.f32 %v5820, 1.0
      %v6077 = vadd.f32 %v5822, 1.0
      %v6078 = vadd.f32 %v5824, 1.0
      %v6079 = vadd.f32 %v5826, 1.0
      %v6080 = vadd.f32 %v5828, 1.0
      %v6081 = vadd.f32 %v5830, 1.0
      %v6082 = vadd.f32 %v5832, 1.0
      %v6083 = vadd.f32 %v5834, 1.0
      %v6084 = vadd.f32 %v5836, 1.0
      %v6085 = vadd.f32 %v5838, 1.0
      %v6086 = vadd.f32 %v5840, 1.0
      %v6087 = vadd.f32 %v5842, 1.0
      %v6088 = vadd.f32 %v5844, 1.0
      %v6089 = vadd.f32 %v5846, 1.0
      %v6090 = vadd.f32 %v5848, 1.0
      %v6091 = vadd.f32 %v5850, 1.0
      %v6092 = vadd.f32 %v5852, 1.0
      %v6093 = vadd.f32 %v5854, 1.0
      %v6094 = vadd.f32 %v5856, 1.0
      %v6095 = vadd.f32 %v5858, 1.0
      %v6096 = vadd.f32 %v5860, 1.0
      %v6097 = vadd.f32 %v5862, 1.0
      %v6098 = vadd.f32 %v5864, 1.0
      %v6099 = vadd.f32 %v5866, 1.0
      %v6100 = vadd.f32 %v5868, 1.0
      %v6101 = vadd.f32 %v5870, 1.0
      %v6102 = vadd.f32 %v5872, 1.0
      %v6103 = vadd.f32 %v5874, 1.0
      %v6104 = vadd.f32 %v5876, 1.0
      %v6105 = vadd.f32 %v5878, 1.0
      %v6106 = vadd.f32 %v5880, 1.0
      %v6107 = vadd.f32 %v5882, 1.0
      %v6108 = vadd.f32 %v5884, 1.0
      %v6109 = vrcp.pop %v5885
      %v6110 = vrcp.pop %v5886
      %v6111 = vrcp.pop %v5887
      %v6112 = vrcp.pop %v5888
      %v6113 = vrcp.pop %v5889
      %v6114 = vrcp.pop %v5890
      %v6115 = vrcp.pop %v5891
      %v6116 = vrcp.pop %v5892
      %v6117 = vrcp.pop %v5893
      %v6118 = vrcp.pop %v5894
      %v6119 = vrcp.pop %v5895
      %v6120 = vrcp.pop %v5896
      %v6121 = vrcp.pop %v5897
      %v6122 = vrcp.pop %v5898
      %v6123 = vrcp.pop %v5899
      %v6124 = vrcp.pop %v5900
      %v6125 = vrcp.pop %v5901
      %v6126 = vrcp.pop %v5902
      %v6127 = vrcp.pop %v5903
      %v6128 = vrcp.pop %v5904
      %v6129 = vrcp.pop %v5905
      %v6130 = vrcp.pop %v5906
      %v6131 = vrcp.pop %v5907
      %v6132 = vrcp.pop %v5908
      %v6133 = vrcp.pop %v5909
      %v6134 = vrcp.pop %v5910
      %v6135 = vrcp.pop %v5911
      %v6136 = vrcp.pop %v5912
      %v6137 = vrcp.pop %v5913
      %v6138 = vrcp.pop %v5914
      %v6139 = vrcp.pop %v5915
      %v6140 = vrcp.pop %v5916
      %v6141 = vrcp.pop %v5917
      %v6142 = vrcp.pop %v5918
      %v6143 = vrcp.pop %v5919
      %v6144 = vrcp.pop %v5920
      %v6145 = vrcp.pop %v5921
      %v6146 = vrcp.pop %v5922
      %v6147 = vrcp.pop %v5923
      %v6148 = vrcp.pop %v5924
      %v6149 = vrcp.pop %v5925
      %v6150 = vrcp.pop %v5926
      %v6151 = vrcp.pop %v5927
      %v6152 = vrcp.pop %v5928
      %v6153 = vrcp.pop %v5929
      %v6154 = vrcp.pop %v5930
      %v6155 = vrcp.pop %v5931
      %v6156 = vrcp.pop %v5932
      %v6157 = vrcp.pop %v5933
      %v6158 = vrcp.pop %v5934
      %v6159 = vrcp.pop %v5935
      %v6160 = vrcp.pop %v5936
      %v6161 = vrcp.pop %v5937
      %v6162 = vrcp.pop %v5938
      %v6163 = vrcp.pop %v5939
      %v6164 = vrcp.pop %v5940
      %v6165 = vrcp.pop %v5941
      %v6166 = vrcp.pop %v5942
      %v6167 = vrcp.pop %v5943
      %v6168 = vrcp.pop %v5944
      %v6169 = vrcp.pop %v5945
      %v6170 = vrcp.pop %v5946
      %v6171 = vrcp.pop %v5947
      %v6172 = vrcp.pop %v5948
      %v6173 = vrcp.pop %v5949
      %v6174 = vrcp.pop %v5950
      %v6175 = vrcp.pop %v5951
      %v6176 = vrcp.pop %v5952
      %v6177 = vrcp.pop %v5953
      %v6178 = vrcp.pop %v5954
      %v6179 = vrcp.pop %v5955
      %v6180 = vrcp.pop %v5956
      %v6181 = vrcp.pop %v5957
      %v6182 = vrcp.pop %v5958
      %v6183 = vrcp.pop %v5959
      %v6184 = vrcp.pop %v5960
      %v6185 = vrcp.pop %v5961
      %v6186 = vrcp.pop %v5962
      %v6187 = vrcp.pop %v5963
      %v6188 = vrcp.pop %v5964
      %v6189 = vrcp.pop %v5965
      %v6190 = vrcp.pop %v5966
      %v6191 = vrcp.pop %v5967
      %v6192 = vrcp.pop %v5968
      %v6193 = vrcp.pop %v5969
      %v6194 = vrcp.pop %v5970
      %v6195 = vrcp.pop %v5971
      %v6196 = vrcp.pop %v5972
      %v6197 = vrcp.pop %v5973
      %v6198 = vrcp.pop %v5974
      %v6199 = vrcp.pop %v5975
      %v6200 = vrcp.pop %v5976
      %v6201 = vrcp.pop %v5977
      %v6202 = vrcp.pop %v5978
      %v6203 = vrcp.pop %v5979
      %v6204 = vrcp.pop %v5980
      %v6205 = vrcp.pop %v5981
      %v6206 = vrcp.pop %v5982
      %v6207 = vrcp.pop %v5983
      %v6208 = vrcp.pop %v5984
      %v6209 = vrcp.pop %v5985
      %v6210 = vrcp.pop %v5986
      %v6211 = vrcp.pop %v5987
      %v6212 = vrcp.pop %v5988
      %v6213 = vrcp.pop %v5989
      %v6214 = vrcp.pop %v5990
      %v6215 = vrcp.pop %v5991
      %v6216 = vrcp.pop %v5992
      %v6217 = vrcp.pop %v5993
      %v6218 = vrcp.pop %v5994
      %v6219 = vrcp.pop %v5995
      %v6220 = vrcp.pop %v5996
      %v6221 = vrcp.pop %v5997
      %v6222 = vrcp.pop %v5998
      %v6223 = vrcp.pop %v5999
      %v6224 = vrcp.pop %v6000
      %v6225 = vrcp.pop %v6001
      %v6226 = vrcp.pop %v6002
      %v6227 = vrcp.pop %v6003
      %v6228 = vrcp.pop %v6004
      %v6229 = vrcp.pop %v6005
      %v6230 = vrcp.pop %v6006
      %v6231 = vrcp.pop %v6007
      %v6232 = vrcp.pop %v6008
      %v6233 = vrcp.pop %v6009
      %v6234 = vrcp.pop %v6010
      %v6235 = vrcp.pop %v6011
      %v6236 = vrcp.pop %v6012
      %v6237 = vrcp.pop %v6013
      %v6238 = vrcp.pop %v6014
      %v6239 = vrcp.pop %v6015
      %v6240 = vrcp.pop %v6016
      %v6241 = vrcp.pop %v6017
      %v6242 = vrcp.pop %v6018
      %v6243 = vrcp.pop %v6019
      %v6244 = vrcp.pop %v6020
      %v6245 = vrcp.pop %v6021
      %v6246 = vrcp.pop %v6022
      %v6247 = vrcp.pop %v6023
      %v6248 = vrcp.pop %v6024
      %v6249 = vrcp.pop %v6025
      %v6250 = vrcp.pop %v6026
      %v6251 = vrcp.pop %v6027
      %v6252 = vrcp.pop %v6028
      %v6253 = vrcp.pop %v6029
      %v6254 = vrcp.pop %v6030
      %v6255 = vrcp.pop %v6031
      %v6256 = vrcp.pop %v6032
      %v6257 = vrcp.pop %v6033
      %v6258 = vrcp.pop %v6034
      %v6259 = vrcp.pop %v6035
      %v6260 = vrcp.pop %v6036
      %v6261 = vrcp.pop %v6037
      %v6262 = vrcp.pop %v6038
      %v6263 = vrcp.pop %v6039
      %v6264 = vrcp.pop %v6040
      %v6265 = vrcp.pop %v6041
      %v6266 = vrcp.pop %v6042
      %v6267 = vrcp.pop %v6043
      %v6268 = vrcp.pop %v6044
      %v6269 = vrcp.pop %v6045
      %v6270 = vrcp.pop %v6046
      %v6271 = vrcp.pop %v6047
      %v6272 = vrcp.pop %v6048
      %v6273 = vrcp.pop %v6049
      %v6274 = vrcp.pop %v6050
      %v6275 = vrcp.pop %v6051
      %v6276 = vrcp.pop %v6052
      %v6277 = vrcp.pop %v6053
      %v6278 = vrcp.pop %v6054
      %v6279 = vrcp.pop %v6055
      %v6280 = vrcp.pop %v6056
      %v6281 = vrcp.pop %v6057
      %v6282 = vrcp.pop %v6058
      %v6283 = vrcp.pop %v6059
      %v6284 = vrcp.pop %v6060
      %v6285 = vrcp.pop %v6061
      %v6286 = vrcp.pop %v6062
      %v6287 = vrcp.pop %v6063
      %v6288 = vrcp.pop %v6064
      %v6289 = vrcp.pop %v6065
      %v6290 = vrcp.pop %v6066
      %v6291 = vrcp.pop %v6067
      %v6292 = vrcp.pop %v6068
      %v6293 = vrcp.pop %v6069
      %v6294 = vrcp.pop %v6070
      %v6295 = vrcp.pop %v6071
      %v6296 = vrcp.pop %v6072
      %v6297 = vrcp.pop %v6073
      %v6298 = vrcp.pop %v6074
      %v6299 = vrcp.pop %v6075
      %v6300 = vrcp.pop %v6076
      %v6301 = vrcp.pop %v6077
      %v6302 = vrcp.pop %v6078
      %v6303 = vrcp.pop %v6079
      %v6304 = vrcp.pop %v6080
      %v6305 = vrcp.pop %v6081
      %v6306 = vrcp.pop %v6082
      %v6307 = vrcp.pop %v6083
      %v6308 = vrcp.pop %v6084
      %v6309 = vrcp.pop %v6085
      %v6310 = vrcp.pop %v6086
      %v6311 = vrcp.pop %v6087
      %v6312 = vrcp.pop %v6088
      %v6313 = vrcp.pop %v6089
      %v6314 = vrcp.pop %v6090
      %v6315 = vrcp.pop %v6091
      %v6316 = vrcp.pop %v6092
      %v6317 = vrcp.pop %v6093
      %v6318 = vrcp.pop %v6094
      %v6319 = vrcp.pop %v6095
      %v6320 = vrcp.pop %v6096
      %v6321 = vrcp.pop %v6097
      %v6322 = vrcp.pop %v6098
      %v6323 = vrcp.pop %v6099
      %v6324 = vrcp.pop %v6100
      %v6325 = vrcp.pop %v6101
      %v6326 = vrcp.pop %v6102
      %v6327 = vrcp.pop %v6103
      %v6328 = vrcp.pop %v6104
      %v6329 = vrcp.pop %v6105
      %v6330 = vrcp.pop %v6106
      %v6331 = vrcp.pop %v6107
      %v6332 = vrcp.pop %v6108
      %6333 = vst [vmem:[%s596] sm:$0xff] %v6109
      %6334 = vst [vmem:[%s596 + $0x8] sm:$0xff] %v6110
      %6335 = vst [vmem:[%s596 + $0x10] sm:$0xff] %v6111
      %6336 = vst [vmem:[%s596 + $0x18] sm:$0xff] %v6112
      %6337 = vst [vmem:[%s596 + $0x20] sm:$0xff] %v6113
      %6338 = vst [vmem:[%s596 + $0x28] sm:$0xff] %v6114
      %6339 = vst [vmem:[%s596 + $0x30] sm:$0xff] %v6115
      %6340 = vst [vmem:[%s596 + $0x38] sm:$0xff] %v6116
      %6341 = vst [vmem:[%s596 + $0x40] sm:$0xff] %v6117
      %6342 = vst [vmem:[%s596 + $0x48] sm:$0xff] %v6118
      %6343 = vst [vmem:[%s596 + $0x50] sm:$0xff] %v6119
      %6344 = vst [vmem:[%s596 + $0x58] sm:$0xff] %v6120
      %6345 = vst [vmem:[%s596 + $0x60] sm:$0xff] %v6121
      %6346 = vst [vmem:[%s596 + $0x68] sm:$0xff] %v6122
      %6347 = vst [vmem:[%s596 + $0x70] sm:$0xff] %v6123
      %6348 = vst [vmem:[%s596 + $0x78] sm:$0xff] %v6124
      %6349 = vst [vmem:[%s596 + $0x80] sm:$0xff] %v6125
      %6350 = vst [vmem:[%s596 + $0x88] sm:$0xff] %v6126
      %6351 = vst [vmem:[%s596 + $0x90] sm:$0xff] %v6127
      %6352 = vst [vmem:[%s596 + $0x98] sm:$0xff] %v6128
      %6353 = vst [vmem:[%s596 + $0xa0] sm:$0xff] %v6129
      %6354 = vst [vmem:[%s596 + $0xa8] sm:$0xff] %v6130
      %6355 = vst [vmem:[%s596 + $0xb0] sm:$0xff] %v6131
      %6356 = vst [vmem:[%s596 + $0xb8] sm:$0xff] %v6132
      %6357 = vst [vmem:[%s596 + $0xc0] sm:$0xff] %v6133
      %6358 = vst [vmem:[%s596 + $0xc8] sm:$0xff] %v6134
      %6359 = vst [vmem:[%s596 + $0xd0] sm:$0xff] %v6135
      %6360 = vst [vmem:[%s596 + $0xd8] sm:$0xff] %v6136
      %6361 = vst [vmem:[%s596 + $0xe0] sm:$0xff] %v6137
      %6362 = vst [vmem:[%s596 + $0xe8] sm:$0xff] %v6138
      %6363 = vst [vmem:[%s596 + $0xf0] sm:$0xff] %v6139
      %6364 = vst [vmem:[%s596 + $0xf8] sm:$0xff] %v6140
      %6365 = vst [vmem:[%s596 + $0x100] sm:$0xff] %v6141
      %6366 = vst [vmem:[%s596 + $0x108] sm:$0xff] %v6142
      %6367 = vst [vmem:[%s596 + $0x110] sm:$0xff] %v6143
      %6368 = vst [vmem:[%s596 + $0x118] sm:$0xff] %v6144
      %6369 = vst [vmem:[%s596 + $0x120] sm:$0xff] %v6145
      %6370 = vst [vmem:[%s596 + $0x128] sm:$0xff] %v6146
      %6371 = vst [vmem:[%s596 + $0x130] sm:$0xff] %v6147
      %6372 = vst [vmem:[%s596 + $0x138] sm:$0xff] %v6148
      %6373 = vst [vmem:[%s596 + $0x140] sm:$0xff] %v6149
      %6374 = vst [vmem:[%s596 + $0x148] sm:$0xff] %v6150
      %6375 = vst [vmem:[%s596 + $0x150] sm:$0xff] %v6151
      %6376 = vst [vmem:[%s596 + $0x158] sm:$0xff] %v6152
      %6377 = vst [vmem:[%s596 + $0x160] sm:$0xff] %v6153
      %6378 = vst [vmem:[%s596 + $0x168] sm:$0xff] %v6154
      %6379 = vst [vmem:[%s596 + $0x170] sm:$0xff] %v6155
      %6380 = vst [vmem:[%s596 + $0x178] sm:$0xff] %v6156
      %6381 = vst [vmem:[%s596 + $0x180] sm:$0xff] %v6157
      %6382 = vst [vmem:[%s596 + $0x188] sm:$0xff] %v6158
      %6383 = vst [vmem:[%s596 + $0x190] sm:$0xff] %v6159
      %6384 = vst [vmem:[%s596 + $0x198] sm:$0xff] %v6160
      %6385 = vst [vmem:[%s596 + $0x1a0] sm:$0xff] %v6161
      %6386 = vst [vmem:[%s596 + $0x1a8] sm:$0xff] %v6162
      %6387 = vst [vmem:[%s596 + $0x1b0] sm:$0xff] %v6163
      %6388 = vst [vmem:[%s596 + $0x1b8] sm:$0xff] %v6164
      %6389 = vst [vmem:[%s596 + $0x1c0] sm:$0xff] %v6165
      %6390 = vst [vmem:[%s596 + $0x1c8] sm:$0xff] %v6166
      %6391 = vst [vmem:[%s596 + $0x1d0] sm:$0xff] %v6167
      %6392 = vst [vmem:[%s596 + $0x1d8] sm:$0xff] %v6168
      %6393 = vst [vmem:[%s596 + $0x1e0] sm:$0xff] %v6169
      %6394 = vst [vmem:[%s596 + $0x1e8] sm:$0xff] %v6170
      %6395 = vst [vmem:[%s596 + $0x1f0] sm:$0xff] %v6171
      %6396 = vst [vmem:[%s596 + $0x1f8] sm:$0xff] %v6172
      %6397 = vst [vmem:[%s596 + $0x200] sm:$0xff] %v6173
      %6398 = vst [vmem:[%s596 + $0x208] sm:$0xff] %v6174
      %6399 = vst [vmem:[%s596 + $0x210] sm:$0xff] %v6175
      %6400 = vst [vmem:[%s596 + $0x218] sm:$0xff] %v6176
      %6401 = vst [vmem:[%s596 + $0x220] sm:$0xff] %v6177
      %6402 = vst [vmem:[%s596 + $0x228] sm:$0xff] %v6178
      %6403 = vst [vmem:[%s596 + $0x230] sm:$0xff] %v6179
      %6404 = vst [vmem:[%s596 + $0x238] sm:$0xff] %v6180
      %6405 = vst [vmem:[%s596 + $0x240] sm:$0xff] %v6181
      %6406 = vst [vmem:[%s596 + $0x248] sm:$0xff] %v6182
      %6407 = vst [vmem:[%s596 + $0x250] sm:$0xff] %v6183
      %6408 = vst [vmem:[%s596 + $0x258] sm:$0xff] %v6184
      %6409 = vst [vmem:[%s596 + $0x260] sm:$0xff] %v6185
      %6410 = vst [vmem:[%s596 + $0x268] sm:$0xff] %v6186
      %6411 = vst [vmem:[%s596 + $0x270] sm:$0xff] %v6187
      %6412 = vst [vmem:[%s596 + $0x278] sm:$0xff] %v6188
      %6413 = vst [vmem:[%s596 + $0x280] sm:$0xff] %v6189
      %6414 = vst [vmem:[%s596 + $0x288] sm:$0xff] %v6190
      %6415 = vst [vmem:[%s596 + $0x290] sm:$0xff] %v6191
      %6416 = vst [vmem:[%s596 + $0x298] sm:$0xff] %v6192
      %6417 = vst [vmem:[%s596 + $0x2a0] sm:$0xff] %v6193
      %6418 = vst [vmem:[%s596 + $0x2a8] sm:$0xff] %v6194
      %6419 = vst [vmem:[%s596 + $0x2b0] sm:$0xff] %v6195
      %6420 = vst [vmem:[%s596 + $0x2b8] sm:$0xff] %v6196
      %6421 = vst [vmem:[%s596 + $0x2c0] sm:$0xff] %v6197
      %6422 = vst [vmem:[%s596 + $0x2c8] sm:$0xff] %v6198
      %6423 = vst [vmem:[%s596 + $0x2d0] sm:$0xff] %v6199
      %6424 = vst [vmem:[%s596 + $0x2d8] sm:$0xff] %v6200
      %6425 = vst [vmem:[%s596 + $0x2e0] sm:$0xff] %v6201
      %6426 = vst [vmem:[%s596 + $0x2e8] sm:$0xff] %v6202
      %6427 = vst [vmem:[%s596 + $0x2f0] sm:$0xff] %v6203
      %6428 = vst [vmem:[%s596 + $0x2f8] sm:$0xff] %v6204
      %6429 = vst [vmem:[%s596 + $0x300] sm:$0xff] %v6205
      %6430 = vst [vmem:[%s596 + $0x308] sm:$0xff] %v6206
      %6431 = vst [vmem:[%s596 + $0x310] sm:$0xff] %v6207
      %6432 = vst [vmem:[%s596 + $0x318] sm:$0xff] %v6208
      %6433 = vst [vmem:[%s596 + $0x320] sm:$0xff] %v6209
      %6434 = vst [vmem:[%s596 + $0x328] sm:$0xff] %v6210
      %6435 = vst [vmem:[%s596 + $0x330] sm:$0xff] %v6211
      %6436 = vst [vmem:[%s596 + $0x338] sm:$0xff] %v6212
      %6437 = vst [vmem:[%s596 + $0x340] sm:$0xff] %v6213
      %6438 = vst [vmem:[%s596 + $0x348] sm:$0xff] %v6214
      %6439 = vst [vmem:[%s596 + $0x350] sm:$0xff] %v6215
      %6440 = vst [vmem:[%s596 + $0x358] sm:$0xff] %v6216
      %6441 = vst [vmem:[%s596 + $0x360] sm:$0xff] %v6217
      %6442 = vst [vmem:[%s596 + $0x368] sm:$0xff] %v6218
      %6443 = vst [vmem:[%s596 + $0x370] sm:$0xff] %v6219
      %6444 = vst [vmem:[%s596 + $0x378] sm:$0xff] %v6220
      %6445 = vst [vmem:[%s596 + $0x380] sm:$0xff] %v6221
      %6446 = vst [vmem:[%s596 + $0x388] sm:$0xff] %v6222
      %6447 = vst [vmem:[%s596 + $0x390] sm:$0xff] %v6223
      %6448 = vst [vmem:[%s596 + $0x398] sm:$0xff] %v6224
      %6449 = vst [vmem:[%s596 + $0x3a0] sm:$0xff] %v6225
      %6450 = vst [vmem:[%s596 + $0x3a8] sm:$0xff] %v6226
      %6451 = vst [vmem:[%s596 + $0x3b0] sm:$0xff] %v6227
      %6452 = vst [vmem:[%s596 + $0x3b8] sm:$0xff] %v6228
      %6453 = vst [vmem:[%s596 + $0x3c0] sm:$0xff] %v6229
      %6454 = vst [vmem:[%s596 + $0x3c8] sm:$0xff] %v6230
      %6455 = vst [vmem:[%s596 + $0x3d0] sm:$0xff] %v6231
      %6456 = vst [vmem:[%s596 + $0x3d8] sm:$0xff] %v6232
      %6457 = vst [vmem:[%s596 + $0x3e0] sm:$0xff] %v6233
      %6458 = vst [vmem:[%s596 + $0x3e8] sm:$0xff] %v6234
      %6459 = vst [vmem:[%s596 + $0x3f0] sm:$0xff] %v6235
      %6460 = vst [vmem:[%s596 + $0x3f8] sm:$0xff] %v6236
      %6461 = vst [vmem:[%s596 + $0x400] sm:$0xff] %v6237
      %6462 = vst [vmem:[%s596 + $0x408] sm:$0xff] %v6238
      %6463 = vst [vmem:[%s596 + $0x410] sm:$0xff] %v6239
      %6464 = vst [vmem:[%s596 + $0x418] sm:$0xff] %v6240
      %6465 = vst [vmem:[%s596 + $0x420] sm:$0xff] %v6241
      %6466 = vst [vmem:[%s596 + $0x428] sm:$0xff] %v6242
      %6467 = vst [vmem:[%s596 + $0x430] sm:$0xff] %v6243
      %6468 = vst [vmem:[%s596 + $0x438] sm:$0xff] %v6244
      %6469 = vst [vmem:[%s596 + $0x440] sm:$0xff] %v6245
      %6470 = vst [vmem:[%s596 + $0x448] sm:$0xff] %v6246
      %6471 = vst [vmem:[%s596 + $0x450] sm:$0xff] %v6247
      %6472 = vst [vmem:[%s596 + $0x458] sm:$0xff] %v6248
      %6473 = vst [vmem:[%s596 + $0x460] sm:$0xff] %v6249
      %6474 = vst [vmem:[%s596 + $0x468] sm:$0xff] %v6250
      %6475 = vst [vmem:[%s596 + $0x470] sm:$0xff] %v6251
      %6476 = vst [vmem:[%s596 + $0x478] sm:$0xff] %v6252
      %6477 = vst [vmem:[%s596 + $0x480] sm:$0xff] %v6253
      %6478 = vst [vmem:[%s596 + $0x488] sm:$0xff] %v6254
      %6479 = vst [vmem:[%s596 + $0x490] sm:$0xff] %v6255
      %6480 = vst [vmem:[%s596 + $0x498] sm:$0xff] %v6256
      %6481 = vst [vmem:[%s596 + $0x4a0] sm:$0xff] %v6257
      %6482 = vst [vmem:[%s596 + $0x4a8] sm:$0xff] %v6258
      %6483 = vst [vmem:[%s596 + $0x4b0] sm:$0xff] %v6259
      %6484 = vst [vmem:[%s596 + $0x4b8] sm:$0xff] %v6260
      %6485 = vst [vmem:[%s596 + $0x4c0] sm:$0xff] %v6261
      %6486 = vst [vmem:[%s596 + $0x4c8] sm:$0xff] %v6262
      %6487 = vst [vmem:[%s596 + $0x4d0] sm:$0xff] %v6263
      %6488 = vst [vmem:[%s596 + $0x4d8] sm:$0xff] %v6264
      %6489 = vst [vmem:[%s596 + $0x4e0] sm:$0xff] %v6265
      %6490 = vst [vmem:[%s596 + $0x4e8] sm:$0xff] %v6266
      %6491 = vst [vmem:[%s596 + $0x4f0] sm:$0xff] %v6267
      %6492 = vst [vmem:[%s596 + $0x4f8] sm:$0xff] %v6268
      %6493 = vst [vmem:[%s596 + $0x500] sm:$0xff] %v6269
      %6494 = vst [vmem:[%s596 + $0x508] sm:$0xff] %v6270
      %6495 = vst [vmem:[%s596 + $0x510] sm:$0xff] %v6271
      %6496 = vst [vmem:[%s596 + $0x518] sm:$0xff] %v6272
      %6497 = vst [vmem:[%s596 + $0x520] sm:$0xff] %v6273
      %6498 = vst [vmem:[%s596 + $0x528] sm:$0xff] %v6274
      %6499 = vst [vmem:[%s596 + $0x530] sm:$0xff] %v6275
      %6500 = vst [vmem:[%s596 + $0x538] sm:$0xff] %v6276
      %6501 = vst [vmem:[%s596 + $0x540] sm:$0xff] %v6277
      %6502 = vst [vmem:[%s596 + $0x548] sm:$0xff] %v6278
      %6503 = vst [vmem:[%s596 + $0x550] sm:$0xff] %v6279
      %6504 = vst [vmem:[%s596 + $0x558] sm:$0xff] %v6280
      %6505 = vst [vmem:[%s596 + $0x560] sm:$0xff] %v6281
      %6506 = vst [vmem:[%s596 + $0x568] sm:$0xff] %v6282
      %6507 = vst [vmem:[%s596 + $0x570] sm:$0xff] %v6283
      %6508 = vst [vmem:[%s596 + $0x578] sm:$0xff] %v6284
      %6509 = vst [vmem:[%s596 + $0x580] sm:$0xff] %v6285
      %6510 = vst [vmem:[%s596 + $0x588] sm:$0xff] %v6286
      %6511 = vst [vmem:[%s596 + $0x590] sm:$0xff] %v6287
      %6512 = vst [vmem:[%s596 + $0x598] sm:$0xff] %v6288
      %6513 = vst [vmem:[%s596 + $0x5a0] sm:$0xff] %v6289
      %6514 = vst [vmem:[%s596 + $0x5a8] sm:$0xff] %v6290
      %6515 = vst [vmem:[%s596 + $0x5b0] sm:$0xff] %v6291
      %6516 = vst [vmem:[%s596 + $0x5b8] sm:$0xff] %v6292
      %6517 = vst [vmem:[%s596 + $0x5c0] sm:$0xff] %v6293
      %6518 = vst [vmem:[%s596 + $0x5c8] sm:$0xff] %v6294
      %6519 = vst [vmem:[%s596 + $0x5d0] sm:$0xff] %v6295
      %6520 = vst [vmem:[%s596 + $0x5d8] sm:$0xff] %v6296
      %6521 = vst [vmem:[%s596 + $0x5e0] sm:$0xff] %v6297
      %6522 = vst [vmem:[%s596 + $0x5e8] sm:$0xff] %v6298
      %6523 = vst [vmem:[%s596 + $0x5f0] sm:$0xff] %v6299
      %6524 = vst [vmem:[%s596 + $0x5f8] sm:$0xff] %v6300
      %6525 = vst [vmem:[%s596 + $0x600] sm:$0xff] %v6301
      %6526 = vst [vmem:[%s596 + $0x608] sm:$0xff] %v6302
      %6527 = vst [vmem:[%s596 + $0x610] sm:$0xff] %v6303
      %6528 = vst [vmem:[%s596 + $0x618] sm:$0xff] %v6304
      %6529 = vst [vmem:[%s596 + $0x620] sm:$0xff] %v6305
      %6530 = vst [vmem:[%s596 + $0x628] sm:$0xff] %v6306
      %6531 = vst [vmem:[%s596 + $0x630] sm:$0xff] %v6307
      %6532 = vst [vmem:[%s596 + $0x638] sm:$0xff] %v6308
      %6533 = vst [vmem:[%s596 + $0x640] sm:$0xff] %v6309
      %6534 = vst [vmem:[%s596 + $0x648] sm:$0xff] %v6310
      %6535 = vst [vmem:[%s596 + $0x650] sm:$0xff] %v6311
      %6536 = vst [vmem:[%s596 + $0x658] sm:$0xff] %v6312
      %6537 = vst [vmem:[%s596 + $0x660] sm:$0xff] %v6313
      %6538 = vst [vmem:[%s596 + $0x668] sm:$0xff] %v6314
      %6539 = vst [vmem:[%s596 + $0x670] sm:$0xff] %v6315
      %6540 = vst [vmem:[%s596 + $0x678] sm:$0xff] %v6316
      %6541 = vst [vmem:[%s596 + $0x680] sm:$0xff] %v6317
      %6542 = vst [vmem:[%s596 + $0x688] sm:$0xff] %v6318
      %6543 = vst [vmem:[%s596 + $0x690] sm:$0xff] %v6319
      %6544 = vst [vmem:[%s596 + $0x698] sm:$0xff] %v6320
      %6545 = vst [vmem:[%s596 + $0x6a0] sm:$0xff] %v6321
      %6546 = vst [vmem:[%s596 + $0x6a8] sm:$0xff] %v6322
      %6547 = vst [vmem:[%s596 + $0x6b0] sm:$0xff] %v6323
      %6548 = vst [vmem:[%s596 + $0x6b8] sm:$0xff] %v6324
      %6549 = vst [vmem:[%s596 + $0x6c0] sm:$0xff] %v6325
      %6550 = vst [vmem:[%s596 + $0x6c8] sm:$0xff] %v6326
      %6551 = vst [vmem:[%s596 + $0x6d0] sm:$0xff] %v6327
      %6552 = vst [vmem:[%s596 + $0x6d8] sm:$0xff] %v6328
      %6553 = vst [vmem:[%s596 + $0x6e0] sm:$0xff] %v6329
      %6554 = vst [vmem:[%s596 + $0x6e8] sm:$0xff] %v6330
      %6555 = vst [vmem:[%s596 + $0x6f0] sm:$0xff] %v6331
      %6556 = vst [vmem:[%s596 + $0x6f8] sm:$0xff] %v6332
      %s6557 = smul.u32 32, %s30
      %p6558 = scmp.lt.s32.totalorder %s6557, 127
      %s6559 = scalar_select %p6558, %s6557, 127
      %s6560 = smul.addr %s6559, 8
      %s6561 = scalar_lea.vmem %s17, %s6560
      %s6562 = smul.u32 32, %s30
      %p6563 = scmp.lt.s32.totalorder %s6562, 127
      %s6564 = scalar_select %p6563, %s6562, 127
      %s6565 = smul.addr %s6564, 7
      %s6566 = smul.addr %s6565, 8
      %s6567 = scalar_lea.vmem %s18, %s6566
      // Predicated region
      $region89: #{autoencoder_forward.1} parent=87 // pred_check
        %p6568 = pneg %p410
      $region90: #{autoencoder_forward.1} parent=87 // pred_check_branch
        %6570 = sbr.rel (%p6568) target = $region92
      $region91: #{autoencoder_forward.1} parent=87 // pred_region
        %s6571 = smul.u32 32, %s30
      $region92: #{autoencoder_forward.1} parent=87 // pred_fallthru
        _
      // Predicated region
      $region93: #{autoencoder_forward.1} parent=87 // pred_check
        %p6572 = pneg %p436
      $region94: #{autoencoder_forward.1} parent=87 // pred_check_branch
        %6574 = sbr.rel (%p6572) target = $region96
      $region95: #{autoencoder_forward.1} parent=87 // pred_region
        %s6575 = smul.u32 32, %s30
      $region96: #{autoencoder_forward.1} parent=87 // pred_fallthru
        _
    $region88: #{autoencoder_forward.1} parent=5 // pred_fallthru
      _
    %p6576 = scmp.le.s32.totalorder 2, %s25
    // Predicated region
    $region97: #{autoencoder_forward.1} parent=5 // pred_check
      %p6577 = pneg %p6576
    $region98: #{autoencoder_forward.1} parent=5 // pred_check_branch
      %6579 = sbr.rel (%p6577) target = $region100
    $region99: #{autoencoder_forward.1} parent=5 // pred_region
      %s6580 = ssub.s32 %s25, 2
      // Predicated region
      $region101: #{autoencoder_forward.1} parent=99 // pred_check
        %p6581 = pneg %p416
      $region102: #{autoencoder_forward.1} parent=99 // pred_check_branch
        %6583 = sbr.rel (%p6581) target = $region104
      $region103: #{autoencoder_forward.1} parent=99 // pred_region
        %s6584 = smul.u32 32, %s31
        %p6585 = scmp.lt.s32.totalorder %s6584, 127
        %s6586 = scalar_select %p6585, %s6584, 127
        %s6587 = smul.addr %s6586, 8
        %s6588 = scalar_lea.vmem %s17, %s6587
      $region104: #{autoencoder_forward.1} parent=99 // pred_fallthru
        _
      // Predicated region
      $region105: #{autoencoder_forward.1} parent=99 // pred_check
        %p6589 = pneg %p442
      $region106: #{autoencoder_forward.1} parent=99 // pred_check_branch
        %6591 = sbr.rel (%p6589) target = $region108
      $region107: #{autoencoder_forward.1} parent=99 // pred_region
        %s6592 = smul.u32 32, %s31
        %p6593 = scmp.lt.s32.totalorder %s6592, 127
        %s6594 = scalar_select %p6593, %s6592, 127
        %s6595 = smul.addr %s6594, 7
        %s6596 = smul.addr %s6595, 8
        %s6597 = scalar_lea.vmem %s18, %s6596
      $region108: #{autoencoder_forward.1} parent=99 // pred_fallthru
        _
    $region100: #{autoencoder_forward.1} parent=5 // pred_fallthru
      _
  $region6: #{autoencoder_forward.1} parent=0 // loop_footer
    %s29 = sadd.s32 1, %s25
  $region7: #{autoencoder_forward.1} parent=0 // loop_footer_branch
    %24 = sbr.rel target = $region3
  $region8: #{autoencoder_forward.1} parent=0 // loop_exit
    _

</llo_original>
